<compile_context>
chip_gen: v6e
topology: v6e:2x2x1
jax: 0.10.0
libtpu: 0.0.40
codegen_flags: <defaults>
</compile_context>

<pallas_src>
import jax
import jax.numpy as jnp
import numpy as np
from jax.experimental import pallas as pl
from jax.experimental.pallas import tpu as pltpu

# Small shapes consistent with the module (defaults 512/1024, batch 10;
# scaled down but structure identical: 2 RNN layers, seq flattened into FC).
B = 10           # batch (matches the module's x = randn(10, 5, 512) batch)
T = 5            # sequence_length
D = 256          # input_feature_size
H = 256          # hidden_size
C = 3            # num_classes
NUM_LAYERS = 2   # fixed at 2 (layer-0 and layer-1 unrolled explicitly)

TB = 16          # batch tile per grid step (bf16 sublane-packed; batch padded)
C_PAD = 128      # lane-dense padded output width (>= C)


def rnn_fc_kernel(x_ref, wih0_ref, whh0_ref, b0_ref, w1_ref, b1_ref,
                  wfc_ref, bfc_ref, out_ref, xp_ref, cat_ref):
    """Forward pass for one batch tile, entirely resident in VMEM.

    x_ref    : (T, TB, D)    bf16, time-major
    wih0_ref : (D, H)        bf16
    whh0_ref : (H, H)        bf16
    b0_ref   : (1, H)        f32  (b_ih0 + b_hh0 folded)
    w1_ref   : (2H, H)       bf16 ([W_ih1; W_hh1] stacked)
    b1_ref   : (1, H)        f32  (b_ih1 + b_hh1 folded)
    wfc_ref  : (T*H, C_PAD)  bf16 (zero-padded beyond C)
    bfc_ref  : (1, C_PAD)    f32  (zero-padded beyond C)
    out_ref  : (TB, C_PAD)   f32
    xp_ref   : (T*TB, H)     f32  VMEM scratch (staged input projection)
    cat_ref  : (TB, 2H)      bf16 VMEM scratch ([h0_t | h1_prev])
    """
    t_len, tb, d_in = x_ref.shape
    h = whh0_ref.shape[0]
    c_pad = wfc_ref.shape[1]

    # --- Hoisted layer-0 input projection: one (T*TB, D) @ (D, H) matmul,
    #     staged in VMEM so only one (TB, H) slice is live per timestep. ---
    x2d = x_ref[...].reshape(t_len * tb, d_in)
    xp_ref[...] = jnp.dot(x2d, wih0_ref[...],
                          preferred_element_type=jnp.float32) + b0_ref[...]

    # Layer-1 bias broadcast hoisted out of the unrolled time loop.
    b1b = jnp.broadcast_to(b1_ref[...], (tb, h))

    # ---- Peeled t = 0 (h0_prev == h1_prev == 0): no W_hh0 matmul, and only
    #      the W_ih1 half of the fused layer-1 matmul contributes. ----
    h0b = jnp.tanh(xp_ref[0:tb, :]).astype(jnp.bfloat16)          # (TB, H) bf16
    pre1 = jnp.dot(h0b, w1_ref[0:h, :],
                   preferred_element_type=jnp.float32) + b1b
    h1b = jnp.tanh(pre1).astype(jnp.bfloat16)
    acc = jnp.broadcast_to(bfc_ref[...], (tb, c_pad)) + jnp.dot(
        h1b, wfc_ref[0:h, :], preferred_element_type=jnp.float32)

    # ---- t = 1 .. T-1: static unroll (T small; for large T use fori_loop). ----
    for t in range(1, t_len):
        # Layer 0: only the recurrent matmul remains on the serial chain.
        pre0 = xp_ref[t * tb:(t + 1) * tb, :] + jnp.dot(
            h0b, whh0_ref[...], preferred_element_type=jnp.float32)
        h0b = jnp.tanh(pre0).astype(jnp.bfloat16)   # single bf16 cast, carried

        # Layer 1: fused [h0_t | h1_prev] @ [W_ih1; W_hh1] via two lane-aligned
        # stores into a persistent VMEM scratch (no jnp.concatenate copy).
        cat_ref[:, 0:h] = h0b
        cat_ref[:, h:2 * h] = h1b
        pre1 = jnp.dot(cat_ref[...], w1_ref[...],
                       preferred_element_type=jnp.float32) + b1b
        h1b = jnp.tanh(pre1).astype(jnp.bfloat16)

        # FC slice for timestep t accumulated immediately (no hcat scratch).
        acc = acc + jnp.dot(h1b, wfc_ref[t * h:(t + 1) * h, :],
                            preferred_element_type=jnp.float32)

    out_ref[...] = acc


def rnn_forward(x, wih0_t, whh0_t, b0, wih1_t, whh1_t, b1, wfc_t, bfc, *, tb=TB):
    b_sz, t_len, d_in = x.shape
    h = whh0_t.shape[0]
    c = wfc_t.shape[1]
    c_pad = pl.cdiv(c, 128) * 128

    # Pad the batch to a multiple of the batch tile (module default batch = 10
    # is not tile-aligned). Padded rows are independent; sliced off at the end.
    b_pad = pl.cdiv(b_sz, tb) * tb
    if b_pad != b_sz:
        x = jnp.pad(x, ((0, b_pad - b_sz), (0, 0), (0, 0)))

    # Wrapper-side layout prep (cheap, one-time):
    x_tm = jnp.transpose(x, (1, 0, 2)).astype(jnp.bfloat16)          # (T, Bp, D)
    wih0_bf = wih0_t.astype(jnp.bfloat16)                            # (D, H)
    whh0_bf = whh0_t.astype(jnp.bfloat16)                            # (H, H)
    w1_bf = jnp.concatenate([wih1_t, whh1_t], axis=0).astype(jnp.bfloat16)  # (2H, H)
    wfc_bf = jnp.pad(wfc_t, ((0, 0), (0, c_pad - c))).astype(jnp.bfloat16)  # (T*H, Cp)
    bfc_p = jnp.pad(bfc, ((0, 0), (0, c_pad - c)))                   # (1, Cp) f32

    single = pl.Buffered(1)   # constant-index weights: no double-buffering
    grid = (b_pad // tb,)
    out_pad = pl.pallas_call(
        rnn_fc_kernel,
        out_shape=jax.ShapeDtypeStruct((b_pad, c_pad), jnp.float32),
        grid=grid,
        in_specs=[
            pl.BlockSpec((t_len, tb, d_in), lambda i: (0, i, 0)),    # x (time-major)
            pl.BlockSpec((d_in, h), lambda i: (0, 0), pipeline_mode=single),       # W_ih0
            pl.BlockSpec((h, h), lambda i: (0, 0), pipeline_mode=single),           # W_hh0
            pl.BlockSpec((1, h), lambda i: (0, 0), pipeline_mode=single),           # b0
            pl.BlockSpec((2 * h, h), lambda i: (0, 0), pipeline_mode=single),       # [W_ih1;W_hh1]
            pl.BlockSpec((1, h), lambda i: (0, 0), pipeline_mode=single),           # b1
            pl.BlockSpec((t_len * h, c_pad), lambda i: (0, 0), pipeline_mode=single),  # W_fc
            pl.BlockSpec((1, c_pad), lambda i: (0, 0), pipeline_mode=single),       # b_fc
        ],
        out_specs=pl.BlockSpec((tb, c_pad), lambda i: (i, 0)),
        scratch_shapes=[
            pltpu.VMEM((t_len * tb, h), jnp.float32),    # staged input projection
            pltpu.VMEM((tb, 2 * h), jnp.bfloat16),       # [h0_t | h1_prev]
        ],
        compiler_params=pltpu.CompilerParams(
            dimension_semantics=("parallel",),
            # At the real module sizes (D=512, H=1024) the single-buffered bf16
            # weights are ~8.5 MB; raise vmem_limit_bytes on v5e (16 MiB default
            # scoped limit) when scaling further.
        ),
    )(x_tm, wih0_bf, whh0_bf, b0, w1_bf, b1, wfc_bf, bfc_p)
    return out_pad[:b_sz, :c]


def reference_forward(x, wih0_t, whh0_t, b0, wih1_t, whh1_t, b1, wfc_t, bfc):
    """Pure-JAX f32 reference matching torch.nn.RNN(tanh, 2 layers) + Linear."""
    b = x.shape[0]
    h = whh0_t.shape[0]
    h0 = jnp.zeros((b, h), jnp.float32)
    h1 = jnp.zeros((b, h), jnp.float32)
    outs = []
    for t in range(x.shape[1]):
        h0 = jnp.tanh(x[:, t] @ wih0_t + h0 @ whh0_t + b0)
        h1 = jnp.tanh(h0 @ wih1_t + h1 @ whh1_t + b1)
        outs.append(h1)
    hcat = jnp.concatenate(outs, axis=-1)        # (B, T*H) == out.reshape(B, -1)
    return hcat @ wfc_t + bfc


def init_params(key):
    """Deterministic PyTorch-style init: U(-1/sqrt(H), 1/sqrt(H)), biases folded."""
    ks = jax.random.split(key, 10)
    bound = 1.0 / np.sqrt(H)
    u = lambda k, shape: jax.random.uniform(k, shape, jnp.float32, -bound, bound)
    # Layer 0 (input D -> hidden H): W_ih (H,D), W_hh (H,H), pre-transposed.
    wih0_t = u(ks[0], (H, D)).T
    whh0_t = u(ks[1], (H, H)).T
    b0 = (u(ks[2], (H,)) + u(ks[3], (H,))).reshape(1, H)
    # Layer 1 (hidden H -> hidden H)
    wih1_t = u(ks[4], (H, H)).T
    whh1_t = u(ks[5], (H, H)).T
    b1 = (u(ks[6], (H,)) + u(ks[7], (H,))).reshape(1, H)
    # FC: (C, T*H) in PyTorch -> pre-transposed (T*H, C)
    fc_bound = 1.0 / np.sqrt(T * H)
    wfc_t = jax.random.uniform(ks[8], (C, T * H), jnp.float32, -fc_bound, fc_bound).T
    bfc = jax.random.uniform(ks[9], (C,), jnp.float32, -fc_bound, fc_bound).reshape(1, C)
    return wih0_t, whh0_t, b0, wih1_t, whh1_t, b1, wfc_t, bfc


if __name__ == "__main__":
    key = jax.random.PRNGKey(0)
    kx, kp = jax.random.split(key)
    x = jax.random.normal(kx, (B, T, D), jnp.float32)
    params = init_params(kp)

    out = rnn_forward(x, *params)
    out = jax.block_until_ready(out)

    ref = reference_forward(x, *params)
    # bf16 matmul operands (f32 accumulation) -> loosened tolerance vs f32 ref.
    np.testing.assert_allclose(np.asarray(out), np.asarray(ref),
                               rtol=3e-2, atol=3e-2)
    assert out.shape == (B, C)
    print("KERNEL_OK")
</pallas_src>

<mosaic_0001>
module attributes {stable_mosaic.version = 11 : i64} {
  func.func @rnn_fc_kernel(%arg0: i32, %arg1: memref<5x16x256xbf16, #tpu.memory_space<vmem>>, %arg2: memref<256x256xbf16, #tpu.memory_space<vmem>>, %arg3: memref<256x256xbf16, #tpu.memory_space<vmem>>, %arg4: memref<1x256xf32, #tpu.memory_space<vmem>>, %arg5: memref<512x256xbf16, #tpu.memory_space<vmem>>, %arg6: memref<1x256xf32, #tpu.memory_space<vmem>>, %arg7: memref<1280x128xbf16, #tpu.memory_space<vmem>>, %arg8: memref<1x128xf32, #tpu.memory_space<vmem>>, %arg9: memref<16x128xf32, #tpu.memory_space<vmem>>, %arg10: memref<80x256xf32, #tpu.memory_space<vmem>>, %arg11: memref<16x512xbf16, #tpu.memory_space<vmem>>) attributes {dimension_semantics = [#tpu.dimension_semantics<parallel>], iteration_bounds = array<i64: 1>, scalar_prefetch = 0 : i64, scratch_operands = 2 : i64, tpu.core_type = #tpu.core_type<tc>, window_params = [{transform_indices = @transform_0, window_bounds = array<i64: 5, 16, 256>}, {pipeline_mode = #tpu.pipeline_mode<synchronous>, transform_indices = @transform_1, window_bounds = array<i64: 256, 256>}, {pipeline_mode = #tpu.pipeline_mode<synchronous>, transform_indices = @transform_2, window_bounds = array<i64: 256, 256>}, {pipeline_mode = #tpu.pipeline_mode<synchronous>, transform_indices = @transform_3, window_bounds = array<i64: 1, 256>}, {pipeline_mode = #tpu.pipeline_mode<synchronous>, transform_indices = @transform_4, window_bounds = array<i64: 512, 256>}, {pipeline_mode = #tpu.pipeline_mode<synchronous>, transform_indices = @transform_5, window_bounds = array<i64: 1, 256>}, {pipeline_mode = #tpu.pipeline_mode<synchronous>, transform_indices = @transform_6, window_bounds = array<i64: 1280, 128>}, {pipeline_mode = #tpu.pipeline_mode<synchronous>, transform_indices = @transform_7, window_bounds = array<i64: 1, 128>}, {transform_indices = @transform_8, window_bounds = array<i64: 16, 128>}]} {
    %c0 = arith.constant 0 : index
    %c0_0 = arith.constant 0 : index
    %c0_1 = arith.constant 0 : index
    %0 = vector.load %arg1[%c0, %c0_0, %c0_1] : memref<5x16x256xbf16, #tpu.memory_space<vmem>>, vector<5x16x256xbf16>
    %1 = vector.shape_cast %0 : vector<5x16x256xbf16> to vector<80x256xbf16>
    %c0_2 = arith.constant 0 : index
    %c0_3 = arith.constant 0 : index
    %2 = vector.load %arg2[%c0_2, %c0_3] : memref<256x256xbf16, #tpu.memory_space<vmem>>, vector<256x256xbf16>
    %cst = arith.constant dense<0.000000e+00> : vector<80x256xf32>
    %3 = tpu.matmul %1, %2, %cst {dimension_numbers = #tpu.dot_dimension_numbers<[1], [0], [0], [1], [0, 0, 1, 1], [], []>} : vector<80x256xbf16>, vector<256x256xbf16>, vector<80x256xf32> -> vector<80x256xf32>
    %c0_4 = arith.constant 0 : index
    %c0_5 = arith.constant 0 : index
    %4 = vector.load %arg4[%c0_4, %c0_5] : memref<1x256xf32, #tpu.memory_space<vmem>>, vector<1x256xf32>
    %5 = vector.broadcast %4 : vector<1x256xf32> to vector<80x256xf32>
    %6 = arith.addf %3, %5 : vector<80x256xf32>
    %c0_6 = arith.constant 0 : index
    %c0_7 = arith.constant 0 : index
    %7 = vector.load %arg10[%c0_6, %c0_7] : memref<80x256xf32, #tpu.memory_space<vmem>>, vector<80x256xf32>
    tpu.vector_store %arg10[%c0_6, %c0_7], %6 {strides = array<i32>} : memref<80x256xf32, #tpu.memory_space<vmem>>, vector<80x256xf32>,
    %c0_8 = arith.constant 0 : index
    %c0_9 = arith.constant 0 : index
    %8 = vector.load %arg6[%c0_8, %c0_9] : memref<1x256xf32, #tpu.memory_space<vmem>>, vector<1x256xf32>
    %9 = vector.shape_cast %8 : vector<1x256xf32> to vector<1x256xf32>
    %10 = vector.broadcast %9 : vector<1x256xf32> to vector<16x256xf32>
    %c0_10 = arith.constant 0 : index
    %c0_11 = arith.constant 0 : index
    %11 = vector.load %arg10[%c0_10, %c0_11] : memref<80x256xf32, #tpu.memory_space<vmem>>, vector<16x256xf32>
    %12 = math.tanh %11 : vector<16x256xf32>
    %13 = arith.truncf %12 : vector<16x256xf32> to vector<16x256xbf16>
    %c0_12 = arith.constant 0 : index
    %c0_13 = arith.constant 0 : index
    %14 = vector.load %arg5[%c0_12, %c0_13] : memref<512x256xbf16, #tpu.memory_space<vmem>>, vector<256x256xbf16>
    %cst_14 = arith.constant dense<0.000000e+00> : vector<16x256xf32>
    %15 = tpu.matmul %13, %14, %cst_14 {dimension_numbers = #tpu.dot_dimension_numbers<[1], [0], [0], [1], [0, 0, 1, 1], [], []>} : vector<16x256xbf16>, vector<256x256xbf16>, vector<16x256xf32> -> vector<16x256xf32>
    %16 = arith.addf %15, %10 : vector<16x256xf32>
    %17 = math.tanh %16 : vector<16x256xf32>
    %18 = arith.truncf %17 : vector<16x256xf32> to vector<16x256xbf16>
    %c0_15 = arith.constant 0 : index
    %c0_16 = arith.constant 0 : index
    %19 = vector.load %arg8[%c0_15, %c0_16] : memref<1x128xf32, #tpu.memory_space<vmem>>, vector<1x128xf32>
    %20 = vector.shape_cast %19 : vector<1x128xf32> to vector<1x128xf32>
    %21 = vector.broadcast %20 : vector<1x128xf32> to vector<16x128xf32>
    %c0_17 = arith.constant 0 : index
    %c0_18 = arith.constant 0 : index
    %22 = vector.load %arg7[%c0_17, %c0_18] : memref<1280x128xbf16, #tpu.memory_space<vmem>>, vector<256x128xbf16>
    %cst_19 = arith.constant dense<0.000000e+00> : vector<16x128xf32>
    %23 = tpu.matmul %18, %22, %cst_19 {dimension_numbers = #tpu.dot_dimension_numbers<[1], [0], [0], [1], [0, 0, 1, 1], [], []>} : vector<16x256xbf16>, vector<256x128xbf16>, vector<16x128xf32> -> vector<16x128xf32>
    %24 = arith.addf %21, %23 : vector<16x128xf32>
    %c16 = arith.constant 16 : index
    %c0_20 = arith.constant 0 : index
    %25 = vector.load %arg10[%c16, %c0_20] : memref<80x256xf32, #tpu.memory_space<vmem>>, vector<16x256xf32>
    %c0_21 = arith.constant 0 : index
    %c0_22 = arith.constant 0 : index
    %26 = vector.load %arg3[%c0_21, %c0_22] : memref<256x256xbf16, #tpu.memory_space<vmem>>, vector<256x256xbf16>
    %cst_23 = arith.constant dense<0.000000e+00> : vector<16x256xf32>
    %27 = tpu.matmul %13, %26, %cst_23 {dimension_numbers = #tpu.dot_dimension_numbers<[1], [0], [0], [1], [0, 0, 1, 1], [], []>} : vector<16x256xbf16>, vector<256x256xbf16>, vector<16x256xf32> -> vector<16x256xf32>
    %28 = arith.addf %25, %27 : vector<16x256xf32>
    %29 = math.tanh %28 : vector<16x256xf32>
    %30 = arith.truncf %29 : vector<16x256xf32> to vector<16x256xbf16>
    %c0_24 = arith.constant 0 : index
    %c0_25 = arith.constant 0 : index
    %31 = vector.load %arg11[%c0_24, %c0_25] : memref<16x512xbf16, #tpu.memory_space<vmem>>, vector<16x256xbf16>
    tpu.vector_store %arg11[%c0_24, %c0_25], %30 {strides = array<i32>} : memref<16x512xbf16, #tpu.memory_space<vmem>>, vector<16x256xbf16>,
    %c0_26 = arith.constant 0 : index
    %c256 = arith.constant 256 : index
    %32 = vector.load %arg11[%c0_26, %c256] : memref<16x512xbf16, #tpu.memory_space<vmem>>, vector<16x256xbf16>
    tpu.vector_store %arg11[%c0_26, %c256], %18 {strides = array<i32>} : memref<16x512xbf16, #tpu.memory_space<vmem>>, vector<16x256xbf16>,
    %c0_27 = arith.constant 0 : index
    %c0_28 = arith.constant 0 : index
    %33 = vector.load %arg11[%c0_27, %c0_28] : memref<16x512xbf16, #tpu.memory_space<vmem>>, vector<16x512xbf16>
    %c0_29 = arith.constant 0 : index
    %c0_30 = arith.constant 0 : index
    %34 = vector.load %arg5[%c0_29, %c0_30] : memref<512x256xbf16, #tpu.memory_space<vmem>>, vector<512x256xbf16>
    %cst_31 = arith.constant dense<0.000000e+00> : vector<16x256xf32>
    %35 = tpu.matmul %33, %34, %cst_31 {dimension_numbers = #tpu.dot_dimension_numbers<[1], [0], [0], [1], [0, 0, 1, 1], [], []>} : vector<16x512xbf16>, vector<512x256xbf16>, vector<16x256xf32> -> vector<16x256xf32>
    %36 = arith.addf %35, %10 : vector<16x256xf32>
    %37 = math.tanh %36 : vector<16x256xf32>
    %38 = arith.truncf %37 : vector<16x256xf32> to vector<16x256xbf16>
    %c256_32 = arith.constant 256 : index
    %c0_33 = arith.constant 0 : index
    %39 = vector.load %arg7[%c256_32, %c0_33] : memref<1280x128xbf16, #tpu.memory_space<vmem>>, vector<256x128xbf16>
    %cst_34 = arith.constant dense<0.000000e+00> : vector<16x128xf32>
    %40 = tpu.matmul %38, %39, %cst_34 {dimension_numbers = #tpu.dot_dimension_numbers<[1], [0], [0], [1], [0, 0, 1, 1], [], []>} : vector<16x256xbf16>, vector<256x128xbf16>, vector<16x128xf32> -> vector<16x128xf32>
    %41 = arith.addf %24, %40 : vector<16x128xf32>
    %c32 = arith.constant 32 : index
    %c0_35 = arith.constant 0 : index
    %42 = vector.load %arg10[%c32, %c0_35] : memref<80x256xf32, #tpu.memory_space<vmem>>, vector<16x256xf32>
    %c0_36 = arith.constant 0 : index
    %c0_37 = arith.constant 0 : index
    %43 = vector.load %arg3[%c0_36, %c0_37] : memref<256x256xbf16, #tpu.memory_space<vmem>>, vector<256x256xbf16>
    %cst_38 = arith.constant dense<0.000000e+00> : vector<16x256xf32>
    %44 = tpu.matmul %30, %43, %cst_38 {dimension_numbers = #tpu.dot_dimension_numbers<[1], [0], [0], [1], [0, 0, 1, 1], [], []>} : vector<16x256xbf16>, vector<256x256xbf16>, vector<16x256xf32> -> vector<16x256xf32>
    %45 = arith.addf %42, %44 : vector<16x256xf32>
    %46 = math.tanh %45 : vector<16x256xf32>
    %47 = arith.truncf %46 : vector<16x256xf32> to vector<16x256xbf16>
    %c0_39 = arith.constant 0 : index
    %c0_40 = arith.constant 0 : index
    %48 = vector.load %arg11[%c0_39, %c0_40] : memref<16x512xbf16, #tpu.memory_space<vmem>>, vector<16x256xbf16>
    tpu.vector_store %arg11[%c0_39, %c0_40], %47 {strides = array<i32>} : memref<16x512xbf16, #tpu.memory_space<vmem>>, vector<16x256xbf16>,
    %c0_41 = arith.constant 0 : index
    %c256_42 = arith.constant 256 : index
    %49 = vector.load %arg11[%c0_41, %c256_42] : memref<16x512xbf16, #tpu.memory_space<vmem>>, vector<16x256xbf16>
    tpu.vector_store %arg11[%c0_41, %c256_42], %38 {strides = array<i32>} : memref<16x512xbf16, #tpu.memory_space<vmem>>, vector<16x256xbf16>,
    %c0_43 = arith.constant 0 : index
    %c0_44 = arith.constant 0 : index
    %50 = vector.load %arg11[%c0_43, %c0_44] : memref<16x512xbf16, #tpu.memory_space<vmem>>, vector<16x512xbf16>
    %c0_45 = arith.constant 0 : index
    %c0_46 = arith.constant 0 : index
    %51 = vector.load %arg5[%c0_45, %c0_46] : memref<512x256xbf16, #tpu.memory_space<vmem>>, vector<512x256xbf16>
    %cst_47 = arith.constant dense<0.000000e+00> : vector<16x256xf32>
    %52 = tpu.matmul %50, %51, %cst_47 {dimension_numbers = #tpu.dot_dimension_numbers<[1], [0], [0], [1], [0, 0, 1, 1], [], []>} : vector<16x512xbf16>, vector<512x256xbf16>, vector<16x256xf32> -> vector<16x256xf32>
    %53 = arith.addf %52, %10 : vector<16x256xf32>
    %54 = math.tanh %53 : vector<16x256xf32>
    %55 = arith.truncf %54 : vector<16x256xf32> to vector<16x256xbf16>
    %c512 = arith.constant 512 : index
    %c0_48 = arith.constant 0 : index
    %56 = vector.load %arg7[%c512, %c0_48] : memref<1280x128xbf16, #tpu.memory_space<vmem>>, vector<256x128xbf16>
    %cst_49 = arith.constant dense<0.000000e+00> : vector<16x128xf32>
    %57 = tpu.matmul %55, %56, %cst_49 {dimension_numbers = #tpu.dot_dimension_numbers<[1], [0], [0], [1], [0, 0, 1, 1], [], []>} : vector<16x256xbf16>, vector<256x128xbf16>, vector<16x128xf32> -> vector<16x128xf32>
    %58 = arith.addf %41, %57 : vector<16x128xf32>
    %c48 = arith.constant 48 : index
    %c0_50 = arith.constant 0 : index
    %59 = vector.load %arg10[%c48, %c0_50] : memref<80x256xf32, #tpu.memory_space<vmem>>, vector<16x256xf32>
    %c0_51 = arith.constant 0 : index
    %c0_52 = arith.constant 0 : index
    %60 = vector.load %arg3[%c0_51, %c0_52] : memref<256x256xbf16, #tpu.memory_space<vmem>>, vector<256x256xbf16>
    %cst_53 = arith.constant dense<0.000000e+00> : vector<16x256xf32>
    %61 = tpu.matmul %47, %60, %cst_53 {dimension_numbers = #tpu.dot_dimension_numbers<[1], [0], [0], [1], [0, 0, 1, 1], [], []>} : vector<16x256xbf16>, vector<256x256xbf16>, vector<16x256xf32> -> vector<16x256xf32>
    %62 = arith.addf %59, %61 : vector<16x256xf32>
    %63 = math.tanh %62 : vector<16x256xf32>
    %64 = arith.truncf %63 : vector<16x256xf32> to vector<16x256xbf16>
    %c0_54 = arith.constant 0 : index
    %c0_55 = arith.constant 0 : index
    %65 = vector.load %arg11[%c0_54, %c0_55] : memref<16x512xbf16, #tpu.memory_space<vmem>>, vector<16x256xbf16>
    tpu.vector_store %arg11[%c0_54, %c0_55], %64 {strides = array<i32>} : memref<16x512xbf16, #tpu.memory_space<vmem>>, vector<16x256xbf16>,
    %c0_56 = arith.constant 0 : index
    %c256_57 = arith.constant 256 : index
    %66 = vector.load %arg11[%c0_56, %c256_57] : memref<16x512xbf16, #tpu.memory_space<vmem>>, vector<16x256xbf16>
    tpu.vector_store %arg11[%c0_56, %c256_57], %55 {strides = array<i32>} : memref<16x512xbf16, #tpu.memory_space<vmem>>, vector<16x256xbf16>,
    %c0_58 = arith.constant 0 : index
    %c0_59 = arith.constant 0 : index
    %67 = vector.load %arg11[%c0_58, %c0_59] : memref<16x512xbf16, #tpu.memory_space<vmem>>, vector<16x512xbf16>
    %c0_60 = arith.constant 0 : index
    %c0_61 = arith.constant 0 : index
    %68 = vector.load %arg5[%c0_60, %c0_61] : memref<512x256xbf16, #tpu.memory_space<vmem>>, vector<512x256xbf16>
    %cst_62 = arith.constant dense<0.000000e+00> : vector<16x256xf32>
    %69 = tpu.matmul %67, %68, %cst_62 {dimension_numbers = #tpu.dot_dimension_numbers<[1], [0], [0], [1], [0, 0, 1, 1], [], []>} : vector<16x512xbf16>, vector<512x256xbf16>, vector<16x256xf32> -> vector<16x256xf32>
    %70 = arith.addf %69, %10 : vector<16x256xf32>
    %71 = math.tanh %70 : vector<16x256xf32>
    %72 = arith.truncf %71 : vector<16x256xf32> to vector<16x256xbf16>
    %c768 = arith.constant 768 : index
    %c0_63 = arith.constant 0 : index
    %73 = vector.load %arg7[%c768, %c0_63] : memref<1280x128xbf16, #tpu.memory_space<vmem>>, vector<256x128xbf16>
    %cst_64 = arith.constant dense<0.000000e+00> : vector<16x128xf32>
    %74 = tpu.matmul %72, %73, %cst_64 {dimension_numbers = #tpu.dot_dimension_numbers<[1], [0], [0], [1], [0, 0, 1, 1], [], []>} : vector<16x256xbf16>, vector<256x128xbf16>, vector<16x128xf32> -> vector<16x128xf32>
    %75 = arith.addf %58, %74 : vector<16x128xf32>
    %c64 = arith.constant 64 : index
    %c0_65 = arith.constant 0 : index
    %76 = vector.load %arg10[%c64, %c0_65] : memref<80x256xf32, #tpu.memory_space<vmem>>, vector<16x256xf32>
    %c0_66 = arith.constant 0 : index
    %c0_67 = arith.constant 0 : index
    %77 = vector.load %arg3[%c0_66, %c0_67] : memref<256x256xbf16, #tpu.memory_space<vmem>>, vector<256x256xbf16>
    %cst_68 = arith.constant dense<0.000000e+00> : vector<16x256xf32>
    %78 = tpu.matmul %64, %77, %cst_68 {dimension_numbers = #tpu.dot_dimension_numbers<[1], [0], [0], [1], [0, 0, 1, 1], [], []>} : vector<16x256xbf16>, vector<256x256xbf16>, vector<16x256xf32> -> vector<16x256xf32>
    %79 = arith.addf %76, %78 : vector<16x256xf32>
    %80 = math.tanh %79 : vector<16x256xf32>
    %81 = arith.truncf %80 : vector<16x256xf32> to vector<16x256xbf16>
    %c0_69 = arith.constant 0 : index
    %c0_70 = arith.constant 0 : index
    %82 = vector.load %arg11[%c0_69, %c0_70] : memref<16x512xbf16, #tpu.memory_space<vmem>>, vector<16x256xbf16>
    tpu.vector_store %arg11[%c0_69, %c0_70], %81 {strides = array<i32>} : memref<16x512xbf16, #tpu.memory_space<vmem>>, vector<16x256xbf16>,
    %c0_71 = arith.constant 0 : index
    %c256_72 = arith.constant 256 : index
    %83 = vector.load %arg11[%c0_71, %c256_72] : memref<16x512xbf16, #tpu.memory_space<vmem>>, vector<16x256xbf16>
    tpu.vector_store %arg11[%c0_71, %c256_72], %72 {strides = array<i32>} : memref<16x512xbf16, #tpu.memory_space<vmem>>, vector<16x256xbf16>,
    %c0_73 = arith.constant 0 : index
    %c0_74 = arith.constant 0 : index
    %84 = vector.load %arg11[%c0_73, %c0_74] : memref<16x512xbf16, #tpu.memory_space<vmem>>, vector<16x512xbf16>
    %c0_75 = arith.constant 0 : index
    %c0_76 = arith.constant 0 : index
    %85 = vector.load %arg5[%c0_75, %c0_76] : memref<512x256xbf16, #tpu.memory_space<vmem>>, vector<512x256xbf16>
    %cst_77 = arith.constant dense<0.000000e+00> : vector<16x256xf32>
    %86 = tpu.matmul %84, %85, %cst_77 {dimension_numbers = #tpu.dot_dimension_numbers<[1], [0], [0], [1], [0, 0, 1, 1], [], []>} : vector<16x512xbf16>, vector<512x256xbf16>, vector<16x256xf32> -> vector<16x256xf32>
    %87 = arith.addf %86, %10 : vector<16x256xf32>
    %88 = math.tanh %87 : vector<16x256xf32>
    %89 = arith.truncf %88 : vector<16x256xf32> to vector<16x256xbf16>
    %c1024 = arith.constant 1024 : index
    %c0_78 = arith.constant 0 : index
    %90 = vector.load %arg7[%c1024, %c0_78] : memref<1280x128xbf16, #tpu.memory_space<vmem>>, vector<256x128xbf16>
    %cst_79 = arith.constant dense<0.000000e+00> : vector<16x128xf32>
    %91 = tpu.matmul %89, %90, %cst_79 {dimension_numbers = #tpu.dot_dimension_numbers<[1], [0], [0], [1], [0, 0, 1, 1], [], []>} : vector<16x256xbf16>, vector<256x128xbf16>, vector<16x128xf32> -> vector<16x128xf32>
    %92 = arith.addf %75, %91 : vector<16x128xf32>
    %c0_80 = arith.constant 0 : index
    %c0_81 = arith.constant 0 : index
    %93 = vector.load %arg9[%c0_80, %c0_81] : memref<16x128xf32, #tpu.memory_space<vmem>>, vector<16x128xf32>
    tpu.vector_store %arg9[%c0_80, %c0_81], %92 {strides = array<i32>} : memref<16x128xf32, #tpu.memory_space<vmem>>, vector<16x128xf32>,
    return
  }
  func.func @transform_0(%arg0: i32) -> (i32, i32, i32) {
    %c0_i32 = arith.constant 0 : i32
    %c0_i32_0 = arith.constant 0 : i32
    %c0_i32_1 = arith.constant 0 : i32
    return %c0_i32, %arg0, %c0_i32_0 : i32, i32, i32
  }
  func.func @transform_1(%arg0: i32) -> (i32, i32) {
    %c0_i32 = arith.constant 0 : i32
    %c0_i32_0 = arith.constant 0 : i32
    %c0_i32_1 = arith.constant 0 : i32
    return %c0_i32, %c0_i32_0 : i32, i32
  }
  func.func @transform_2(%arg0: i32) -> (i32, i32) {
    %c0_i32 = arith.constant 0 : i32
    %c0_i32_0 = arith.constant 0 : i32
    %c0_i32_1 = arith.constant 0 : i32
    return %c0_i32, %c0_i32_0 : i32, i32
  }
  func.func @transform_3(%arg0: i32) -> (i32, i32) {
    %c0_i32 = arith.constant 0 : i32
    %c0_i32_0 = arith.constant 0 : i32
    %c0_i32_1 = arith.constant 0 : i32
    return %c0_i32, %c0_i32_0 : i32, i32
  }
  func.func @transform_4(%arg0: i32) -> (i32, i32) {
    %c0_i32 = arith.constant 0 : i32
    %c0_i32_0 = arith.constant 0 : i32
    %c0_i32_1 = arith.constant 0 : i32
    return %c0_i32, %c0_i32_0 : i32, i32
  }
  func.func @transform_5(%arg0: i32) -> (i32, i32) {
    %c0_i32 = arith.constant 0 : i32
    %c0_i32_0 = arith.constant 0 : i32
    %c0_i32_1 = arith.constant 0 : i32
    return %c0_i32, %c0_i32_0 : i32, i32
  }
  func.func @transform_6(%arg0: i32) -> (i32, i32) {
    %c0_i32 = arith.constant 0 : i32
    %c0_i32_0 = arith.constant 0 : i32
    %c0_i32_1 = arith.constant 0 : i32
    return %c0_i32, %c0_i32_0 : i32, i32
  }
  func.func @transform_7(%arg0: i32) -> (i32, i32) {
    %c0_i32 = arith.constant 0 : i32
    %c0_i32_0 = arith.constant 0 : i32
    %c0_i32_1 = arith.constant 0 : i32
    return %c0_i32, %c0_i32_0 : i32, i32
  }
  func.func @transform_8(%arg0: i32) -> (i32, i32) {
    %c0_i32 = arith.constant 0 : i32
    %c0_i32_0 = arith.constant 0 : i32
    return %arg0, %c0_i32 : i32, i32
  }
}

</mosaic_0001>

<llo_original>
// kernel: tpu_custom_call.1
$region0: #{tpu_custom_call.1}
  #allocation0 [shape = 'u32[]', space=smem, size = 0x4, offset = 0x4, fixed_abs, tag = 'smem constant byte address 0x4 - core index']
  #allocation1 [shape = 'u32[144,128]{1,0:T(1,128)}', space=vmem, size = 0x12000, scoped, tag = 'internal scratch']
  #allocation2 [shape = 'f32[80,256]{1,0:T(8,128)}', space=vmem, size = 0x14000, scoped, tag = 'scratch operand']
  #allocation3 [shape = 'bf16[16,512]{1,0:T(8,128)(2,1)}', space=vmem, size = 0x4000, scoped, tag = 'scratch operand']
  %s0 = inlined_call_operand.hbm [shape: bf16[5,16,256], index: 0, kind: input, shape index: {}]
  %s1 = inlined_call_operand.hbm [shape: bf16[256,256], index: 1, kind: input, shape index: {}]
  %s2 = inlined_call_operand.hbm [shape: bf16[256,256], index: 2, kind: input, shape index: {}]
  %s3 = inlined_call_operand.vmem [shape: f32[1,256], index: 3, kind: input, shape index: {}]
  %s4 = inlined_call_operand.hbm [shape: bf16[512,256], index: 4, kind: input, shape index: {}]
  %s5 = inlined_call_operand.vmem [shape: f32[1,256], index: 5, kind: input, shape index: {}]
  %s6 = inlined_call_operand.hbm [shape: bf16[1280,128], index: 6, kind: input, shape index: {}]
  %s7 = inlined_call_operand.vmem [shape: f32[1,128], index: 7, kind: input, shape index: {}]
  %s8 = inlined_call_operand.hbm [shape: f32[16,128], index: 8, kind: output, shape index: {}]
  %s9 = sld [smem:[#allocation0]]
  $region62: #{tpu_custom_call.1} parent=0
    _
  %s11 = ssub.s32 1, %s9
  %s12 = scalar_select 0, %s11, %s9
  $region1: #{tpu_custom_call.1} parent=0
    #allocation4 [shape = 'u8[40960]{0}', space=vmem, size = 0xa000, scoped, tag = 'input window, operand 0, single buffered']
    #allocation5 [shape = 's32[1]{0}', space=sflag, size = 0x4, scoped, tag = 'scoped memory for tpu_custom_call.1']
    #allocation6 [shape = 's32[1]{0}', space=sflag, size = 0x4, scoped, tag = 'scoped memory for tpu_custom_call.1']
    #allocation7 [shape = 'u8[131072]{0}', space=vmem, size = 0x20000, scoped, tag = 'input window, operand 1, single buffered']
    #allocation8 [shape = 's32[1]{0}', space=sflag, size = 0x4, scoped, tag = 'scoped memory for tpu_custom_call.1']
    #allocation9 [shape = 'u8[131072]{0}', space=vmem, size = 0x20000, scoped, tag = 'input window, operand 2, single buffered']
    #allocation10 [shape = 'u8[262144]{0}', space=vmem, size = 0x40000, scoped, tag = 'input window, operand 4, single buffered']
    #allocation11 [shape = 's32[1]{0}', space=sflag, size = 0x4, scoped, tag = 'scoped memory for tpu_custom_call.1']
    #allocation12 [shape = 'u8[327680]{0}', space=vmem, size = 0x50000, scoped, tag = 'input window, operand 6, single buffered']
    #allocation13 [shape = 'u8[8192]{0}', space=vmem, size = 0x2000, scoped, tag = 'output window, operand 0, single buffered']
    %13 = vsyncpa [#allocation5], 0
    %14 = vsyncpa [#allocation8], 0
    %15 = vsyncpa [#allocation11], 0
    %16 = vsyncpa [#allocation6], 0
    // Predicated region
    $region2: #{tpu_custom_call.1} parent=1 // pred_check
      _
    $region3: #{tpu_custom_call.1} parent=1 // pred_check_branch
      %18 = sbr.rel (0) target = $region5
    $region4: #{tpu_custom_call.1} parent=1 // pred_region
      %s20 = ssub.s32 1280, 1280
      %21 = vsyncadd [#allocation5], %s20
      %s22 = sshll.u32 [#allocation4], 4
      %s23 = int_to_ptr.vmem [resolvable:$true] %s22
      %28 = dma.hbm_to_vmem [thread:$0]  %s0, 1280, %s23, [#allocation5], 128, 128, 8
    $region5: #{tpu_custom_call.1} parent=1 // pred_fallthru
      _
    // Predicated region
    $region6: #{tpu_custom_call.1} parent=1 // pred_check
      _
    $region7: #{tpu_custom_call.1} parent=1 // pred_check_branch
      %30 = sbr.rel (0) target = $region9
    $region8: #{tpu_custom_call.1} parent=1 // pred_region
      %s32 = ssub.s32 4096, 4096
      %33 = vsyncadd [#allocation8], %s32
      %s34 = sshll.u32 [#allocation7], 4
      %s35 = int_to_ptr.vmem [resolvable:$true] %s34
      %40 = dma.hbm_to_vmem [thread:$0]  %s1, 4096, %s35, [#allocation8], 128, 128, 8
    $region9: #{tpu_custom_call.1} parent=1 // pred_fallthru
      _
    // Predicated region
    $region10: #{tpu_custom_call.1} parent=1 // pred_check
      _
    $region11: #{tpu_custom_call.1} parent=1 // pred_check_branch
      %42 = sbr.rel (0) target = $region13
    $region12: #{tpu_custom_call.1} parent=1 // pred_region
      %s44 = ssub.s32 4096, 4096
      %45 = vsyncadd [#allocation8], %s44
      %s46 = sshll.u32 [#allocation9], 4
      %s47 = int_to_ptr.vmem [resolvable:$true] %s46
      %52 = dma.hbm_to_vmem [thread:$0]  %s2, 4096, %s47, [#allocation8], 128, 128, 8
    $region13: #{tpu_custom_call.1} parent=1 // pred_fallthru
      _
    // Predicated region
    $region14: #{tpu_custom_call.1} parent=1 // pred_check
      _
    $region15: #{tpu_custom_call.1} parent=1 // pred_check_branch
      %54 = sbr.rel (0) target = $region17
    $region16: #{tpu_custom_call.1} parent=1 // pred_region
      _
    $region17: #{tpu_custom_call.1} parent=1 // pred_fallthru
      _
    // Predicated region
    $region18: #{tpu_custom_call.1} parent=1 // pred_check
      _
    $region19: #{tpu_custom_call.1} parent=1 // pred_check_branch
      %56 = sbr.rel (0) target = $region21
    $region20: #{tpu_custom_call.1} parent=1 // pred_region
      %s58 = ssub.s32 8192, 8192
      %59 = vsyncadd [#allocation11], %s58
      %s60 = sshll.u32 [#allocation10], 4
      %s61 = int_to_ptr.vmem [resolvable:$true] %s60
      %66 = dma.hbm_to_vmem [thread:$0]  %s4, 8192, %s61, [#allocation11], 128, 128, 8
    $region21: #{tpu_custom_call.1} parent=1 // pred_fallthru
      _
    // Predicated region
    $region22: #{tpu_custom_call.1} parent=1 // pred_check
      _
    $region23: #{tpu_custom_call.1} parent=1 // pred_check_branch
      %68 = sbr.rel (0) target = $region25
    $region24: #{tpu_custom_call.1} parent=1 // pred_region
      _
    $region25: #{tpu_custom_call.1} parent=1 // pred_fallthru
      _
    // Predicated region
    $region26: #{tpu_custom_call.1} parent=1 // pred_check
      _
    $region27: #{tpu_custom_call.1} parent=1 // pred_check_branch
      %70 = sbr.rel (0) target = $region29
    $region28: #{tpu_custom_call.1} parent=1 // pred_region
      %s72 = ssub.s32 10240, 10240
      %73 = vsyncadd [#allocation11], %s72
      %s74 = sshll.u32 [#allocation12], 4
      %s75 = int_to_ptr.vmem [resolvable:$true] %s74
      %80 = dma.hbm_to_vmem [thread:$0]  %s6, 10240, %s75, [#allocation11], 64, 64, 4
    $region29: #{tpu_custom_call.1} parent=1 // pred_fallthru
      _
    // Predicated region
    $region30: #{tpu_custom_call.1} parent=1 // pred_check
      _
    $region31: #{tpu_custom_call.1} parent=1 // pred_check_branch
      %82 = sbr.rel (0) target = $region33
    $region32: #{tpu_custom_call.1} parent=1 // pred_region
      _
    $region33: #{tpu_custom_call.1} parent=1 // pred_fallthru
      _
    // Predicated region
    $region34: #{tpu_custom_call.1} parent=1 // pred_check
      _
    $region35: #{tpu_custom_call.1} parent=1 // pred_check_branch
      %84 = sbr.rel (0) target = $region37
    $region36: #{tpu_custom_call.1} parent=1 // pred_region
      %85 = dma.done [#allocation5], 1280
    $region37: #{tpu_custom_call.1} parent=1 // pred_fallthru
      _
    // Predicated region
    $region38: #{tpu_custom_call.1} parent=1 // pred_check
      _
    $region39: #{tpu_custom_call.1} parent=1 // pred_check_branch
      %87 = sbr.rel (0) target = $region41
    $region40: #{tpu_custom_call.1} parent=1 // pred_region
      %88 = dma.done [#allocation8], 4096
    $region41: #{tpu_custom_call.1} parent=1 // pred_fallthru
      _
    // Predicated region
    $region42: #{tpu_custom_call.1} parent=1 // pred_check
      _
    $region43: #{tpu_custom_call.1} parent=1 // pred_check_branch
      %90 = sbr.rel (0) target = $region45
    $region44: #{tpu_custom_call.1} parent=1 // pred_region
      %91 = dma.done [#allocation8], 4096
    $region45: #{tpu_custom_call.1} parent=1 // pred_fallthru
      _
    // Predicated region
    $region46: #{tpu_custom_call.1} parent=1 // pred_check
      _
    $region47: #{tpu_custom_call.1} parent=1 // pred_check_branch
      %93 = sbr.rel (0) target = $region49
    $region48: #{tpu_custom_call.1} parent=1 // pred_region
      %94 = dma.done [#allocation11], 8192
    $region49: #{tpu_custom_call.1} parent=1 // pred_fallthru
      _
    // Predicated region
    $region50: #{tpu_custom_call.1} parent=1 // pred_check
      _
    $region51: #{tpu_custom_call.1} parent=1 // pred_check_branch
      %96 = sbr.rel (0) target = $region53
    $region52: #{tpu_custom_call.1} parent=1 // pred_region
      %97 = dma.done [#allocation11], 10240
    $region53: #{tpu_custom_call.1} parent=1 // pred_fallthru
      _
    %v99 = vld [vmem:[#allocation4] sm:$0xff]
    %v100 = vld [vmem:[#allocation4 + $0x8] sm:$0xff]
    %v101 = vld [vmem:[#allocation4 + $0x10] sm:$0xff]
    %v102 = vld [vmem:[#allocation4 + $0x18] sm:$0xff]
    %v103 = vld [vmem:[#allocation4 + $0x20] sm:$0xff]
    %v104 = vld [vmem:[#allocation4 + $0x28] sm:$0xff]
    %v105 = vld [vmem:[#allocation4 + $0x30] sm:$0xff]
    %v106 = vld [vmem:[#allocation4 + $0x38] sm:$0xff]
    %v107 = vld [vmem:[#allocation4 + $0x40] sm:$0xff]
    %v108 = vld [vmem:[#allocation4 + $0x48] sm:$0xff]
    %v109 = vld [vmem:[#allocation7] sm:$0xff]
    %v110 = vld [vmem:[#allocation7 + $0x8] sm:$0xff]
    %v111 = vld [vmem:[#allocation7 + $0x10] sm:$0xff]
    %v112 = vld [vmem:[#allocation7 + $0x18] sm:$0xff]
    %v113 = vld [vmem:[#allocation7 + $0x20] sm:$0xff]
    %v114 = vld [vmem:[#allocation7 + $0x28] sm:$0xff]
    %v115 = vld [vmem:[#allocation7 + $0x30] sm:$0xff]
    %v116 = vld [vmem:[#allocation7 + $0x38] sm:$0xff]
    %v117 = vld [vmem:[#allocation7 + $0x40] sm:$0xff]
    %v118 = vld [vmem:[#allocation7 + $0x48] sm:$0xff]
    %v119 = vld [vmem:[#allocation7 + $0x50] sm:$0xff]
    %v120 = vld [vmem:[#allocation7 + $0x58] sm:$0xff]
    %v121 = vld [vmem:[#allocation7 + $0x60] sm:$0xff]
    %v122 = vld [vmem:[#allocation7 + $0x68] sm:$0xff]
    %v123 = vld [vmem:[#allocation7 + $0x70] sm:$0xff]
    %v124 = vld [vmem:[#allocation7 + $0x78] sm:$0xff]
    %v125 = vld [vmem:[#allocation7 + $0x80] sm:$0xff]
    %v126 = vld [vmem:[#allocation7 + $0x88] sm:$0xff]
    %v127 = vld [vmem:[#allocation7 + $0x90] sm:$0xff]
    %v128 = vld [vmem:[#allocation7 + $0x98] sm:$0xff]
    %v129 = vld [vmem:[#allocation7 + $0xa0] sm:$0xff]
    %v130 = vld [vmem:[#allocation7 + $0xa8] sm:$0xff]
    %v131 = vld [vmem:[#allocation7 + $0xb0] sm:$0xff]
    %v132 = vld [vmem:[#allocation7 + $0xb8] sm:$0xff]
    %v133 = vld [vmem:[#allocation7 + $0xc0] sm:$0xff]
    %v134 = vld [vmem:[#allocation7 + $0xc8] sm:$0xff]
    %v135 = vld [vmem:[#allocation7 + $0xd0] sm:$0xff]
    %v136 = vld [vmem:[#allocation7 + $0xd8] sm:$0xff]
    %v137 = vld [vmem:[#allocation7 + $0xe0] sm:$0xff]
    %v138 = vld [vmem:[#allocation7 + $0xe8] sm:$0xff]
    %v139 = vld [vmem:[#allocation7 + $0xf0] sm:$0xff]
    %v140 = vld [vmem:[#allocation7 + $0xf8] sm:$0xff]
    %v141 = vld [vmem:[%s3] sm:$0x3]
    %v143 = vlaneseq
    %v144 = vshrl.u32 %v143, 7
    %v145 = vsub.s32 0, %v144
    %v146 = vrot.slane %v141, %v145
    %v147 = vlaneseq
    %v148 = vshrl.u32 %v147, 7
    %v149 = vsub.s32 1, %v148
    %v150 = vrot.slane %v141, %v149
    %v163 = vunpack.c.l.b16 %v99
    %v164 = vunpack.c.h.b16 %v99
    %v165 = vunpack.c.l.b16 %v100
    %v166 = vunpack.c.h.b16 %v100
    %v167 = vunpack.c.l.b16 %v101
    %v168 = vunpack.c.h.b16 %v101
    %v169 = vunpack.c.l.b16 %v102
    %v170 = vunpack.c.h.b16 %v102
    %v171 = vunpack.c.l.b16 %v103
    %v172 = vunpack.c.h.b16 %v103
    %v173 = vunpack.c.l.b16 %v104
    %v174 = vunpack.c.h.b16 %v104
    %v175 = vunpack.c.l.b16 %v105
    %v176 = vunpack.c.h.b16 %v105
    %v177 = vunpack.c.l.b16 %v106
    %v178 = vunpack.c.h.b16 %v106
    %v179 = vunpack.c.l.b16 %v107
    %v180 = vunpack.c.h.b16 %v107
    %v181 = vunpack.c.l.b16 %v108
    %v182 = vunpack.c.h.b16 %v108
    %v183 = vpack.c.b16 %v165, %v163
    %v184 = vpack.c.b16 %v166, %v164
    %v185 = vpack.c.b16 %v169, %v167
    %v186 = vpack.c.b16 %v170, %v168
    %v187 = vpack.c.b16 %v173, %v171
    %v188 = vpack.c.b16 %v174, %v172
    %v189 = vpack.c.b16 %v177, %v175
    %v190 = vpack.c.b16 %v178, %v176
    %v191 = vpack.c.b16 %v181, %v179
    %v192 = vpack.c.b16 %v182, %v180
    %v235 = vunpack.c.l.b16 %v109
    %v236 = vunpack.c.h.b16 %v109
    %v237 = vunpack.c.l.b16 %v110
    %v238 = vunpack.c.h.b16 %v110
    %v239 = vunpack.c.l.b16 %v111
    %v240 = vunpack.c.h.b16 %v111
    %v241 = vunpack.c.l.b16 %v112
    %v242 = vunpack.c.h.b16 %v112
    %v243 = vunpack.c.l.b16 %v113
    %v244 = vunpack.c.h.b16 %v113
    %v245 = vunpack.c.l.b16 %v114
    %v246 = vunpack.c.h.b16 %v114
    %v247 = vunpack.c.l.b16 %v115
    %v248 = vunpack.c.h.b16 %v115
    %v249 = vunpack.c.l.b16 %v116
    %v250 = vunpack.c.h.b16 %v116
    %v251 = vunpack.c.l.b16 %v117
    %v252 = vunpack.c.h.b16 %v117
    %v253 = vunpack.c.l.b16 %v118
    %v254 = vunpack.c.h.b16 %v118
    %v255 = vunpack.c.l.b16 %v119
    %v256 = vunpack.c.h.b16 %v119
    %v257 = vunpack.c.l.b16 %v120
    %v258 = vunpack.c.h.b16 %v120
    %v259 = vunpack.c.l.b16 %v121
    %v260 = vunpack.c.h.b16 %v121
    %v261 = vunpack.c.l.b16 %v122
    %v262 = vunpack.c.h.b16 %v122
    %v263 = vunpack.c.l.b16 %v123
    %v264 = vunpack.c.h.b16 %v123
    %v265 = vunpack.c.l.b16 %v124
    %v266 = vunpack.c.h.b16 %v124
    %v267 = vunpack.c.l.b16 %v125
    %v268 = vunpack.c.h.b16 %v125
    %v269 = vunpack.c.l.b16 %v126
    %v270 = vunpack.c.h.b16 %v126
    %v271 = vunpack.c.l.b16 %v127
    %v272 = vunpack.c.h.b16 %v127
    %v273 = vunpack.c.l.b16 %v128
    %v274 = vunpack.c.h.b16 %v128
    %v275 = vunpack.c.l.b16 %v129
    %v276 = vunpack.c.h.b16 %v129
    %v277 = vunpack.c.l.b16 %v130
    %v278 = vunpack.c.h.b16 %v130
    %v279 = vunpack.c.l.b16 %v131
    %v280 = vunpack.c.h.b16 %v131
    %v281 = vunpack.c.l.b16 %v132
    %v282 = vunpack.c.h.b16 %v132
    %v283 = vunpack.c.l.b16 %v133
    %v284 = vunpack.c.h.b16 %v133
    %v285 = vunpack.c.l.b16 %v134
    %v286 = vunpack.c.h.b16 %v134
    %v287 = vunpack.c.l.b16 %v135
    %v288 = vunpack.c.h.b16 %v135
    %v289 = vunpack.c.l.b16 %v136
    %v290 = vunpack.c.h.b16 %v136
    %v291 = vunpack.c.l.b16 %v137
    %v292 = vunpack.c.h.b16 %v137
    %v293 = vunpack.c.l.b16 %v138
    %v294 = vunpack.c.h.b16 %v138
    %v295 = vunpack.c.l.b16 %v139
    %v296 = vunpack.c.h.b16 %v139
    %v297 = vunpack.c.l.b16 %v140
    %v298 = vunpack.c.h.b16 %v140
    %v299 = vpack.c.b16 %v237, %v235
    %v300 = vpack.c.b16 %v238, %v236
    %v301 = vpack.c.b16 %v241, %v239
    %v302 = vpack.c.b16 %v242, %v240
    %v303 = vpack.c.b16 %v245, %v243
    %v304 = vpack.c.b16 %v246, %v244
    %v305 = vpack.c.b16 %v249, %v247
    %v306 = vpack.c.b16 %v250, %v248
    %v307 = vpack.c.b16 %v253, %v251
    %v308 = vpack.c.b16 %v254, %v252
    %v309 = vpack.c.b16 %v257, %v255
    %v310 = vpack.c.b16 %v258, %v256
    %v311 = vpack.c.b16 %v261, %v259
    %v312 = vpack.c.b16 %v262, %v260
    %v313 = vpack.c.b16 %v265, %v263
    %v314 = vpack.c.b16 %v266, %v264
    %v315 = vpack.c.b16 %v269, %v267
    %v316 = vpack.c.b16 %v270, %v268
    %v317 = vpack.c.b16 %v273, %v271
    %v318 = vpack.c.b16 %v274, %v272
    %v319 = vpack.c.b16 %v277, %v275
    %v320 = vpack.c.b16 %v278, %v276
    %v321 = vpack.c.b16 %v281, %v279
    %v322 = vpack.c.b16 %v282, %v280
    %v323 = vpack.c.b16 %v285, %v283
    %v324 = vpack.c.b16 %v286, %v284
    %v325 = vpack.c.b16 %v289, %v287
    %v326 = vpack.c.b16 %v290, %v288
    %v327 = vpack.c.b16 %v293, %v291
    %v328 = vpack.c.b16 %v294, %v292
    %v329 = vpack.c.b16 %v297, %v295
    %v330 = vpack.c.b16 %v298, %v296
    %363 = vmatprep.subr.bf16.mxu0 %v314
    %364 = vmatpush1.bf16.msra.mxu0 %v313
    %365 = vmatprep.subr.bf16.mxu0 %v312
    %366 = vmatpush1.bf16.msra.mxu0 %v311
    %367 = vmatprep.subr.bf16.mxu0 %v310
    %368 = vmatpush1.bf16.msra.mxu0 %v309
    %369 = vmatprep.subr.bf16.mxu0 %v308
    %370 = vmatpush1.bf16.msra.mxu0 %v307
    %371 = vmatprep.subr.bf16.mxu0 %v306
    %372 = vmatpush1.bf16.msra.mxu0 %v305
    %373 = vmatprep.subr.bf16.mxu0 %v304
    %374 = vmatpush1.bf16.msra.mxu0 %v303
    %375 = vmatprep.subr.bf16.mxu0 %v302
    %376 = vmatpush1.bf16.msra.mxu0 %v301
    %377 = vmatprep.subr.bf16.mxu0 %v300
    %378 = vmatpush1.bf16.msra.mxu0 %v299
    %379 = vmatprep.subr.bf16.mxu0 %v330
    %380 = vmatpush2.bf16.msra.mxu0 %v329
    %381 = vmatprep.subr.bf16.mxu0 %v328
    %382 = vmatpush2.bf16.msra.mxu0 %v327
    %383 = vmatprep.subr.bf16.mxu0 %v326
    %384 = vmatpush2.bf16.msra.mxu0 %v325
    %385 = vmatprep.subr.bf16.mxu0 %v324
    %386 = vmatpush2.bf16.msra.mxu0 %v323
    %387 = vmatprep.subr.bf16.mxu0 %v322
    %388 = vmatpush2.bf16.msra.mxu0 %v321
    %389 = vmatprep.subr.bf16.mxu0 %v320
    %390 = vmatpush2.bf16.msra.mxu0 %v319
    %391 = vmatprep.subr.bf16.mxu0 %v318
    %392 = vmatpush2.bf16.msra.mxu0 %v317
    %393 = vmatprep.subr.bf16.mxu0 %v316
    %394 = vmatpush2.bf16.msra.mxu0 %v315
    %395 = vmatprep.mubr.bf16.mxu0 %v184
    %396 = vmatmul.mubr.bf16.gmra.mxu0 %v183
    %v397 = vpop.f32.mrf.mxu0
    %v398 = vadd.f32 %v146, %v397
    %v399 = vpop.f32.mrf.mxu0
    %v400 = vadd.f32 %v150, %v399
    %v401 = vpop.f32.mrf.mxu0
    %v402 = vadd.f32 %v146, %v401
    %v403 = vpop.f32.mrf.mxu0
    %v404 = vadd.f32 %v150, %v403
    %405 = vmatprep.mubr.bf16.mxu0 %v186
    %406 = vmatmul.mubr.bf16.gmra.mxu0 %v185
    %v407 = vpop.f32.mrf.mxu0
    %v408 = vadd.f32 %v146, %v407
    %v409 = vpop.f32.mrf.mxu0
    %v410 = vadd.f32 %v150, %v409
    %v411 = vpop.f32.mrf.mxu0
    %v412 = vadd.f32 %v146, %v411
    %v413 = vpop.f32.mrf.mxu0
    %v414 = vadd.f32 %v150, %v413
    %415 = vmatprep.mubr.bf16.mxu0 %v188
    %416 = vmatmul.mubr.bf16.gmra.mxu0 %v187
    %v417 = vpop.f32.mrf.mxu0
    %v418 = vadd.f32 %v146, %v417
    %v419 = vpop.f32.mrf.mxu0
    %v420 = vadd.f32 %v150, %v419
    %v421 = vpop.f32.mrf.mxu0
    %v422 = vadd.f32 %v146, %v421
    %v423 = vpop.f32.mrf.mxu0
    %v424 = vadd.f32 %v150, %v423
    %425 = vmatprep.mubr.bf16.mxu0 %v190
    %426 = vmatmul.mubr.bf16.gmra.mxu0 %v189
    %v427 = vpop.f32.mrf.mxu0
    %v428 = vadd.f32 %v146, %v427
    %v429 = vpop.f32.mrf.mxu0
    %v430 = vadd.f32 %v150, %v429
    %v431 = vpop.f32.mrf.mxu0
    %v432 = vadd.f32 %v146, %v431
    %v433 = vpop.f32.mrf.mxu0
    %v434 = vadd.f32 %v150, %v433
    %435 = vmatprep.mubr.bf16.mxu0 %v192
    %436 = vmatmul.mubr.bf16.gmra.mxu0 %v191
    %v437 = vpop.f32.mrf.mxu0
    %v438 = vadd.f32 %v146, %v437
    %v439 = vpop.f32.mrf.mxu0
    %v440 = vadd.f32 %v150, %v439
    %v441 = vpop.f32.mrf.mxu0
    %v442 = vadd.f32 %v146, %v441
    %v443 = vpop.f32.mrf.mxu0
    %v444 = vadd.f32 %v150, %v443
    %445 = vdwg.mxu0
    %446 = vst [vmem:[#allocation2] sm:$0xff] %v398
    %447 = vst [vmem:[#allocation2 + $0x8] sm:$0xff] %v400
    %448 = vst [vmem:[#allocation2 + $0x10] sm:$0xff] %v402
    %449 = vst [vmem:[#allocation2 + $0x18] sm:$0xff] %v404
    %450 = vst [vmem:[#allocation2 + $0x20] sm:$0xff] %v408
    %451 = vst [vmem:[#allocation2 + $0x28] sm:$0xff] %v410
    %452 = vst [vmem:[#allocation2 + $0x30] sm:$0xff] %v412
    %453 = vst [vmem:[#allocation2 + $0x38] sm:$0xff] %v414
    %454 = vst [vmem:[#allocation2 + $0x40] sm:$0xff] %v418
    %455 = vst [vmem:[#allocation2 + $0x48] sm:$0xff] %v420
    %456 = vst [vmem:[#allocation2 + $0x50] sm:$0xff] %v422
    %457 = vst [vmem:[#allocation2 + $0x58] sm:$0xff] %v424
    %458 = vst [vmem:[#allocation2 + $0x60] sm:$0xff] %v428
    %459 = vst [vmem:[#allocation2 + $0x68] sm:$0xff] %v430
    %460 = vst [vmem:[#allocation2 + $0x70] sm:$0xff] %v432
    %461 = vst [vmem:[#allocation2 + $0x78] sm:$0xff] %v434
    %462 = vst [vmem:[#allocation2 + $0x80] sm:$0xff] %v438
    %463 = vst [vmem:[#allocation2 + $0x88] sm:$0xff] %v440
    %464 = vst [vmem:[#allocation2 + $0x90] sm:$0xff] %v442
    %465 = vst [vmem:[#allocation2 + $0x98] sm:$0xff] %v444
    %v466 = vld [vmem:[%s5] sm:$0x3]
    %v468 = vlaneseq
    %v469 = vshrl.u32 %v468, 7
    %v470 = vsub.s32 0, %v469
    %v471 = vrot.slane %v466, %v470
    %v472 = vlaneseq
    %v473 = vshrl.u32 %v472, 7
    %v474 = vsub.s32 1, %v473
    %v475 = vrot.slane %v466, %v474
    %v478 = vld [vmem:[#allocation2] sm:$0xff]
    %v479 = vld [vmem:[#allocation2 + $0x8] sm:$0xff]
    %v480 = vld [vmem:[#allocation2 + $0x10] sm:$0xff]
    %v481 = vld [vmem:[#allocation2 + $0x18] sm:$0xff]
    %v482 = vtanh.pop %v478
    %v483 = vtanh.pop %v479
    %v484 = vtanh.pop %v480
    %v485 = vtanh.pop %v481
    %v486 = vpack.c.bf16 %v484, %v482
    %v487 = vpack.c.bf16 %v485, %v483
    %v488 = vld [vmem:[#allocation10] sm:$0xff]
    %v489 = vld [vmem:[#allocation10 + $0x8] sm:$0xff]
    %v490 = vld [vmem:[#allocation10 + $0x10] sm:$0xff]
    %v491 = vld [vmem:[#allocation10 + $0x18] sm:$0xff]
    %v492 = vld [vmem:[#allocation10 + $0x20] sm:$0xff]
    %v493 = vld [vmem:[#allocation10 + $0x28] sm:$0xff]
    %v494 = vld [vmem:[#allocation10 + $0x30] sm:$0xff]
    %v495 = vld [vmem:[#allocation10 + $0x38] sm:$0xff]
    %v496 = vld [vmem:[#allocation10 + $0x40] sm:$0xff]
    %v497 = vld [vmem:[#allocation10 + $0x48] sm:$0xff]
    %v498 = vld [vmem:[#allocation10 + $0x50] sm:$0xff]
    %v499 = vld [vmem:[#allocation10 + $0x58] sm:$0xff]
    %v500 = vld [vmem:[#allocation10 + $0x60] sm:$0xff]
    %v501 = vld [vmem:[#allocation10 + $0x68] sm:$0xff]
    %v502 = vld [vmem:[#allocation10 + $0x70] sm:$0xff]
    %v503 = vld [vmem:[#allocation10 + $0x78] sm:$0xff]
    %v504 = vld [vmem:[#allocation10 + $0x80] sm:$0xff]
    %v505 = vld [vmem:[#allocation10 + $0x88] sm:$0xff]
    %v506 = vld [vmem:[#allocation10 + $0x90] sm:$0xff]
    %v507 = vld [vmem:[#allocation10 + $0x98] sm:$0xff]
    %v508 = vld [vmem:[#allocation10 + $0xa0] sm:$0xff]
    %v509 = vld [vmem:[#allocation10 + $0xa8] sm:$0xff]
    %v510 = vld [vmem:[#allocation10 + $0xb0] sm:$0xff]
    %v511 = vld [vmem:[#allocation10 + $0xb8] sm:$0xff]
    %v512 = vld [vmem:[#allocation10 + $0xc0] sm:$0xff]
    %v513 = vld [vmem:[#allocation10 + $0xc8] sm:$0xff]
    %v514 = vld [vmem:[#allocation10 + $0xd0] sm:$0xff]
    %v515 = vld [vmem:[#allocation10 + $0xd8] sm:$0xff]
    %v516 = vld [vmem:[#allocation10 + $0xe0] sm:$0xff]
    %v517 = vld [vmem:[#allocation10 + $0xe8] sm:$0xff]
    %v518 = vld [vmem:[#allocation10 + $0xf0] sm:$0xff]
    %v519 = vld [vmem:[#allocation10 + $0xf8] sm:$0xff]
    %v552 = vunpack.c.l.b16 %v488
    %v553 = vunpack.c.h.b16 %v488
    %v554 = vunpack.c.l.b16 %v489
    %v555 = vunpack.c.h.b16 %v489
    %v556 = vunpack.c.l.b16 %v490
    %v557 = vunpack.c.h.b16 %v490
    %v558 = vunpack.c.l.b16 %v491
    %v559 = vunpack.c.h.b16 %v491
    %v560 = vunpack.c.l.b16 %v492
    %v561 = vunpack.c.h.b16 %v492
    %v562 = vunpack.c.l.b16 %v493
    %v563 = vunpack.c.h.b16 %v493
    %v564 = vunpack.c.l.b16 %v494
    %v565 = vunpack.c.h.b16 %v494
    %v566 = vunpack.c.l.b16 %v495
    %v567 = vunpack.c.h.b16 %v495
    %v568 = vunpack.c.l.b16 %v496
    %v569 = vunpack.c.h.b16 %v496
    %v570 = vunpack.c.l.b16 %v497
    %v571 = vunpack.c.h.b16 %v497
    %v572 = vunpack.c.l.b16 %v498
    %v573 = vunpack.c.h.b16 %v498
    %v574 = vunpack.c.l.b16 %v499
    %v575 = vunpack.c.h.b16 %v499
    %v576 = vunpack.c.l.b16 %v500
    %v577 = vunpack.c.h.b16 %v500
    %v578 = vunpack.c.l.b16 %v501
    %v579 = vunpack.c.h.b16 %v501
    %v580 = vunpack.c.l.b16 %v502
    %v581 = vunpack.c.h.b16 %v502
    %v582 = vunpack.c.l.b16 %v503
    %v583 = vunpack.c.h.b16 %v503
    %v584 = vunpack.c.l.b16 %v504
    %v585 = vunpack.c.h.b16 %v504
    %v586 = vunpack.c.l.b16 %v505
    %v587 = vunpack.c.h.b16 %v505
    %v588 = vunpack.c.l.b16 %v506
    %v589 = vunpack.c.h.b16 %v506
    %v590 = vunpack.c.l.b16 %v507
    %v591 = vunpack.c.h.b16 %v507
    %v592 = vunpack.c.l.b16 %v508
    %v593 = vunpack.c.h.b16 %v508
    %v594 = vunpack.c.l.b16 %v509
    %v595 = vunpack.c.h.b16 %v509
    %v596 = vunpack.c.l.b16 %v510
    %v597 = vunpack.c.h.b16 %v510
    %v598 = vunpack.c.l.b16 %v511
    %v599 = vunpack.c.h.b16 %v511
    %v600 = vunpack.c.l.b16 %v512
    %v601 = vunpack.c.h.b16 %v512
    %v602 = vunpack.c.l.b16 %v513
    %v603 = vunpack.c.h.b16 %v513
    %v604 = vunpack.c.l.b16 %v514
    %v605 = vunpack.c.h.b16 %v514
    %v606 = vunpack.c.l.b16 %v515
    %v607 = vunpack.c.h.b16 %v515
    %v608 = vunpack.c.l.b16 %v516
    %v609 = vunpack.c.h.b16 %v516
    %v610 = vunpack.c.l.b16 %v517
    %v611 = vunpack.c.h.b16 %v517
    %v612 = vunpack.c.l.b16 %v518
    %v613 = vunpack.c.h.b16 %v518
    %v614 = vunpack.c.l.b16 %v519
    %v615 = vunpack.c.h.b16 %v519
    %v616 = vpack.c.b16 %v554, %v552
    %v617 = vpack.c.b16 %v555, %v553
    %v618 = vpack.c.b16 %v558, %v556
    %v619 = vpack.c.b16 %v559, %v557
    %v620 = vpack.c.b16 %v562, %v560
    %v621 = vpack.c.b16 %v563, %v561
    %v622 = vpack.c.b16 %v566, %v564
    %v623 = vpack.c.b16 %v567, %v565
    %v624 = vpack.c.b16 %v570, %v568
    %v625 = vpack.c.b16 %v571, %v569
    %v626 = vpack.c.b16 %v574, %v572
    %v627 = vpack.c.b16 %v575, %v573
    %v628 = vpack.c.b16 %v578, %v576
    %v629 = vpack.c.b16 %v579, %v577
    %v630 = vpack.c.b16 %v582, %v580
    %v631 = vpack.c.b16 %v583, %v581
    %v632 = vpack.c.b16 %v586, %v584
    %v633 = vpack.c.b16 %v587, %v585
    %v634 = vpack.c.b16 %v590, %v588
    %v635 = vpack.c.b16 %v591, %v589
    %v636 = vpack.c.b16 %v594, %v592
    %v637 = vpack.c.b16 %v595, %v593
    %v638 = vpack.c.b16 %v598, %v596
    %v639 = vpack.c.b16 %v599, %v597
    %v640 = vpack.c.b16 %v602, %v600
    %v641 = vpack.c.b16 %v603, %v601
    %v642 = vpack.c.b16 %v606, %v604
    %v643 = vpack.c.b16 %v607, %v605
    %v644 = vpack.c.b16 %v610, %v608
    %v645 = vpack.c.b16 %v611, %v609
    %v646 = vpack.c.b16 %v614, %v612
    %v647 = vpack.c.b16 %v615, %v613
    %680 = vmatprep.subr.bf16.mxu0 %v631
    %681 = vmatpush1.bf16.msra.mxu0 %v630
    %682 = vmatprep.subr.bf16.mxu0 %v629
    %683 = vmatpush1.bf16.msra.mxu0 %v628
    %684 = vmatprep.subr.bf16.mxu0 %v627
    %685 = vmatpush1.bf16.msra.mxu0 %v626
    %686 = vmatprep.subr.bf16.mxu0 %v625
    %687 = vmatpush1.bf16.msra.mxu0 %v624
    %688 = vmatprep.subr.bf16.mxu0 %v623
    %689 = vmatpush1.bf16.msra.mxu0 %v622
    %690 = vmatprep.subr.bf16.mxu0 %v621
    %691 = vmatpush1.bf16.msra.mxu0 %v620
    %692 = vmatprep.subr.bf16.mxu0 %v619
    %693 = vmatpush1.bf16.msra.mxu0 %v618
    %694 = vmatprep.subr.bf16.mxu0 %v617
    %695 = vmatpush1.bf16.msra.mxu0 %v616
    %696 = vmatprep.subr.bf16.mxu0 %v647
    %697 = vmatpush2.bf16.msra.mxu0 %v646
    %698 = vmatprep.subr.bf16.mxu0 %v645
    %699 = vmatpush2.bf16.msra.mxu0 %v644
    %700 = vmatprep.subr.bf16.mxu0 %v643
    %701 = vmatpush2.bf16.msra.mxu0 %v642
    %702 = vmatprep.subr.bf16.mxu0 %v641
    %703 = vmatpush2.bf16.msra.mxu0 %v640
    %704 = vmatprep.subr.bf16.mxu0 %v639
    %705 = vmatpush2.bf16.msra.mxu0 %v638
    %706 = vmatprep.subr.bf16.mxu0 %v637
    %707 = vmatpush2.bf16.msra.mxu0 %v636
    %708 = vmatprep.subr.bf16.mxu0 %v635
    %709 = vmatpush2.bf16.msra.mxu0 %v634
    %710 = vmatprep.subr.bf16.mxu0 %v633
    %711 = vmatpush2.bf16.msra.mxu0 %v632
    %712 = vmatprep.mubr.bf16.mxu0 %v487
    %713 = vmatmul.mubr.bf16.gmra.mxu0 %v486
    %v714 = vpop.f32.mrf.mxu0
    %v715 = vadd.f32 %v471, %v714
    %v716 = vpop.f32.mrf.mxu0
    %v717 = vadd.f32 %v475, %v716
    %v718 = vpop.f32.mrf.mxu0
    %v719 = vadd.f32 %v471, %v718
    %v720 = vpop.f32.mrf.mxu0
    %v721 = vadd.f32 %v475, %v720
    %722 = vdwg.mxu0
    %v723 = vtanh.pop %v715
    %v724 = vtanh.pop %v717
    %v725 = vtanh.pop %v719
    %v726 = vtanh.pop %v721
    %v727 = vpack.c.bf16 %v725, %v723
    %v728 = vpack.c.bf16 %v726, %v724
    %v729 = vld [vmem:[%s7] sm:$0x1]
    %v731 = vlaneseq
    %v732 = vshrl.u32 %v731, 7
    %v733 = vsub.s32 0, %v732
    %v734 = vrot.slane %v729, %v733
    %v736 = vld [vmem:[#allocation12] sm:$0xf]
    %v737 = vld [vmem:[#allocation12 + $0x4] sm:$0xf]
    %v738 = vld [vmem:[#allocation12 + $0x8] sm:$0xf]
    %v739 = vld [vmem:[#allocation12 + $0xc] sm:$0xf]
    %v740 = vld [vmem:[#allocation12 + $0x10] sm:$0xf]
    %v741 = vld [vmem:[#allocation12 + $0x14] sm:$0xf]
    %v742 = vld [vmem:[#allocation12 + $0x18] sm:$0xf]
    %v743 = vld [vmem:[#allocation12 + $0x1c] sm:$0xf]
    %v744 = vld [vmem:[#allocation12 + $0x20] sm:$0xf]
    %v745 = vld [vmem:[#allocation12 + $0x24] sm:$0xf]
    %v746 = vld [vmem:[#allocation12 + $0x28] sm:$0xf]
    %v747 = vld [vmem:[#allocation12 + $0x2c] sm:$0xf]
    %v748 = vld [vmem:[#allocation12 + $0x30] sm:$0xf]
    %v749 = vld [vmem:[#allocation12 + $0x34] sm:$0xf]
    %v750 = vld [vmem:[#allocation12 + $0x38] sm:$0xf]
    %v751 = vld [vmem:[#allocation12 + $0x3c] sm:$0xf]
    %v752 = vld [vmem:[#allocation12 + $0x40] sm:$0xf]
    %v753 = vld [vmem:[#allocation12 + $0x44] sm:$0xf]
    %v754 = vld [vmem:[#allocation12 + $0x48] sm:$0xf]
    %v755 = vld [vmem:[#allocation12 + $0x4c] sm:$0xf]
    %v756 = vld [vmem:[#allocation12 + $0x50] sm:$0xf]
    %v757 = vld [vmem:[#allocation12 + $0x54] sm:$0xf]
    %v758 = vld [vmem:[#allocation12 + $0x58] sm:$0xf]
    %v759 = vld [vmem:[#allocation12 + $0x5c] sm:$0xf]
    %v760 = vld [vmem:[#allocation12 + $0x60] sm:$0xf]
    %v761 = vld [vmem:[#allocation12 + $0x64] sm:$0xf]
    %v762 = vld [vmem:[#allocation12 + $0x68] sm:$0xf]
    %v763 = vld [vmem:[#allocation12 + $0x6c] sm:$0xf]
    %v764 = vld [vmem:[#allocation12 + $0x70] sm:$0xf]
    %v765 = vld [vmem:[#allocation12 + $0x74] sm:$0xf]
    %v766 = vld [vmem:[#allocation12 + $0x78] sm:$0xf]
    %v767 = vld [vmem:[#allocation12 + $0x7c] sm:$0xf]
    %v800 = vunpack.c.l.b16 %v736
    %v801 = vunpack.c.l.b16 %v737
    %v802 = vunpack.c.l.b16 %v738
    %v803 = vunpack.c.l.b16 %v739
    %v804 = vunpack.c.l.b16 %v740
    %v805 = vunpack.c.l.b16 %v741
    %v806 = vunpack.c.l.b16 %v742
    %v807 = vunpack.c.l.b16 %v743
    %v808 = vunpack.c.l.b16 %v744
    %v809 = vunpack.c.l.b16 %v745
    %v810 = vunpack.c.l.b16 %v746
    %v811 = vunpack.c.l.b16 %v747
    %v812 = vunpack.c.l.b16 %v748
    %v813 = vunpack.c.l.b16 %v749
    %v814 = vunpack.c.l.b16 %v750
    %v815 = vunpack.c.l.b16 %v751
    %v816 = vunpack.c.l.b16 %v752
    %v817 = vunpack.c.l.b16 %v753
    %v818 = vunpack.c.l.b16 %v754
    %v819 = vunpack.c.l.b16 %v755
    %v820 = vunpack.c.l.b16 %v756
    %v821 = vunpack.c.l.b16 %v757
    %v822 = vunpack.c.l.b16 %v758
    %v823 = vunpack.c.l.b16 %v759
    %v824 = vunpack.c.l.b16 %v760
    %v825 = vunpack.c.l.b16 %v761
    %v826 = vunpack.c.l.b16 %v762
    %v827 = vunpack.c.l.b16 %v763
    %v828 = vunpack.c.l.b16 %v764
    %v829 = vunpack.c.l.b16 %v765
    %v830 = vunpack.c.l.b16 %v766
    %v831 = vunpack.c.l.b16 %v767
    %v832 = vpack.c.b16 %v801, %v800
    %v833 = vpack.c.b16 %v803, %v802
    %v834 = vpack.c.b16 %v805, %v804
    %v835 = vpack.c.b16 %v807, %v806
    %v836 = vpack.c.b16 %v809, %v808
    %v837 = vpack.c.b16 %v811, %v810
    %v838 = vpack.c.b16 %v813, %v812
    %v839 = vpack.c.b16 %v815, %v814
    %v840 = vpack.c.b16 %v817, %v816
    %v841 = vpack.c.b16 %v819, %v818
    %v842 = vpack.c.b16 %v821, %v820
    %v843 = vpack.c.b16 %v823, %v822
    %v844 = vpack.c.b16 %v825, %v824
    %v845 = vpack.c.b16 %v827, %v826
    %v846 = vpack.c.b16 %v829, %v828
    %v847 = vpack.c.b16 %v831, %v830
    %864 = vmatprep.subr.bf16.mxu0 0
    %865 = vmatpush1.bf16.msra.mxu0 %v839
    %866 = vmatprep.subr.bf16.mxu0 0
    %867 = vmatpush1.bf16.msra.mxu0 %v838
    %868 = vmatprep.subr.bf16.mxu0 0
    %869 = vmatpush1.bf16.msra.mxu0 %v837
    %870 = vmatprep.subr.bf16.mxu0 0
    %871 = vmatpush1.bf16.msra.mxu0 %v836
    %872 = vmatprep.subr.bf16.mxu0 0
    %873 = vmatpush1.bf16.msra.mxu0 %v835
    %874 = vmatprep.subr.bf16.mxu0 0
    %875 = vmatpush1.bf16.msra.mxu0 %v834
    %876 = vmatprep.subr.bf16.mxu0 0
    %877 = vmatpush1.bf16.msra.mxu0 %v833
    %878 = vmatprep.subr.bf16.mxu0 0
    %879 = vmatpush1.bf16.msra.mxu0 %v832
    %880 = vmatprep.subr.bf16.mxu0 0
    %881 = vmatpush2.bf16.msra.mxu0 %v847
    %882 = vmatprep.subr.bf16.mxu0 0
    %883 = vmatpush2.bf16.msra.mxu0 %v846
    %884 = vmatprep.subr.bf16.mxu0 0
    %885 = vmatpush2.bf16.msra.mxu0 %v845
    %886 = vmatprep.subr.bf16.mxu0 0
    %887 = vmatpush2.bf16.msra.mxu0 %v844
    %888 = vmatprep.subr.bf16.mxu0 0
    %889 = vmatpush2.bf16.msra.mxu0 %v843
    %890 = vmatprep.subr.bf16.mxu0 0
    %891 = vmatpush2.bf16.msra.mxu0 %v842
    %892 = vmatprep.subr.bf16.mxu0 0
    %893 = vmatpush2.bf16.msra.mxu0 %v841
    %894 = vmatprep.subr.bf16.mxu0 0
    %895 = vmatpush2.bf16.msra.mxu0 %v840
    %896 = vmatprep.mubr.bf16.mxu0 %v728
    %897 = vmatmul.mubr.bf16.gmra.mxu0 %v727
    %v898 = vpop.f32.mrf.mxu0
    %v899 = vadd.f32 0.0, %v898
    %v900 = vpop.f32.mrf.mxu0
    %v901 = vpop.f32.mrf.mxu0
    %v902 = vadd.f32 0.0, %v901
    %v903 = vpop.f32.mrf.mxu0
    %904 = vdwg.mxu0
    %v905 = vadd.f32 %v734, %v899
    %v906 = vadd.f32 %v734, %v902
    %v907 = vld [vmem:[#allocation2 + $0x20] sm:$0xff]
    %v908 = vld [vmem:[#allocation2 + $0x28] sm:$0xff]
    %v909 = vld [vmem:[#allocation2 + $0x30] sm:$0xff]
    %v910 = vld [vmem:[#allocation2 + $0x38] sm:$0xff]
    %v911 = vld [vmem:[#allocation9] sm:$0xff]
    %v912 = vld [vmem:[#allocation9 + $0x8] sm:$0xff]
    %v913 = vld [vmem:[#allocation9 + $0x10] sm:$0xff]
    %v914 = vld [vmem:[#allocation9 + $0x18] sm:$0xff]
    %v915 = vld [vmem:[#allocation9 + $0x20] sm:$0xff]
    %v916 = vld [vmem:[#allocation9 + $0x28] sm:$0xff]
    %v917 = vld [vmem:[#allocation9 + $0x30] sm:$0xff]
    %v918 = vld [vmem:[#allocation9 + $0x38] sm:$0xff]
    %v919 = vld [vmem:[#allocation9 + $0x40] sm:$0xff]
    %v920 = vld [vmem:[#allocation9 + $0x48] sm:$0xff]
    %v921 = vld [vmem:[#allocation9 + $0x50] sm:$0xff]
    %v922 = vld [vmem:[#allocation9 + $0x58] sm:$0xff]
    %v923 = vld [vmem:[#allocation9 + $0x60] sm:$0xff]
    %v924 = vld [vmem:[#allocation9 + $0x68] sm:$0xff]
    %v925 = vld [vmem:[#allocation9 + $0x70] sm:$0xff]
    %v926 = vld [vmem:[#allocation9 + $0x78] sm:$0xff]
    %v927 = vld [vmem:[#allocation9 + $0x80] sm:$0xff]
    %v928 = vld [vmem:[#allocation9 + $0x88] sm:$0xff]
    %v929 = vld [vmem:[#allocation9 + $0x90] sm:$0xff]
    %v930 = vld [vmem:[#allocation9 + $0x98] sm:$0xff]
    %v931 = vld [vmem:[#allocation9 + $0xa0] sm:$0xff]
    %v932 = vld [vmem:[#allocation9 + $0xa8] sm:$0xff]
    %v933 = vld [vmem:[#allocation9 + $0xb0] sm:$0xff]
    %v934 = vld [vmem:[#allocation9 + $0xb8] sm:$0xff]
    %v935 = vld [vmem:[#allocation9 + $0xc0] sm:$0xff]
    %v936 = vld [vmem:[#allocation9 + $0xc8] sm:$0xff]
    %v937 = vld [vmem:[#allocation9 + $0xd0] sm:$0xff]
    %v938 = vld [vmem:[#allocation9 + $0xd8] sm:$0xff]
    %v939 = vld [vmem:[#allocation9 + $0xe0] sm:$0xff]
    %v940 = vld [vmem:[#allocation9 + $0xe8] sm:$0xff]
    %v941 = vld [vmem:[#allocation9 + $0xf0] sm:$0xff]
    %v942 = vld [vmem:[#allocation9 + $0xf8] sm:$0xff]
    %v975 = vunpack.c.l.b16 %v911
    %v976 = vunpack.c.h.b16 %v911
    %v977 = vunpack.c.l.b16 %v912
    %v978 = vunpack.c.h.b16 %v912
    %v979 = vunpack.c.l.b16 %v913
    %v980 = vunpack.c.h.b16 %v913
    %v981 = vunpack.c.l.b16 %v914
    %v982 = vunpack.c.h.b16 %v914
    %v983 = vunpack.c.l.b16 %v915
    %v984 = vunpack.c.h.b16 %v915
    %v985 = vunpack.c.l.b16 %v916
    %v986 = vunpack.c.h.b16 %v916
    %v987 = vunpack.c.l.b16 %v917
    %v988 = vunpack.c.h.b16 %v917
    %v989 = vunpack.c.l.b16 %v918
    %v990 = vunpack.c.h.b16 %v918
    %v991 = vunpack.c.l.b16 %v919
    %v992 = vunpack.c.h.b16 %v919
    %v993 = vunpack.c.l.b16 %v920
    %v994 = vunpack.c.h.b16 %v920
    %v995 = vunpack.c.l.b16 %v921
    %v996 = vunpack.c.h.b16 %v921
    %v997 = vunpack.c.l.b16 %v922
    %v998 = vunpack.c.h.b16 %v922
    %v999 = vunpack.c.l.b16 %v923
    %v1000 = vunpack.c.h.b16 %v923
    %v1001 = vunpack.c.l.b16 %v924
    %v1002 = vunpack.c.h.b16 %v924
    %v1003 = vunpack.c.l.b16 %v925
    %v1004 = vunpack.c.h.b16 %v925
    %v1005 = vunpack.c.l.b16 %v926
    %v1006 = vunpack.c.h.b16 %v926
    %v1007 = vunpack.c.l.b16 %v927
    %v1008 = vunpack.c.h.b16 %v927
    %v1009 = vunpack.c.l.b16 %v928
    %v1010 = vunpack.c.h.b16 %v928
    %v1011 = vunpack.c.l.b16 %v929
    %v1012 = vunpack.c.h.b16 %v929
    %v1013 = vunpack.c.l.b16 %v930
    %v1014 = vunpack.c.h.b16 %v930
    %v1015 = vunpack.c.l.b16 %v931
    %v1016 = vunpack.c.h.b16 %v931
    %v1017 = vunpack.c.l.b16 %v932
    %v1018 = vunpack.c.h.b16 %v932
    %v1019 = vunpack.c.l.b16 %v933
    %v1020 = vunpack.c.h.b16 %v933
    %v1021 = vunpack.c.l.b16 %v934
    %v1022 = vunpack.c.h.b16 %v934
    %v1023 = vunpack.c.l.b16 %v935
    %v1024 = vunpack.c.h.b16 %v935
    %v1025 = vunpack.c.l.b16 %v936
    %v1026 = vunpack.c.h.b16 %v936
    %v1027 = vunpack.c.l.b16 %v937
    %v1028 = vunpack.c.h.b16 %v937
    %v1029 = vunpack.c.l.b16 %v938
    %v1030 = vunpack.c.h.b16 %v938
    %v1031 = vunpack.c.l.b16 %v939
    %v1032 = vunpack.c.h.b16 %v939
    %v1033 = vunpack.c.l.b16 %v940
    %v1034 = vunpack.c.h.b16 %v940
    %v1035 = vunpack.c.l.b16 %v941
    %v1036 = vunpack.c.h.b16 %v941
    %v1037 = vunpack.c.l.b16 %v942
    %v1038 = vunpack.c.h.b16 %v942
    %v1039 = vpack.c.b16 %v977, %v975
    %v1040 = vpack.c.b16 %v978, %v976
    %v1041 = vpack.c.b16 %v981, %v979
    %v1042 = vpack.c.b16 %v982, %v980
    %v1043 = vpack.c.b16 %v985, %v983
    %v1044 = vpack.c.b16 %v986, %v984
    %v1045 = vpack.c.b16 %v989, %v987
    %v1046 = vpack.c.b16 %v990, %v988
    %v1047 = vpack.c.b16 %v993, %v991
    %v1048 = vpack.c.b16 %v994, %v992
    %v1049 = vpack.c.b16 %v997, %v995
    %v1050 = vpack.c.b16 %v998, %v996
    %v1051 = vpack.c.b16 %v1001, %v999
    %v1052 = vpack.c.b16 %v1002, %v1000
    %v1053 = vpack.c.b16 %v1005, %v1003
    %v1054 = vpack.c.b16 %v1006, %v1004
    %v1055 = vpack.c.b16 %v1009, %v1007
    %v1056 = vpack.c.b16 %v1010, %v1008
    %v1057 = vpack.c.b16 %v1013, %v1011
    %v1058 = vpack.c.b16 %v1014, %v1012
    %v1059 = vpack.c.b16 %v1017, %v1015
    %v1060 = vpack.c.b16 %v1018, %v1016
    %v1061 = vpack.c.b16 %v1021, %v1019
    %v1062 = vpack.c.b16 %v1022, %v1020
    %v1063 = vpack.c.b16 %v1025, %v1023
    %v1064 = vpack.c.b16 %v1026, %v1024
    %v1065 = vpack.c.b16 %v1029, %v1027
    %v1066 = vpack.c.b16 %v1030, %v1028
    %v1067 = vpack.c.b16 %v1033, %v1031
    %v1068 = vpack.c.b16 %v1034, %v1032
    %v1069 = vpack.c.b16 %v1037, %v1035
    %v1070 = vpack.c.b16 %v1038, %v1036
    %1103 = vmatprep.subr.bf16.mxu0 %v1054
    %1104 = vmatpush1.bf16.msra.mxu0 %v1053
    %1105 = vmatprep.subr.bf16.mxu0 %v1052
    %1106 = vmatpush1.bf16.msra.mxu0 %v1051
    %1107 = vmatprep.subr.bf16.mxu0 %v1050
    %1108 = vmatpush1.bf16.msra.mxu0 %v1049
    %1109 = vmatprep.subr.bf16.mxu0 %v1048
    %1110 = vmatpush1.bf16.msra.mxu0 %v1047
    %1111 = vmatprep.subr.bf16.mxu0 %v1046
    %1112 = vmatpush1.bf16.msra.mxu0 %v1045
    %1113 = vmatprep.subr.bf16.mxu0 %v1044
    %1114 = vmatpush1.bf16.msra.mxu0 %v1043
    %1115 = vmatprep.subr.bf16.mxu0 %v1042
    %1116 = vmatpush1.bf16.msra.mxu0 %v1041
    %1117 = vmatprep.subr.bf16.mxu0 %v1040
    %1118 = vmatpush1.bf16.msra.mxu0 %v1039
    %1119 = vmatprep.subr.bf16.mxu0 %v1070
    %1120 = vmatpush2.bf16.msra.mxu0 %v1069
    %1121 = vmatprep.subr.bf16.mxu0 %v1068
    %1122 = vmatpush2.bf16.msra.mxu0 %v1067
    %1123 = vmatprep.subr.bf16.mxu0 %v1066
    %1124 = vmatpush2.bf16.msra.mxu0 %v1065
    %1125 = vmatprep.subr.bf16.mxu0 %v1064
    %1126 = vmatpush2.bf16.msra.mxu0 %v1063
    %1127 = vmatprep.subr.bf16.mxu0 %v1062
    %1128 = vmatpush2.bf16.msra.mxu0 %v1061
    %1129 = vmatprep.subr.bf16.mxu0 %v1060
    %1130 = vmatpush2.bf16.msra.mxu0 %v1059
    %1131 = vmatprep.subr.bf16.mxu0 %v1058
    %1132 = vmatpush2.bf16.msra.mxu0 %v1057
    %1133 = vmatprep.subr.bf16.mxu0 %v1056
    %1134 = vmatpush2.bf16.msra.mxu0 %v1055
    %1135 = vmatprep.mubr.bf16.mxu0 %v487
    %1136 = vmatmul.mubr.bf16.gmra.mxu0 %v486
    %v1137 = vpop.f32.mrf.mxu0
    %v1138 = vadd.f32 0.0, %v1137
    %v1139 = vpop.f32.mrf.mxu0
    %v1140 = vadd.f32 0.0, %v1139
    %v1141 = vpop.f32.mrf.mxu0
    %v1142 = vadd.f32 0.0, %v1141
    %v1143 = vpop.f32.mrf.mxu0
    %v1144 = vadd.f32 0.0, %v1143
    %1145 = vdwg.mxu0
    %v1146 = vadd.f32 %v907, %v1138
    %v1147 = vadd.f32 %v908, %v1140
    %v1148 = vadd.f32 %v909, %v1142
    %v1149 = vadd.f32 %v910, %v1144
    %v1150 = vtanh.pop %v1146
    %v1151 = vtanh.pop %v1147
    %v1152 = vtanh.pop %v1148
    %v1153 = vtanh.pop %v1149
    %v1154 = vpack.c.bf16 %v1152, %v1150
    %v1155 = vpack.c.bf16 %v1153, %v1151
    %v1158 = vunpack.c.l.b16 %v1154
    %v1159 = vunpack.c.l.b16 %v1155
    %v1160 = vunpack.c.h.b16 %v1154
    %v1161 = vunpack.c.h.b16 %v1155
    %v1162 = vpack.c.b16 %v1159, %v1158
    %v1163 = vpack.c.b16 %v1161, %v1160
    %1166 = vst [vmem:[#allocation3] sm:$0xff] %v1162
    %1167 = vst [vmem:[#allocation3 + $0x10] sm:$0xff] %v1163
    %v1170 = vunpack.c.l.b16 %v727
    %v1171 = vunpack.c.l.b16 %v728
    %v1172 = vunpack.c.h.b16 %v727
    %v1173 = vunpack.c.h.b16 %v728
    %v1174 = vpack.c.b16 %v1171, %v1170
    %v1175 = vpack.c.b16 %v1173, %v1172
    %1178 = vst [vmem:[#allocation3 + $0x8] sm:$0xff] %v1174
    %1179 = vst [vmem:[#allocation3 + $0x18] sm:$0xff] %v1175
    %v1180 = vld [vmem:[#allocation3] sm:$0xff]
    %v1181 = vld [vmem:[#allocation3 + $0x8] sm:$0xff]
    %v1182 = vld [vmem:[#allocation3 + $0x10] sm:$0xff]
    %v1183 = vld [vmem:[#allocation3 + $0x18] sm:$0xff]
    %v1184 = vld [vmem:[#allocation10] sm:$0xff]
    %v1185 = vld [vmem:[#allocation10 + $0x8] sm:$0xff]
    %v1186 = vld [vmem:[#allocation10 + $0x10] sm:$0xff]
    %v1187 = vld [vmem:[#allocation10 + $0x18] sm:$0xff]
    %v1188 = vld [vmem:[#allocation10 + $0x20] sm:$0xff]
    %v1189 = vld [vmem:[#allocation10 + $0x28] sm:$0xff]
    %v1190 = vld [vmem:[#allocation10 + $0x30] sm:$0xff]
    %v1191 = vld [vmem:[#allocation10 + $0x38] sm:$0xff]
    %v1192 = vld [vmem:[#allocation10 + $0x40] sm:$0xff]
    %v1193 = vld [vmem:[#allocation10 + $0x48] sm:$0xff]
    %v1194 = vld [vmem:[#allocation10 + $0x50] sm:$0xff]
    %v1195 = vld [vmem:[#allocation10 + $0x58] sm:$0xff]
    %v1196 = vld [vmem:[#allocation10 + $0x60] sm:$0xff]
    %v1197 = vld [vmem:[#allocation10 + $0x68] sm:$0xff]
    %v1198 = vld [vmem:[#allocation10 + $0x70] sm:$0xff]
    %v1199 = vld [vmem:[#allocation10 + $0x78] sm:$0xff]
    %v1200 = vld [vmem:[#allocation10 + $0x80] sm:$0xff]
    %v1201 = vld [vmem:[#allocation10 + $0x88] sm:$0xff]
    %v1202 = vld [vmem:[#allocation10 + $0x90] sm:$0xff]
    %v1203 = vld [vmem:[#allocation10 + $0x98] sm:$0xff]
    %v1204 = vld [vmem:[#allocation10 + $0xa0] sm:$0xff]
    %v1205 = vld [vmem:[#allocation10 + $0xa8] sm:$0xff]
    %v1206 = vld [vmem:[#allocation10 + $0xb0] sm:$0xff]
    %v1207 = vld [vmem:[#allocation10 + $0xb8] sm:$0xff]
    %v1208 = vld [vmem:[#allocation10 + $0xc0] sm:$0xff]
    %v1209 = vld [vmem:[#allocation10 + $0xc8] sm:$0xff]
    %v1210 = vld [vmem:[#allocation10 + $0xd0] sm:$0xff]
    %v1211 = vld [vmem:[#allocation10 + $0xd8] sm:$0xff]
    %v1212 = vld [vmem:[#allocation10 + $0xe0] sm:$0xff]
    %v1213 = vld [vmem:[#allocation10 + $0xe8] sm:$0xff]
    %v1214 = vld [vmem:[#allocation10 + $0xf0] sm:$0xff]
    %v1215 = vld [vmem:[#allocation10 + $0xf8] sm:$0xff]
    %v1216 = vld [vmem:[#allocation10 + $0x100] sm:$0xff]
    %v1217 = vld [vmem:[#allocation10 + $0x108] sm:$0xff]
    %v1218 = vld [vmem:[#allocation10 + $0x110] sm:$0xff]
    %v1219 = vld [vmem:[#allocation10 + $0x118] sm:$0xff]
    %v1220 = vld [vmem:[#allocation10 + $0x120] sm:$0xff]
    %v1221 = vld [vmem:[#allocation10 + $0x128] sm:$0xff]
    %v1222 = vld [vmem:[#allocation10 + $0x130] sm:$0xff]
    %v1223 = vld [vmem:[#allocation10 + $0x138] sm:$0xff]
    %v1224 = vld [vmem:[#allocation10 + $0x140] sm:$0xff]
    %v1225 = vld [vmem:[#allocation10 + $0x148] sm:$0xff]
    %v1226 = vld [vmem:[#allocation10 + $0x150] sm:$0xff]
    %v1227 = vld [vmem:[#allocation10 + $0x158] sm:$0xff]
    %v1228 = vld [vmem:[#allocation10 + $0x160] sm:$0xff]
    %v1229 = vld [vmem:[#allocation10 + $0x168] sm:$0xff]
    %v1230 = vld [vmem:[#allocation10 + $0x170] sm:$0xff]
    %v1231 = vld [vmem:[#allocation10 + $0x178] sm:$0xff]
    %v1232 = vld [vmem:[#allocation10 + $0x180] sm:$0xff]
    %v1233 = vld [vmem:[#allocation10 + $0x188] sm:$0xff]
    %v1234 = vld [vmem:[#allocation10 + $0x190] sm:$0xff]
    %v1235 = vld [vmem:[#allocation10 + $0x198] sm:$0xff]
    %v1236 = vld [vmem:[#allocation10 + $0x1a0] sm:$0xff]
    %v1237 = vld [vmem:[#allocation10 + $0x1a8] sm:$0xff]
    %v1238 = vld [vmem:[#allocation10 + $0x1b0] sm:$0xff]
    %v1239 = vld [vmem:[#allocation10 + $0x1b8] sm:$0xff]
    %v1240 = vld [vmem:[#allocation10 + $0x1c0] sm:$0xff]
    %v1241 = vld [vmem:[#allocation10 + $0x1c8] sm:$0xff]
    %v1242 = vld [vmem:[#allocation10 + $0x1d0] sm:$0xff]
    %v1243 = vld [vmem:[#allocation10 + $0x1d8] sm:$0xff]
    %v1244 = vld [vmem:[#allocation10 + $0x1e0] sm:$0xff]
    %v1245 = vld [vmem:[#allocation10 + $0x1e8] sm:$0xff]
    %v1246 = vld [vmem:[#allocation10 + $0x1f0] sm:$0xff]
    %v1247 = vld [vmem:[#allocation10 + $0x1f8] sm:$0xff]
    %v1252 = vunpack.c.l.b16 %v1180
    %v1253 = vunpack.c.h.b16 %v1180
    %v1254 = vunpack.c.l.b16 %v1181
    %v1255 = vunpack.c.h.b16 %v1181
    %v1256 = vunpack.c.l.b16 %v1182
    %v1257 = vunpack.c.h.b16 %v1182
    %v1258 = vunpack.c.l.b16 %v1183
    %v1259 = vunpack.c.h.b16 %v1183
    %v1260 = vpack.c.b16 %v1256, %v1252
    %v1261 = vpack.c.b16 %v1257, %v1253
    %v1262 = vpack.c.b16 %v1258, %v1254
    %v1263 = vpack.c.b16 %v1259, %v1255
    %v1332 = vunpack.c.l.b16 %v1184
    %v1333 = vunpack.c.h.b16 %v1184
    %v1334 = vunpack.c.l.b16 %v1185
    %v1335 = vunpack.c.h.b16 %v1185
    %v1336 = vunpack.c.l.b16 %v1186
    %v1337 = vunpack.c.h.b16 %v1186
    %v1338 = vunpack.c.l.b16 %v1187
    %v1339 = vunpack.c.h.b16 %v1187
    %v1340 = vunpack.c.l.b16 %v1188
    %v1341 = vunpack.c.h.b16 %v1188
    %v1342 = vunpack.c.l.b16 %v1189
    %v1343 = vunpack.c.h.b16 %v1189
    %v1344 = vunpack.c.l.b16 %v1190
    %v1345 = vunpack.c.h.b16 %v1190
    %v1346 = vunpack.c.l.b16 %v1191
    %v1347 = vunpack.c.h.b16 %v1191
    %v1348 = vunpack.c.l.b16 %v1192
    %v1349 = vunpack.c.h.b16 %v1192
    %v1350 = vunpack.c.l.b16 %v1193
    %v1351 = vunpack.c.h.b16 %v1193
    %v1352 = vunpack.c.l.b16 %v1194
    %v1353 = vunpack.c.h.b16 %v1194
    %v1354 = vunpack.c.l.b16 %v1195
    %v1355 = vunpack.c.h.b16 %v1195
    %v1356 = vunpack.c.l.b16 %v1196
    %v1357 = vunpack.c.h.b16 %v1196
    %v1358 = vunpack.c.l.b16 %v1197
    %v1359 = vunpack.c.h.b16 %v1197
    %v1360 = vunpack.c.l.b16 %v1198
    %v1361 = vunpack.c.h.b16 %v1198
    %v1362 = vunpack.c.l.b16 %v1199
    %v1363 = vunpack.c.h.b16 %v1199
    %v1364 = vunpack.c.l.b16 %v1200
    %v1365 = vunpack.c.h.b16 %v1200
    %v1366 = vunpack.c.l.b16 %v1201
    %v1367 = vunpack.c.h.b16 %v1201
    %v1368 = vunpack.c.l.b16 %v1202
    %v1369 = vunpack.c.h.b16 %v1202
    %v1370 = vunpack.c.l.b16 %v1203
    %v1371 = vunpack.c.h.b16 %v1203
    %v1372 = vunpack.c.l.b16 %v1204
    %v1373 = vunpack.c.h.b16 %v1204
    %v1374 = vunpack.c.l.b16 %v1205
    %v1375 = vunpack.c.h.b16 %v1205
    %v1376 = vunpack.c.l.b16 %v1206
    %v1377 = vunpack.c.h.b16 %v1206
    %v1378 = vunpack.c.l.b16 %v1207
    %v1379 = vunpack.c.h.b16 %v1207
    %v1380 = vunpack.c.l.b16 %v1208
    %v1381 = vunpack.c.h.b16 %v1208
    %v1382 = vunpack.c.l.b16 %v1209
    %v1383 = vunpack.c.h.b16 %v1209
    %v1384 = vunpack.c.l.b16 %v1210
    %v1385 = vunpack.c.h.b16 %v1210
    %v1386 = vunpack.c.l.b16 %v1211
    %v1387 = vunpack.c.h.b16 %v1211
    %v1388 = vunpack.c.l.b16 %v1212
    %v1389 = vunpack.c.h.b16 %v1212
    %v1390 = vunpack.c.l.b16 %v1213
    %v1391 = vunpack.c.h.b16 %v1213
    %v1392 = vunpack.c.l.b16 %v1214
    %v1393 = vunpack.c.h.b16 %v1214
    %v1394 = vunpack.c.l.b16 %v1215
    %v1395 = vunpack.c.h.b16 %v1215
    %v1396 = vunpack.c.l.b16 %v1216
    %v1397 = vunpack.c.h.b16 %v1216
    %v1398 = vunpack.c.l.b16 %v1217
    %v1399 = vunpack.c.h.b16 %v1217
    %v1400 = vunpack.c.l.b16 %v1218
    %v1401 = vunpack.c.h.b16 %v1218
    %v1402 = vunpack.c.l.b16 %v1219
    %v1403 = vunpack.c.h.b16 %v1219
    %v1404 = vunpack.c.l.b16 %v1220
    %v1405 = vunpack.c.h.b16 %v1220
    %v1406 = vunpack.c.l.b16 %v1221
    %v1407 = vunpack.c.h.b16 %v1221
    %v1408 = vunpack.c.l.b16 %v1222
    %v1409 = vunpack.c.h.b16 %v1222
    %v1410 = vunpack.c.l.b16 %v1223
    %v1411 = vunpack.c.h.b16 %v1223
    %v1412 = vunpack.c.l.b16 %v1224
    %v1413 = vunpack.c.h.b16 %v1224
    %v1414 = vunpack.c.l.b16 %v1225
    %v1415 = vunpack.c.h.b16 %v1225
    %v1416 = vunpack.c.l.b16 %v1226
    %v1417 = vunpack.c.h.b16 %v1226
    %v1418 = vunpack.c.l.b16 %v1227
    %v1419 = vunpack.c.h.b16 %v1227
    %v1420 = vunpack.c.l.b16 %v1228
    %v1421 = vunpack.c.h.b16 %v1228
    %v1422 = vunpack.c.l.b16 %v1229
    %v1423 = vunpack.c.h.b16 %v1229
    %v1424 = vunpack.c.l.b16 %v1230
    %v1425 = vunpack.c.h.b16 %v1230
    %v1426 = vunpack.c.l.b16 %v1231
    %v1427 = vunpack.c.h.b16 %v1231
    %v1428 = vunpack.c.l.b16 %v1232
    %v1429 = vunpack.c.h.b16 %v1232
    %v1430 = vunpack.c.l.b16 %v1233
    %v1431 = vunpack.c.h.b16 %v1233
    %v1432 = vunpack.c.l.b16 %v1234
    %v1433 = vunpack.c.h.b16 %v1234
    %v1434 = vunpack.c.l.b16 %v1235
    %v1435 = vunpack.c.h.b16 %v1235
    %v1436 = vunpack.c.l.b16 %v1236
    %v1437 = vunpack.c.h.b16 %v1236
    %v1438 = vunpack.c.l.b16 %v1237
    %v1439 = vunpack.c.h.b16 %v1237
    %v1440 = vunpack.c.l.b16 %v1238
    %v1441 = vunpack.c.h.b16 %v1238
    %v1442 = vunpack.c.l.b16 %v1239
    %v1443 = vunpack.c.h.b16 %v1239
    %v1444 = vunpack.c.l.b16 %v1240
    %v1445 = vunpack.c.h.b16 %v1240
    %v1446 = vunpack.c.l.b16 %v1241
    %v1447 = vunpack.c.h.b16 %v1241
    %v1448 = vunpack.c.l.b16 %v1242
    %v1449 = vunpack.c.h.b16 %v1242
    %v1450 = vunpack.c.l.b16 %v1243
    %v1451 = vunpack.c.h.b16 %v1243
    %v1452 = vunpack.c.l.b16 %v1244
    %v1453 = vunpack.c.h.b16 %v1244
    %v1454 = vunpack.c.l.b16 %v1245
    %v1455 = vunpack.c.h.b16 %v1245
    %v1456 = vunpack.c.l.b16 %v1246
    %v1457 = vunpack.c.h.b16 %v1246
    %v1458 = vunpack.c.l.b16 %v1247
    %v1459 = vunpack.c.h.b16 %v1247
    %v1460 = vpack.c.b16 %v1334, %v1332
    %v1461 = vpack.c.b16 %v1335, %v1333
    %v1462 = vpack.c.b16 %v1338, %v1336
    %v1463 = vpack.c.b16 %v1339, %v1337
    %v1464 = vpack.c.b16 %v1342, %v1340
    %v1465 = vpack.c.b16 %v1343, %v1341
    %v1466 = vpack.c.b16 %v1346, %v1344
    %v1467 = vpack.c.b16 %v1347, %v1345
    %v1468 = vpack.c.b16 %v1350, %v1348
    %v1469 = vpack.c.b16 %v1351, %v1349
    %v1470 = vpack.c.b16 %v1354, %v1352
    %v1471 = vpack.c.b16 %v1355, %v1353
    %v1472 = vpack.c.b16 %v1358, %v1356
    %v1473 = vpack.c.b16 %v1359, %v1357
    %v1474 = vpack.c.b16 %v1362, %v1360
    %v1475 = vpack.c.b16 %v1363, %v1361
    %v1476 = vpack.c.b16 %v1366, %v1364
    %v1477 = vpack.c.b16 %v1367, %v1365
    %v1478 = vpack.c.b16 %v1370, %v1368
    %v1479 = vpack.c.b16 %v1371, %v1369
    %v1480 = vpack.c.b16 %v1374, %v1372
    %v1481 = vpack.c.b16 %v1375, %v1373
    %v1482 = vpack.c.b16 %v1378, %v1376
    %v1483 = vpack.c.b16 %v1379, %v1377
    %v1484 = vpack.c.b16 %v1382, %v1380
    %v1485 = vpack.c.b16 %v1383, %v1381
    %v1486 = vpack.c.b16 %v1386, %v1384
    %v1487 = vpack.c.b16 %v1387, %v1385
    %v1488 = vpack.c.b16 %v1390, %v1388
    %v1489 = vpack.c.b16 %v1391, %v1389
    %v1490 = vpack.c.b16 %v1394, %v1392
    %v1491 = vpack.c.b16 %v1395, %v1393
    %v1492 = vpack.c.b16 %v1398, %v1396
    %v1493 = vpack.c.b16 %v1399, %v1397
    %v1494 = vpack.c.b16 %v1402, %v1400
    %v1495 = vpack.c.b16 %v1403, %v1401
    %v1496 = vpack.c.b16 %v1406, %v1404
    %v1497 = vpack.c.b16 %v1407, %v1405
    %v1498 = vpack.c.b16 %v1410, %v1408
    %v1499 = vpack.c.b16 %v1411, %v1409
    %v1500 = vpack.c.b16 %v1414, %v1412
    %v1501 = vpack.c.b16 %v1415, %v1413
    %v1502 = vpack.c.b16 %v1418, %v1416
    %v1503 = vpack.c.b16 %v1419, %v1417
    %v1504 = vpack.c.b16 %v1422, %v1420
    %v1505 = vpack.c.b16 %v1423, %v1421
    %v1506 = vpack.c.b16 %v1426, %v1424
    %v1507 = vpack.c.b16 %v1427, %v1425
    %v1508 = vpack.c.b16 %v1430, %v1428
    %v1509 = vpack.c.b16 %v1431, %v1429
    %v1510 = vpack.c.b16 %v1434, %v1432
    %v1511 = vpack.c.b16 %v1435, %v1433
    %v1512 = vpack.c.b16 %v1438, %v1436
    %v1513 = vpack.c.b16 %v1439, %v1437
    %v1514 = vpack.c.b16 %v1442, %v1440
    %v1515 = vpack.c.b16 %v1443, %v1441
    %v1516 = vpack.c.b16 %v1446, %v1444
    %v1517 = vpack.c.b16 %v1447, %v1445
    %v1518 = vpack.c.b16 %v1450, %v1448
    %v1519 = vpack.c.b16 %v1451, %v1449
    %v1520 = vpack.c.b16 %v1454, %v1452
    %v1521 = vpack.c.b16 %v1455, %v1453
    %v1522 = vpack.c.b16 %v1458, %v1456
    %v1523 = vpack.c.b16 %v1459, %v1457
    %1588 = vmatprep.subr.bf16.mxu0 %v1475
    %1589 = vmatpush1.bf16.msra.mxu0 %v1474
    %1590 = vmatprep.subr.bf16.mxu0 %v1473
    %1591 = vmatpush1.bf16.msra.mxu0 %v1472
    %1592 = vmatprep.subr.bf16.mxu0 %v1471
    %1593 = vmatpush1.bf16.msra.mxu0 %v1470
    %1594 = vmatprep.subr.bf16.mxu0 %v1469
    %1595 = vmatpush1.bf16.msra.mxu0 %v1468
    %1596 = vmatprep.subr.bf16.mxu0 %v1467
    %1597 = vmatpush1.bf16.msra.mxu0 %v1466
    %1598 = vmatprep.subr.bf16.mxu0 %v1465
    %1599 = vmatpush1.bf16.msra.mxu0 %v1464
    %1600 = vmatprep.subr.bf16.mxu0 %v1463
    %1601 = vmatpush1.bf16.msra.mxu0 %v1462
    %1602 = vmatprep.subr.bf16.mxu0 %v1461
    %1603 = vmatpush1.bf16.msra.mxu0 %v1460
    %1604 = vmatprep.subr.bf16.mxu0 %v1491
    %1605 = vmatpush2.bf16.msra.mxu0 %v1490
    %1606 = vmatprep.subr.bf16.mxu0 %v1489
    %1607 = vmatpush2.bf16.msra.mxu0 %v1488
    %1608 = vmatprep.subr.bf16.mxu0 %v1487
    %1609 = vmatpush2.bf16.msra.mxu0 %v1486
    %1610 = vmatprep.subr.bf16.mxu0 %v1485
    %1611 = vmatpush2.bf16.msra.mxu0 %v1484
    %1612 = vmatprep.subr.bf16.mxu0 %v1483
    %1613 = vmatpush2.bf16.msra.mxu0 %v1482
    %1614 = vmatprep.subr.bf16.mxu0 %v1481
    %1615 = vmatpush2.bf16.msra.mxu0 %v1480
    %1616 = vmatprep.subr.bf16.mxu0 %v1479
    %1617 = vmatpush2.bf16.msra.mxu0 %v1478
    %1618 = vmatprep.subr.bf16.mxu0 %v1477
    %1619 = vmatpush2.bf16.msra.mxu0 %v1476
    %1620 = vmatprep.mubr.bf16.mxu0 %v1261
    %1621 = vmatmul.mubr.bf16.gmra.mxu0 %v1260
    %v1622 = vpop.f32.mrf.mxu0
    %v1623 = vadd.f32 %v471, %v1622
    %v1624 = vpop.f32.mrf.mxu0
    %v1625 = vadd.f32 %v475, %v1624
    %v1626 = vpop.f32.mrf.mxu0
    %v1627 = vadd.f32 %v471, %v1626
    %v1628 = vpop.f32.mrf.mxu0
    %v1629 = vadd.f32 %v475, %v1628
    %1630 = vdwg.mxu0
    %1631 = vmatprep.subr.bf16.mxu0 %v1507
    %1632 = vmatpush1.bf16.msra.mxu0 %v1506
    %1633 = vmatprep.subr.bf16.mxu0 %v1505
    %1634 = vmatpush1.bf16.msra.mxu0 %v1504
    %1635 = vmatprep.subr.bf16.mxu0 %v1503
    %1636 = vmatpush1.bf16.msra.mxu0 %v1502
    %1637 = vmatprep.subr.bf16.mxu0 %v1501
    %1638 = vmatpush1.bf16.msra.mxu0 %v1500
    %1639 = vmatprep.subr.bf16.mxu0 %v1499
    %1640 = vmatpush1.bf16.msra.mxu0 %v1498
    %1641 = vmatprep.subr.bf16.mxu0 %v1497
    %1642 = vmatpush1.bf16.msra.mxu0 %v1496
    %1643 = vmatprep.subr.bf16.mxu0 %v1495
    %1644 = vmatpush1.bf16.msra.mxu0 %v1494
    %1645 = vmatprep.subr.bf16.mxu0 %v1493
    %1646 = vmatpush1.bf16.msra.mxu0 %v1492
    %1647 = vmatprep.subr.bf16.mxu0 %v1523
    %1648 = vmatpush2.bf16.msra.mxu0 %v1522
    %1649 = vmatprep.subr.bf16.mxu0 %v1521
    %1650 = vmatpush2.bf16.msra.mxu0 %v1520
    %1651 = vmatprep.subr.bf16.mxu0 %v1519
    %1652 = vmatpush2.bf16.msra.mxu0 %v1518
    %1653 = vmatprep.subr.bf16.mxu0 %v1517
    %1654 = vmatpush2.bf16.msra.mxu0 %v1516
    %1655 = vmatprep.subr.bf16.mxu0 %v1515
    %1656 = vmatpush2.bf16.msra.mxu0 %v1514
    %1657 = vmatprep.subr.bf16.mxu0 %v1513
    %1658 = vmatpush2.bf16.msra.mxu0 %v1512
    %1659 = vmatprep.subr.bf16.mxu0 %v1511
    %1660 = vmatpush2.bf16.msra.mxu0 %v1510
    %1661 = vmatprep.subr.bf16.mxu0 %v1509
    %1662 = vmatpush2.bf16.msra.mxu0 %v1508
    %1663 = vmatprep.mubr.bf16.mxu0 %v1263
    %1664 = vmatmul.mubr.bf16.gmra.mxu0 %v1262
    %v1665 = vpop.f32.mrf.mxu0
    %v1666 = vadd.f32 %v1623, %v1665
    %v1667 = vpop.f32.mrf.mxu0
    %v1668 = vadd.f32 %v1625, %v1667
    %v1669 = vpop.f32.mrf.mxu0
    %v1670 = vadd.f32 %v1627, %v1669
    %v1671 = vpop.f32.mrf.mxu0
    %v1672 = vadd.f32 %v1629, %v1671
    %1673 = vdwg.mxu0
    %v1674 = vtanh.pop %v1666
    %v1675 = vtanh.pop %v1668
    %v1676 = vtanh.pop %v1670
    %v1677 = vtanh.pop %v1672
    %v1678 = vpack.c.bf16 %v1676, %v1674
    %v1679 = vpack.c.bf16 %v1677, %v1675
    %v1680 = vld [vmem:[#allocation12 + $0x80] sm:$0xf]
    %v1681 = vld [vmem:[#allocation12 + $0x84] sm:$0xf]
    %v1682 = vld [vmem:[#allocation12 + $0x88] sm:$0xf]
    %v1683 = vld [vmem:[#allocation12 + $0x8c] sm:$0xf]
    %v1684 = vld [vmem:[#allocation12 + $0x90] sm:$0xf]
    %v1685 = vld [vmem:[#allocation12 + $0x94] sm:$0xf]
    %v1686 = vld [vmem:[#allocation12 + $0x98] sm:$0xf]
    %v1687 = vld [vmem:[#allocation12 + $0x9c] sm:$0xf]
    %v1688 = vld [vmem:[#allocation12 + $0xa0] sm:$0xf]
    %v1689 = vld [vmem:[#allocation12 + $0xa4] sm:$0xf]
    %v1690 = vld [vmem:[#allocation12 + $0xa8] sm:$0xf]
    %v1691 = vld [vmem:[#allocation12 + $0xac] sm:$0xf]
    %v1692 = vld [vmem:[#allocation12 + $0xb0] sm:$0xf]
    %v1693 = vld [vmem:[#allocation12 + $0xb4] sm:$0xf]
    %v1694 = vld [vmem:[#allocation12 + $0xb8] sm:$0xf]
    %v1695 = vld [vmem:[#allocation12 + $0xbc] sm:$0xf]
    %v1696 = vld [vmem:[#allocation12 + $0xc0] sm:$0xf]
    %v1697 = vld [vmem:[#allocation12 + $0xc4] sm:$0xf]
    %v1698 = vld [vmem:[#allocation12 + $0xc8] sm:$0xf]
    %v1699 = vld [vmem:[#allocation12 + $0xcc] sm:$0xf]
    %v1700 = vld [vmem:[#allocation12 + $0xd0] sm:$0xf]
    %v1701 = vld [vmem:[#allocation12 + $0xd4] sm:$0xf]
    %v1702 = vld [vmem:[#allocation12 + $0xd8] sm:$0xf]
    %v1703 = vld [vmem:[#allocation12 + $0xdc] sm:$0xf]
    %v1704 = vld [vmem:[#allocation12 + $0xe0] sm:$0xf]
    %v1705 = vld [vmem:[#allocation12 + $0xe4] sm:$0xf]
    %v1706 = vld [vmem:[#allocation12 + $0xe8] sm:$0xf]
    %v1707 = vld [vmem:[#allocation12 + $0xec] sm:$0xf]
    %v1708 = vld [vmem:[#allocation12 + $0xf0] sm:$0xf]
    %v1709 = vld [vmem:[#allocation12 + $0xf4] sm:$0xf]
    %v1710 = vld [vmem:[#allocation12 + $0xf8] sm:$0xf]
    %v1711 = vld [vmem:[#allocation12 + $0xfc] sm:$0xf]
    %v1744 = vunpack.c.l.b16 %v1680
    %v1745 = vunpack.c.l.b16 %v1681
    %v1746 = vunpack.c.l.b16 %v1682
    %v1747 = vunpack.c.l.b16 %v1683
    %v1748 = vunpack.c.l.b16 %v1684
    %v1749 = vunpack.c.l.b16 %v1685
    %v1750 = vunpack.c.l.b16 %v1686
    %v1751 = vunpack.c.l.b16 %v1687
    %v1752 = vunpack.c.l.b16 %v1688
    %v1753 = vunpack.c.l.b16 %v1689
    %v1754 = vunpack.c.l.b16 %v1690
    %v1755 = vunpack.c.l.b16 %v1691
    %v1756 = vunpack.c.l.b16 %v1692
    %v1757 = vunpack.c.l.b16 %v1693
    %v1758 = vunpack.c.l.b16 %v1694
    %v1759 = vunpack.c.l.b16 %v1695
    %v1760 = vunpack.c.l.b16 %v1696
    %v1761 = vunpack.c.l.b16 %v1697
    %v1762 = vunpack.c.l.b16 %v1698
    %v1763 = vunpack.c.l.b16 %v1699
    %v1764 = vunpack.c.l.b16 %v1700
    %v1765 = vunpack.c.l.b16 %v1701
    %v1766 = vunpack.c.l.b16 %v1702
    %v1767 = vunpack.c.l.b16 %v1703
    %v1768 = vunpack.c.l.b16 %v1704
    %v1769 = vunpack.c.l.b16 %v1705
    %v1770 = vunpack.c.l.b16 %v1706
    %v1771 = vunpack.c.l.b16 %v1707
    %v1772 = vunpack.c.l.b16 %v1708
    %v1773 = vunpack.c.l.b16 %v1709
    %v1774 = vunpack.c.l.b16 %v1710
    %v1775 = vunpack.c.l.b16 %v1711
    %v1776 = vpack.c.b16 %v1745, %v1744
    %v1777 = vpack.c.b16 %v1747, %v1746
    %v1778 = vpack.c.b16 %v1749, %v1748
    %v1779 = vpack.c.b16 %v1751, %v1750
    %v1780 = vpack.c.b16 %v1753, %v1752
    %v1781 = vpack.c.b16 %v1755, %v1754
    %v1782 = vpack.c.b16 %v1757, %v1756
    %v1783 = vpack.c.b16 %v1759, %v1758
    %v1784 = vpack.c.b16 %v1761, %v1760
    %v1785 = vpack.c.b16 %v1763, %v1762
    %v1786 = vpack.c.b16 %v1765, %v1764
    %v1787 = vpack.c.b16 %v1767, %v1766
    %v1788 = vpack.c.b16 %v1769, %v1768
    %v1789 = vpack.c.b16 %v1771, %v1770
    %v1790 = vpack.c.b16 %v1773, %v1772
    %v1791 = vpack.c.b16 %v1775, %v1774
    %1808 = vmatprep.subr.bf16.mxu0 0
    %1809 = vmatpush1.bf16.msra.mxu0 %v1783
    %1810 = vmatprep.subr.bf16.mxu0 0
    %1811 = vmatpush1.bf16.msra.mxu0 %v1782
    %1812 = vmatprep.subr.bf16.mxu0 0
    %1813 = vmatpush1.bf16.msra.mxu0 %v1781
    %1814 = vmatprep.subr.bf16.mxu0 0
    %1815 = vmatpush1.bf16.msra.mxu0 %v1780
    %1816 = vmatprep.subr.bf16.mxu0 0
    %1817 = vmatpush1.bf16.msra.mxu0 %v1779
    %1818 = vmatprep.subr.bf16.mxu0 0
    %1819 = vmatpush1.bf16.msra.mxu0 %v1778
    %1820 = vmatprep.subr.bf16.mxu0 0
    %1821 = vmatpush1.bf16.msra.mxu0 %v1777
    %1822 = vmatprep.subr.bf16.mxu0 0
    %1823 = vmatpush1.bf16.msra.mxu0 %v1776
    %1824 = vmatprep.subr.bf16.mxu0 0
    %1825 = vmatpush2.bf16.msra.mxu0 %v1791
    %1826 = vmatprep.subr.bf16.mxu0 0
    %1827 = vmatpush2.bf16.msra.mxu0 %v1790
    %1828 = vmatprep.subr.bf16.mxu0 0
    %1829 = vmatpush2.bf16.msra.mxu0 %v1789
    %1830 = vmatprep.subr.bf16.mxu0 0
    %1831 = vmatpush2.bf16.msra.mxu0 %v1788
    %1832 = vmatprep.subr.bf16.mxu0 0
    %1833 = vmatpush2.bf16.msra.mxu0 %v1787
    %1834 = vmatprep.subr.bf16.mxu0 0
    %1835 = vmatpush2.bf16.msra.mxu0 %v1786
    %1836 = vmatprep.subr.bf16.mxu0 0
    %1837 = vmatpush2.bf16.msra.mxu0 %v1785
    %1838 = vmatprep.subr.bf16.mxu0 0
    %1839 = vmatpush2.bf16.msra.mxu0 %v1784
    %1840 = vmatprep.mubr.bf16.mxu0 %v1679
    %1841 = vmatmul.mubr.bf16.gmra.mxu0 %v1678
    %v1842 = vpop.f32.mrf.mxu0
    %v1843 = vadd.f32 0.0, %v1842
    %v1844 = vpop.f32.mrf.mxu0
    %v1845 = vpop.f32.mrf.mxu0
    %v1846 = vadd.f32 0.0, %v1845
    %v1847 = vpop.f32.mrf.mxu0
    %1848 = vdwg.mxu0
    %v1849 = vadd.f32 %v905, %v1843
    %v1850 = vadd.f32 %v906, %v1846
    %v1851 = vld [vmem:[#allocation2 + $0x40] sm:$0xff]
    %v1852 = vld [vmem:[#allocation2 + $0x48] sm:$0xff]
    %v1853 = vld [vmem:[#allocation2 + $0x50] sm:$0xff]
    %v1854 = vld [vmem:[#allocation2 + $0x58] sm:$0xff]
    %v1855 = vld [vmem:[#allocation9] sm:$0xff]
    %v1856 = vld [vmem:[#allocation9 + $0x8] sm:$0xff]
    %v1857 = vld [vmem:[#allocation9 + $0x10] sm:$0xff]
    %v1858 = vld [vmem:[#allocation9 + $0x18] sm:$0xff]
    %v1859 = vld [vmem:[#allocation9 + $0x20] sm:$0xff]
    %v1860 = vld [vmem:[#allocation9 + $0x28] sm:$0xff]
    %v1861 = vld [vmem:[#allocation9 + $0x30] sm:$0xff]
    %v1862 = vld [vmem:[#allocation9 + $0x38] sm:$0xff]
    %v1863 = vld [vmem:[#allocation9 + $0x40] sm:$0xff]
    %v1864 = vld [vmem:[#allocation9 + $0x48] sm:$0xff]
    %v1865 = vld [vmem:[#allocation9 + $0x50] sm:$0xff]
    %v1866 = vld [vmem:[#allocation9 + $0x58] sm:$0xff]
    %v1867 = vld [vmem:[#allocation9 + $0x60] sm:$0xff]
    %v1868 = vld [vmem:[#allocation9 + $0x68] sm:$0xff]
    %v1869 = vld [vmem:[#allocation9 + $0x70] sm:$0xff]
    %v1870 = vld [vmem:[#allocation9 + $0x78] sm:$0xff]
    %v1871 = vld [vmem:[#allocation9 + $0x80] sm:$0xff]
    %v1872 = vld [vmem:[#allocation9 + $0x88] sm:$0xff]
    %v1873 = vld [vmem:[#allocation9 + $0x90] sm:$0xff]
    %v1874 = vld [vmem:[#allocation9 + $0x98] sm:$0xff]
    %v1875 = vld [vmem:[#allocation9 + $0xa0] sm:$0xff]
    %v1876 = vld [vmem:[#allocation9 + $0xa8] sm:$0xff]
    %v1877 = vld [vmem:[#allocation9 + $0xb0] sm:$0xff]
    %v1878 = vld [vmem:[#allocation9 + $0xb8] sm:$0xff]
    %v1879 = vld [vmem:[#allocation9 + $0xc0] sm:$0xff]
    %v1880 = vld [vmem:[#allocation9 + $0xc8] sm:$0xff]
    %v1881 = vld [vmem:[#allocation9 + $0xd0] sm:$0xff]
    %v1882 = vld [vmem:[#allocation9 + $0xd8] sm:$0xff]
    %v1883 = vld [vmem:[#allocation9 + $0xe0] sm:$0xff]
    %v1884 = vld [vmem:[#allocation9 + $0xe8] sm:$0xff]
    %v1885 = vld [vmem:[#allocation9 + $0xf0] sm:$0xff]
    %v1886 = vld [vmem:[#allocation9 + $0xf8] sm:$0xff]
    %v1919 = vunpack.c.l.b16 %v1855
    %v1920 = vunpack.c.h.b16 %v1855
    %v1921 = vunpack.c.l.b16 %v1856
    %v1922 = vunpack.c.h.b16 %v1856
    %v1923 = vunpack.c.l.b16 %v1857
    %v1924 = vunpack.c.h.b16 %v1857
    %v1925 = vunpack.c.l.b16 %v1858
    %v1926 = vunpack.c.h.b16 %v1858
    %v1927 = vunpack.c.l.b16 %v1859
    %v1928 = vunpack.c.h.b16 %v1859
    %v1929 = vunpack.c.l.b16 %v1860
    %v1930 = vunpack.c.h.b16 %v1860
    %v1931 = vunpack.c.l.b16 %v1861
    %v1932 = vunpack.c.h.b16 %v1861
    %v1933 = vunpack.c.l.b16 %v1862
    %v1934 = vunpack.c.h.b16 %v1862
    %v1935 = vunpack.c.l.b16 %v1863
    %v1936 = vunpack.c.h.b16 %v1863
    %v1937 = vunpack.c.l.b16 %v1864
    %v1938 = vunpack.c.h.b16 %v1864
    %v1939 = vunpack.c.l.b16 %v1865
    %v1940 = vunpack.c.h.b16 %v1865
    %v1941 = vunpack.c.l.b16 %v1866
    %v1942 = vunpack.c.h.b16 %v1866
    %v1943 = vunpack.c.l.b16 %v1867
    %v1944 = vunpack.c.h.b16 %v1867
    %v1945 = vunpack.c.l.b16 %v1868
    %v1946 = vunpack.c.h.b16 %v1868
    %v1947 = vunpack.c.l.b16 %v1869
    %v1948 = vunpack.c.h.b16 %v1869
    %v1949 = vunpack.c.l.b16 %v1870
    %v1950 = vunpack.c.h.b16 %v1870
    %v1951 = vunpack.c.l.b16 %v1871
    %v1952 = vunpack.c.h.b16 %v1871
    %v1953 = vunpack.c.l.b16 %v1872
    %v1954 = vunpack.c.h.b16 %v1872
    %v1955 = vunpack.c.l.b16 %v1873
    %v1956 = vunpack.c.h.b16 %v1873
    %v1957 = vunpack.c.l.b16 %v1874
    %v1958 = vunpack.c.h.b16 %v1874
    %v1959 = vunpack.c.l.b16 %v1875
    %v1960 = vunpack.c.h.b16 %v1875
    %v1961 = vunpack.c.l.b16 %v1876
    %v1962 = vunpack.c.h.b16 %v1876
    %v1963 = vunpack.c.l.b16 %v1877
    %v1964 = vunpack.c.h.b16 %v1877
    %v1965 = vunpack.c.l.b16 %v1878
    %v1966 = vunpack.c.h.b16 %v1878
    %v1967 = vunpack.c.l.b16 %v1879
    %v1968 = vunpack.c.h.b16 %v1879
    %v1969 = vunpack.c.l.b16 %v1880
    %v1970 = vunpack.c.h.b16 %v1880
    %v1971 = vunpack.c.l.b16 %v1881
    %v1972 = vunpack.c.h.b16 %v1881
    %v1973 = vunpack.c.l.b16 %v1882
    %v1974 = vunpack.c.h.b16 %v1882
    %v1975 = vunpack.c.l.b16 %v1883
    %v1976 = vunpack.c.h.b16 %v1883
    %v1977 = vunpack.c.l.b16 %v1884
    %v1978 = vunpack.c.h.b16 %v1884
    %v1979 = vunpack.c.l.b16 %v1885
    %v1980 = vunpack.c.h.b16 %v1885
    %v1981 = vunpack.c.l.b16 %v1886
    %v1982 = vunpack.c.h.b16 %v1886
    %v1983 = vpack.c.b16 %v1921, %v1919
    %v1984 = vpack.c.b16 %v1922, %v1920
    %v1985 = vpack.c.b16 %v1925, %v1923
    %v1986 = vpack.c.b16 %v1926, %v1924
    %v1987 = vpack.c.b16 %v1929, %v1927
    %v1988 = vpack.c.b16 %v1930, %v1928
    %v1989 = vpack.c.b16 %v1933, %v1931
    %v1990 = vpack.c.b16 %v1934, %v1932
    %v1991 = vpack.c.b16 %v1937, %v1935
    %v1992 = vpack.c.b16 %v1938, %v1936
    %v1993 = vpack.c.b16 %v1941, %v1939
    %v1994 = vpack.c.b16 %v1942, %v1940
    %v1995 = vpack.c.b16 %v1945, %v1943
    %v1996 = vpack.c.b16 %v1946, %v1944
    %v1997 = vpack.c.b16 %v1949, %v1947
    %v1998 = vpack.c.b16 %v1950, %v1948
    %v1999 = vpack.c.b16 %v1953, %v1951
    %v2000 = vpack.c.b16 %v1954, %v1952
    %v2001 = vpack.c.b16 %v1957, %v1955
    %v2002 = vpack.c.b16 %v1958, %v1956
    %v2003 = vpack.c.b16 %v1961, %v1959
    %v2004 = vpack.c.b16 %v1962, %v1960
    %v2005 = vpack.c.b16 %v1965, %v1963
    %v2006 = vpack.c.b16 %v1966, %v1964
    %v2007 = vpack.c.b16 %v1969, %v1967
    %v2008 = vpack.c.b16 %v1970, %v1968
    %v2009 = vpack.c.b16 %v1973, %v1971
    %v2010 = vpack.c.b16 %v1974, %v1972
    %v2011 = vpack.c.b16 %v1977, %v1975
    %v2012 = vpack.c.b16 %v1978, %v1976
    %v2013 = vpack.c.b16 %v1981, %v1979
    %v2014 = vpack.c.b16 %v1982, %v1980
    %2047 = vmatprep.subr.bf16.mxu0 %v1998
    %2048 = vmatpush1.bf16.msra.mxu0 %v1997
    %2049 = vmatprep.subr.bf16.mxu0 %v1996
    %2050 = vmatpush1.bf16.msra.mxu0 %v1995
    %2051 = vmatprep.subr.bf16.mxu0 %v1994
    %2052 = vmatpush1.bf16.msra.mxu0 %v1993
    %2053 = vmatprep.subr.bf16.mxu0 %v1992
    %2054 = vmatpush1.bf16.msra.mxu0 %v1991
    %2055 = vmatprep.subr.bf16.mxu0 %v1990
    %2056 = vmatpush1.bf16.msra.mxu0 %v1989
    %2057 = vmatprep.subr.bf16.mxu0 %v1988
    %2058 = vmatpush1.bf16.msra.mxu0 %v1987
    %2059 = vmatprep.subr.bf16.mxu0 %v1986
    %2060 = vmatpush1.bf16.msra.mxu0 %v1985
    %2061 = vmatprep.subr.bf16.mxu0 %v1984
    %2062 = vmatpush1.bf16.msra.mxu0 %v1983
    %2063 = vmatprep.subr.bf16.mxu0 %v2014
    %2064 = vmatpush2.bf16.msra.mxu0 %v2013
    %2065 = vmatprep.subr.bf16.mxu0 %v2012
    %2066 = vmatpush2.bf16.msra.mxu0 %v2011
    %2067 = vmatprep.subr.bf16.mxu0 %v2010
    %2068 = vmatpush2.bf16.msra.mxu0 %v2009
    %2069 = vmatprep.subr.bf16.mxu0 %v2008
    %2070 = vmatpush2.bf16.msra.mxu0 %v2007
    %2071 = vmatprep.subr.bf16.mxu0 %v2006
    %2072 = vmatpush2.bf16.msra.mxu0 %v2005
    %2073 = vmatprep.subr.bf16.mxu0 %v2004
    %2074 = vmatpush2.bf16.msra.mxu0 %v2003
    %2075 = vmatprep.subr.bf16.mxu0 %v2002
    %2076 = vmatpush2.bf16.msra.mxu0 %v2001
    %2077 = vmatprep.subr.bf16.mxu0 %v2000
    %2078 = vmatpush2.bf16.msra.mxu0 %v1999
    %2079 = vmatprep.mubr.bf16.mxu0 %v1155
    %2080 = vmatmul.mubr.bf16.gmra.mxu0 %v1154
    %v2081 = vpop.f32.mrf.mxu0
    %v2082 = vadd.f32 0.0, %v2081
    %v2083 = vpop.f32.mrf.mxu0
    %v2084 = vadd.f32 0.0, %v2083
    %v2085 = vpop.f32.mrf.mxu0
    %v2086 = vadd.f32 0.0, %v2085
    %v2087 = vpop.f32.mrf.mxu0
    %v2088 = vadd.f32 0.0, %v2087
    %2089 = vdwg.mxu0
    %v2090 = vadd.f32 %v1851, %v2082
    %v2091 = vadd.f32 %v1852, %v2084
    %v2092 = vadd.f32 %v1853, %v2086
    %v2093 = vadd.f32 %v1854, %v2088
    %v2094 = vtanh.pop %v2090
    %v2095 = vtanh.pop %v2091
    %v2096 = vtanh.pop %v2092
    %v2097 = vtanh.pop %v2093
    %v2098 = vpack.c.bf16 %v2096, %v2094
    %v2099 = vpack.c.bf16 %v2097, %v2095
    %v2102 = vunpack.c.l.b16 %v2098
    %v2103 = vunpack.c.l.b16 %v2099
    %v2104 = vunpack.c.h.b16 %v2098
    %v2105 = vunpack.c.h.b16 %v2099
    %v2106 = vpack.c.b16 %v2103, %v2102
    %v2107 = vpack.c.b16 %v2105, %v2104
    %2110 = vst [vmem:[#allocation3] sm:$0xff] %v2106
    %2111 = vst [vmem:[#allocation3 + $0x10] sm:$0xff] %v2107
    %v2114 = vunpack.c.l.b16 %v1678
    %v2115 = vunpack.c.l.b16 %v1679
    %v2116 = vunpack.c.h.b16 %v1678
    %v2117 = vunpack.c.h.b16 %v1679
    %v2118 = vpack.c.b16 %v2115, %v2114
    %v2119 = vpack.c.b16 %v2117, %v2116
    %2122 = vst [vmem:[#allocation3 + $0x8] sm:$0xff] %v2118
    %2123 = vst [vmem:[#allocation3 + $0x18] sm:$0xff] %v2119
    %v2124 = vld [vmem:[#allocation3] sm:$0xff]
    %v2125 = vld [vmem:[#allocation3 + $0x8] sm:$0xff]
    %v2126 = vld [vmem:[#allocation3 + $0x10] sm:$0xff]
    %v2127 = vld [vmem:[#allocation3 + $0x18] sm:$0xff]
    %v2128 = vld [vmem:[#allocation10] sm:$0xff]
    %v2129 = vld [vmem:[#allocation10 + $0x8] sm:$0xff]
    %v2130 = vld [vmem:[#allocation10 + $0x10] sm:$0xff]
    %v2131 = vld [vmem:[#allocation10 + $0x18] sm:$0xff]
    %v2132 = vld [vmem:[#allocation10 + $0x20] sm:$0xff]
    %v2133 = vld [vmem:[#allocation10 + $0x28] sm:$0xff]
    %v2134 = vld [vmem:[#allocation10 + $0x30] sm:$0xff]
    %v2135 = vld [vmem:[#allocation10 + $0x38] sm:$0xff]
    %v2136 = vld [vmem:[#allocation10 + $0x40] sm:$0xff]
    %v2137 = vld [vmem:[#allocation10 + $0x48] sm:$0xff]
    %v2138 = vld [vmem:[#allocation10 + $0x50] sm:$0xff]
    %v2139 = vld [vmem:[#allocation10 + $0x58] sm:$0xff]
    %v2140 = vld [vmem:[#allocation10 + $0x60] sm:$0xff]
    %v2141 = vld [vmem:[#allocation10 + $0x68] sm:$0xff]
    %v2142 = vld [vmem:[#allocation10 + $0x70] sm:$0xff]
    %v2143 = vld [vmem:[#allocation10 + $0x78] sm:$0xff]
    %v2144 = vld [vmem:[#allocation10 + $0x80] sm:$0xff]
    %v2145 = vld [vmem:[#allocation10 + $0x88] sm:$0xff]
    %v2146 = vld [vmem:[#allocation10 + $0x90] sm:$0xff]
    %v2147 = vld [vmem:[#allocation10 + $0x98] sm:$0xff]
    %v2148 = vld [vmem:[#allocation10 + $0xa0] sm:$0xff]
    %v2149 = vld [vmem:[#allocation10 + $0xa8] sm:$0xff]
    %v2150 = vld [vmem:[#allocation10 + $0xb0] sm:$0xff]
    %v2151 = vld [vmem:[#allocation10 + $0xb8] sm:$0xff]
    %v2152 = vld [vmem:[#allocation10 + $0xc0] sm:$0xff]
    %v2153 = vld [vmem:[#allocation10 + $0xc8] sm:$0xff]
    %v2154 = vld [vmem:[#allocation10 + $0xd0] sm:$0xff]
    %v2155 = vld [vmem:[#allocation10 + $0xd8] sm:$0xff]
    %v2156 = vld [vmem:[#allocation10 + $0xe0] sm:$0xff]
    %v2157 = vld [vmem:[#allocation10 + $0xe8] sm:$0xff]
    %v2158 = vld [vmem:[#allocation10 + $0xf0] sm:$0xff]
    %v2159 = vld [vmem:[#allocation10 + $0xf8] sm:$0xff]
    %v2160 = vld [vmem:[#allocation10 + $0x100] sm:$0xff]
    %v2161 = vld [vmem:[#allocation10 + $0x108] sm:$0xff]
    %v2162 = vld [vmem:[#allocation10 + $0x110] sm:$0xff]
    %v2163 = vld [vmem:[#allocation10 + $0x118] sm:$0xff]
    %v2164 = vld [vmem:[#allocation10 + $0x120] sm:$0xff]
    %v2165 = vld [vmem:[#allocation10 + $0x128] sm:$0xff]
    %v2166 = vld [vmem:[#allocation10 + $0x130] sm:$0xff]
    %v2167 = vld [vmem:[#allocation10 + $0x138] sm:$0xff]
    %v2168 = vld [vmem:[#allocation10 + $0x140] sm:$0xff]
    %v2169 = vld [vmem:[#allocation10 + $0x148] sm:$0xff]
    %v2170 = vld [vmem:[#allocation10 + $0x150] sm:$0xff]
    %v2171 = vld [vmem:[#allocation10 + $0x158] sm:$0xff]
    %v2172 = vld [vmem:[#allocation10 + $0x160] sm:$0xff]
    %v2173 = vld [vmem:[#allocation10 + $0x168] sm:$0xff]
    %v2174 = vld [vmem:[#allocation10 + $0x170] sm:$0xff]
    %v2175 = vld [vmem:[#allocation10 + $0x178] sm:$0xff]
    %v2176 = vld [vmem:[#allocation10 + $0x180] sm:$0xff]
    %v2177 = vld [vmem:[#allocation10 + $0x188] sm:$0xff]
    %v2178 = vld [vmem:[#allocation10 + $0x190] sm:$0xff]
    %v2179 = vld [vmem:[#allocation10 + $0x198] sm:$0xff]
    %v2180 = vld [vmem:[#allocation10 + $0x1a0] sm:$0xff]
    %v2181 = vld [vmem:[#allocation10 + $0x1a8] sm:$0xff]
    %v2182 = vld [vmem:[#allocation10 + $0x1b0] sm:$0xff]
    %v2183 = vld [vmem:[#allocation10 + $0x1b8] sm:$0xff]
    %v2184 = vld [vmem:[#allocation10 + $0x1c0] sm:$0xff]
    %v2185 = vld [vmem:[#allocation10 + $0x1c8] sm:$0xff]
    %v2186 = vld [vmem:[#allocation10 + $0x1d0] sm:$0xff]
    %v2187 = vld [vmem:[#allocation10 + $0x1d8] sm:$0xff]
    %v2188 = vld [vmem:[#allocation10 + $0x1e0] sm:$0xff]
    %v2189 = vld [vmem:[#allocation10 + $0x1e8] sm:$0xff]
    %v2190 = vld [vmem:[#allocation10 + $0x1f0] sm:$0xff]
    %v2191 = vld [vmem:[#allocation10 + $0x1f8] sm:$0xff]
    %v2196 = vunpack.c.l.b16 %v2124
    %v2197 = vunpack.c.h.b16 %v2124
    %v2198 = vunpack.c.l.b16 %v2125
    %v2199 = vunpack.c.h.b16 %v2125
    %v2200 = vunpack.c.l.b16 %v2126
    %v2201 = vunpack.c.h.b16 %v2126
    %v2202 = vunpack.c.l.b16 %v2127
    %v2203 = vunpack.c.h.b16 %v2127
    %v2204 = vpack.c.b16 %v2200, %v2196
    %v2205 = vpack.c.b16 %v2201, %v2197
    %v2206 = vpack.c.b16 %v2202, %v2198
    %v2207 = vpack.c.b16 %v2203, %v2199
    %v2276 = vunpack.c.l.b16 %v2128
    %v2277 = vunpack.c.h.b16 %v2128
    %v2278 = vunpack.c.l.b16 %v2129
    %v2279 = vunpack.c.h.b16 %v2129
    %v2280 = vunpack.c.l.b16 %v2130
    %v2281 = vunpack.c.h.b16 %v2130
    %v2282 = vunpack.c.l.b16 %v2131
    %v2283 = vunpack.c.h.b16 %v2131
    %v2284 = vunpack.c.l.b16 %v2132
    %v2285 = vunpack.c.h.b16 %v2132
    %v2286 = vunpack.c.l.b16 %v2133
    %v2287 = vunpack.c.h.b16 %v2133
    %v2288 = vunpack.c.l.b16 %v2134
    %v2289 = vunpack.c.h.b16 %v2134
    %v2290 = vunpack.c.l.b16 %v2135
    %v2291 = vunpack.c.h.b16 %v2135
    %v2292 = vunpack.c.l.b16 %v2136
    %v2293 = vunpack.c.h.b16 %v2136
    %v2294 = vunpack.c.l.b16 %v2137
    %v2295 = vunpack.c.h.b16 %v2137
    %v2296 = vunpack.c.l.b16 %v2138
    %v2297 = vunpack.c.h.b16 %v2138
    %v2298 = vunpack.c.l.b16 %v2139
    %v2299 = vunpack.c.h.b16 %v2139
    %v2300 = vunpack.c.l.b16 %v2140
    %v2301 = vunpack.c.h.b16 %v2140
    %v2302 = vunpack.c.l.b16 %v2141
    %v2303 = vunpack.c.h.b16 %v2141
    %v2304 = vunpack.c.l.b16 %v2142
    %v2305 = vunpack.c.h.b16 %v2142
    %v2306 = vunpack.c.l.b16 %v2143
    %v2307 = vunpack.c.h.b16 %v2143
    %v2308 = vunpack.c.l.b16 %v2144
    %v2309 = vunpack.c.h.b16 %v2144
    %v2310 = vunpack.c.l.b16 %v2145
    %v2311 = vunpack.c.h.b16 %v2145
    %v2312 = vunpack.c.l.b16 %v2146
    %v2313 = vunpack.c.h.b16 %v2146
    %v2314 = vunpack.c.l.b16 %v2147
    %v2315 = vunpack.c.h.b16 %v2147
    %v2316 = vunpack.c.l.b16 %v2148
    %v2317 = vunpack.c.h.b16 %v2148
    %v2318 = vunpack.c.l.b16 %v2149
    %v2319 = vunpack.c.h.b16 %v2149
    %v2320 = vunpack.c.l.b16 %v2150
    %v2321 = vunpack.c.h.b16 %v2150
    %v2322 = vunpack.c.l.b16 %v2151
    %v2323 = vunpack.c.h.b16 %v2151
    %v2324 = vunpack.c.l.b16 %v2152
    %v2325 = vunpack.c.h.b16 %v2152
    %v2326 = vunpack.c.l.b16 %v2153
    %v2327 = vunpack.c.h.b16 %v2153
    %v2328 = vunpack.c.l.b16 %v2154
    %v2329 = vunpack.c.h.b16 %v2154
    %v2330 = vunpack.c.l.b16 %v2155
    %v2331 = vunpack.c.h.b16 %v2155
    %v2332 = vunpack.c.l.b16 %v2156
    %v2333 = vunpack.c.h.b16 %v2156
    %v2334 = vunpack.c.l.b16 %v2157
    %v2335 = vunpack.c.h.b16 %v2157
    %v2336 = vunpack.c.l.b16 %v2158
    %v2337 = vunpack.c.h.b16 %v2158
    %v2338 = vunpack.c.l.b16 %v2159
    %v2339 = vunpack.c.h.b16 %v2159
    %v2340 = vunpack.c.l.b16 %v2160
    %v2341 = vunpack.c.h.b16 %v2160
    %v2342 = vunpack.c.l.b16 %v2161
    %v2343 = vunpack.c.h.b16 %v2161
    %v2344 = vunpack.c.l.b16 %v2162
    %v2345 = vunpack.c.h.b16 %v2162
    %v2346 = vunpack.c.l.b16 %v2163
    %v2347 = vunpack.c.h.b16 %v2163
    %v2348 = vunpack.c.l.b16 %v2164
    %v2349 = vunpack.c.h.b16 %v2164
    %v2350 = vunpack.c.l.b16 %v2165
    %v2351 = vunpack.c.h.b16 %v2165
    %v2352 = vunpack.c.l.b16 %v2166
    %v2353 = vunpack.c.h.b16 %v2166
    %v2354 = vunpack.c.l.b16 %v2167
    %v2355 = vunpack.c.h.b16 %v2167
    %v2356 = vunpack.c.l.b16 %v2168
    %v2357 = vunpack.c.h.b16 %v2168
    %v2358 = vunpack.c.l.b16 %v2169
    %v2359 = vunpack.c.h.b16 %v2169
    %v2360 = vunpack.c.l.b16 %v2170
    %v2361 = vunpack.c.h.b16 %v2170
    %v2362 = vunpack.c.l.b16 %v2171
    %v2363 = vunpack.c.h.b16 %v2171
    %v2364 = vunpack.c.l.b16 %v2172
    %v2365 = vunpack.c.h.b16 %v2172
    %v2366 = vunpack.c.l.b16 %v2173
    %v2367 = vunpack.c.h.b16 %v2173
    %v2368 = vunpack.c.l.b16 %v2174
    %v2369 = vunpack.c.h.b16 %v2174
    %v2370 = vunpack.c.l.b16 %v2175
    %v2371 = vunpack.c.h.b16 %v2175
    %v2372 = vunpack.c.l.b16 %v2176
    %v2373 = vunpack.c.h.b16 %v2176
    %v2374 = vunpack.c.l.b16 %v2177
    %v2375 = vunpack.c.h.b16 %v2177
    %v2376 = vunpack.c.l.b16 %v2178
    %v2377 = vunpack.c.h.b16 %v2178
    %v2378 = vunpack.c.l.b16 %v2179
    %v2379 = vunpack.c.h.b16 %v2179
    %v2380 = vunpack.c.l.b16 %v2180
    %v2381 = vunpack.c.h.b16 %v2180
    %v2382 = vunpack.c.l.b16 %v2181
    %v2383 = vunpack.c.h.b16 %v2181
    %v2384 = vunpack.c.l.b16 %v2182
    %v2385 = vunpack.c.h.b16 %v2182
    %v2386 = vunpack.c.l.b16 %v2183
    %v2387 = vunpack.c.h.b16 %v2183
    %v2388 = vunpack.c.l.b16 %v2184
    %v2389 = vunpack.c.h.b16 %v2184
    %v2390 = vunpack.c.l.b16 %v2185
    %v2391 = vunpack.c.h.b16 %v2185
    %v2392 = vunpack.c.l.b16 %v2186
    %v2393 = vunpack.c.h.b16 %v2186
    %v2394 = vunpack.c.l.b16 %v2187
    %v2395 = vunpack.c.h.b16 %v2187
    %v2396 = vunpack.c.l.b16 %v2188
    %v2397 = vunpack.c.h.b16 %v2188
    %v2398 = vunpack.c.l.b16 %v2189
    %v2399 = vunpack.c.h.b16 %v2189
    %v2400 = vunpack.c.l.b16 %v2190
    %v2401 = vunpack.c.h.b16 %v2190
    %v2402 = vunpack.c.l.b16 %v2191
    %v2403 = vunpack.c.h.b16 %v2191
    %v2404 = vpack.c.b16 %v2278, %v2276
    %v2405 = vpack.c.b16 %v2279, %v2277
    %v2406 = vpack.c.b16 %v2282, %v2280
    %v2407 = vpack.c.b16 %v2283, %v2281
    %v2408 = vpack.c.b16 %v2286, %v2284
    %v2409 = vpack.c.b16 %v2287, %v2285
    %v2410 = vpack.c.b16 %v2290, %v2288
    %v2411 = vpack.c.b16 %v2291, %v2289
    %v2412 = vpack.c.b16 %v2294, %v2292
    %v2413 = vpack.c.b16 %v2295, %v2293
    %v2414 = vpack.c.b16 %v2298, %v2296
    %v2415 = vpack.c.b16 %v2299, %v2297
    %v2416 = vpack.c.b16 %v2302, %v2300
    %v2417 = vpack.c.b16 %v2303, %v2301
    %v2418 = vpack.c.b16 %v2306, %v2304
    %v2419 = vpack.c.b16 %v2307, %v2305
    %v2420 = vpack.c.b16 %v2310, %v2308
    %v2421 = vpack.c.b16 %v2311, %v2309
    %v2422 = vpack.c.b16 %v2314, %v2312
    %v2423 = vpack.c.b16 %v2315, %v2313
    %v2424 = vpack.c.b16 %v2318, %v2316
    %v2425 = vpack.c.b16 %v2319, %v2317
    %v2426 = vpack.c.b16 %v2322, %v2320
    %v2427 = vpack.c.b16 %v2323, %v2321
    %v2428 = vpack.c.b16 %v2326, %v2324
    %v2429 = vpack.c.b16 %v2327, %v2325
    %v2430 = vpack.c.b16 %v2330, %v2328
    %v2431 = vpack.c.b16 %v2331, %v2329
    %v2432 = vpack.c.b16 %v2334, %v2332
    %v2433 = vpack.c.b16 %v2335, %v2333
    %v2434 = vpack.c.b16 %v2338, %v2336
    %v2435 = vpack.c.b16 %v2339, %v2337
    %v2436 = vpack.c.b16 %v2342, %v2340
    %v2437 = vpack.c.b16 %v2343, %v2341
    %v2438 = vpack.c.b16 %v2346, %v2344
    %v2439 = vpack.c.b16 %v2347, %v2345
    %v2440 = vpack.c.b16 %v2350, %v2348
    %v2441 = vpack.c.b16 %v2351, %v2349
    %v2442 = vpack.c.b16 %v2354, %v2352
    %v2443 = vpack.c.b16 %v2355, %v2353
    %v2444 = vpack.c.b16 %v2358, %v2356
    %v2445 = vpack.c.b16 %v2359, %v2357
    %v2446 = vpack.c.b16 %v2362, %v2360
    %v2447 = vpack.c.b16 %v2363, %v2361
    %v2448 = vpack.c.b16 %v2366, %v2364
    %v2449 = vpack.c.b16 %v2367, %v2365
    %v2450 = vpack.c.b16 %v2370, %v2368
    %v2451 = vpack.c.b16 %v2371, %v2369
    %v2452 = vpack.c.b16 %v2374, %v2372
    %v2453 = vpack.c.b16 %v2375, %v2373
    %v2454 = vpack.c.b16 %v2378, %v2376
    %v2455 = vpack.c.b16 %v2379, %v2377
    %v2456 = vpack.c.b16 %v2382, %v2380
    %v2457 = vpack.c.b16 %v2383, %v2381
    %v2458 = vpack.c.b16 %v2386, %v2384
    %v2459 = vpack.c.b16 %v2387, %v2385
    %v2460 = vpack.c.b16 %v2390, %v2388
    %v2461 = vpack.c.b16 %v2391, %v2389
    %v2462 = vpack.c.b16 %v2394, %v2392
    %v2463 = vpack.c.b16 %v2395, %v2393
    %v2464 = vpack.c.b16 %v2398, %v2396
    %v2465 = vpack.c.b16 %v2399, %v2397
    %v2466 = vpack.c.b16 %v2402, %v2400
    %v2467 = vpack.c.b16 %v2403, %v2401
    %2532 = vmatprep.subr.bf16.mxu0 %v2419
    %2533 = vmatpush1.bf16.msra.mxu0 %v2418
    %2534 = vmatprep.subr.bf16.mxu0 %v2417
    %2535 = vmatpush1.bf16.msra.mxu0 %v2416
    %2536 = vmatprep.subr.bf16.mxu0 %v2415
    %2537 = vmatpush1.bf16.msra.mxu0 %v2414
    %2538 = vmatprep.subr.bf16.mxu0 %v2413
    %2539 = vmatpush1.bf16.msra.mxu0 %v2412
    %2540 = vmatprep.subr.bf16.mxu0 %v2411
    %2541 = vmatpush1.bf16.msra.mxu0 %v2410
    %2542 = vmatprep.subr.bf16.mxu0 %v2409
    %2543 = vmatpush1.bf16.msra.mxu0 %v2408
    %2544 = vmatprep.subr.bf16.mxu0 %v2407
    %2545 = vmatpush1.bf16.msra.mxu0 %v2406
    %2546 = vmatprep.subr.bf16.mxu0 %v2405
    %2547 = vmatpush1.bf16.msra.mxu0 %v2404
    %2548 = vmatprep.subr.bf16.mxu0 %v2435
    %2549 = vmatpush2.bf16.msra.mxu0 %v2434
    %2550 = vmatprep.subr.bf16.mxu0 %v2433
    %2551 = vmatpush2.bf16.msra.mxu0 %v2432
    %2552 = vmatprep.subr.bf16.mxu0 %v2431
    %2553 = vmatpush2.bf16.msra.mxu0 %v2430
    %2554 = vmatprep.subr.bf16.mxu0 %v2429
    %2555 = vmatpush2.bf16.msra.mxu0 %v2428
    %2556 = vmatprep.subr.bf16.mxu0 %v2427
    %2557 = vmatpush2.bf16.msra.mxu0 %v2426
    %2558 = vmatprep.subr.bf16.mxu0 %v2425
    %2559 = vmatpush2.bf16.msra.mxu0 %v2424
    %2560 = vmatprep.subr.bf16.mxu0 %v2423
    %2561 = vmatpush2.bf16.msra.mxu0 %v2422
    %2562 = vmatprep.subr.bf16.mxu0 %v2421
    %2563 = vmatpush2.bf16.msra.mxu0 %v2420
    %2564 = vmatprep.mubr.bf16.mxu0 %v2205
    %2565 = vmatmul.mubr.bf16.gmra.mxu0 %v2204
    %v2566 = vpop.f32.mrf.mxu0
    %v2567 = vadd.f32 %v471, %v2566
    %v2568 = vpop.f32.mrf.mxu0
    %v2569 = vadd.f32 %v475, %v2568
    %v2570 = vpop.f32.mrf.mxu0
    %v2571 = vadd.f32 %v471, %v2570
    %v2572 = vpop.f32.mrf.mxu0
    %v2573 = vadd.f32 %v475, %v2572
    %2574 = vdwg.mxu0
    %2575 = vmatprep.subr.bf16.mxu0 %v2451
    %2576 = vmatpush1.bf16.msra.mxu0 %v2450
    %2577 = vmatprep.subr.bf16.mxu0 %v2449
    %2578 = vmatpush1.bf16.msra.mxu0 %v2448
    %2579 = vmatprep.subr.bf16.mxu0 %v2447
    %2580 = vmatpush1.bf16.msra.mxu0 %v2446
    %2581 = vmatprep.subr.bf16.mxu0 %v2445
    %2582 = vmatpush1.bf16.msra.mxu0 %v2444
    %2583 = vmatprep.subr.bf16.mxu0 %v2443
    %2584 = vmatpush1.bf16.msra.mxu0 %v2442
    %2585 = vmatprep.subr.bf16.mxu0 %v2441
    %2586 = vmatpush1.bf16.msra.mxu0 %v2440
    %2587 = vmatprep.subr.bf16.mxu0 %v2439
    %2588 = vmatpush1.bf16.msra.mxu0 %v2438
    %2589 = vmatprep.subr.bf16.mxu0 %v2437
    %2590 = vmatpush1.bf16.msra.mxu0 %v2436
    %2591 = vmatprep.subr.bf16.mxu0 %v2467
    %2592 = vmatpush2.bf16.msra.mxu0 %v2466
    %2593 = vmatprep.subr.bf16.mxu0 %v2465
    %2594 = vmatpush2.bf16.msra.mxu0 %v2464
    %2595 = vmatprep.subr.bf16.mxu0 %v2463
    %2596 = vmatpush2.bf16.msra.mxu0 %v2462
    %2597 = vmatprep.subr.bf16.mxu0 %v2461
    %2598 = vmatpush2.bf16.msra.mxu0 %v2460
    %2599 = vmatprep.subr.bf16.mxu0 %v2459
    %2600 = vmatpush2.bf16.msra.mxu0 %v2458
    %2601 = vmatprep.subr.bf16.mxu0 %v2457
    %2602 = vmatpush2.bf16.msra.mxu0 %v2456
    %2603 = vmatprep.subr.bf16.mxu0 %v2455
    %2604 = vmatpush2.bf16.msra.mxu0 %v2454
    %2605 = vmatprep.subr.bf16.mxu0 %v2453
    %2606 = vmatpush2.bf16.msra.mxu0 %v2452
    %2607 = vmatprep.mubr.bf16.mxu0 %v2207
    %2608 = vmatmul.mubr.bf16.gmra.mxu0 %v2206
    %v2609 = vpop.f32.mrf.mxu0
    %v2610 = vadd.f32 %v2567, %v2609
    %v2611 = vpop.f32.mrf.mxu0
    %v2612 = vadd.f32 %v2569, %v2611
    %v2613 = vpop.f32.mrf.mxu0
    %v2614 = vadd.f32 %v2571, %v2613
    %v2615 = vpop.f32.mrf.mxu0
    %v2616 = vadd.f32 %v2573, %v2615
    %2617 = vdwg.mxu0
    %v2618 = vtanh.pop %v2610
    %v2619 = vtanh.pop %v2612
    %v2620 = vtanh.pop %v2614
    %v2621 = vtanh.pop %v2616
    %v2622 = vpack.c.bf16 %v2620, %v2618
    %v2623 = vpack.c.bf16 %v2621, %v2619
    %v2624 = vld [vmem:[#allocation12 + $0x100] sm:$0xf]
    %v2625 = vld [vmem:[#allocation12 + $0x104] sm:$0xf]
    %v2626 = vld [vmem:[#allocation12 + $0x108] sm:$0xf]
    %v2627 = vld [vmem:[#allocation12 + $0x10c] sm:$0xf]
    %v2628 = vld [vmem:[#allocation12 + $0x110] sm:$0xf]
    %v2629 = vld [vmem:[#allocation12 + $0x114] sm:$0xf]
    %v2630 = vld [vmem:[#allocation12 + $0x118] sm:$0xf]
    %v2631 = vld [vmem:[#allocation12 + $0x11c] sm:$0xf]
    %v2632 = vld [vmem:[#allocation12 + $0x120] sm:$0xf]
    %v2633 = vld [vmem:[#allocation12 + $0x124] sm:$0xf]
    %v2634 = vld [vmem:[#allocation12 + $0x128] sm:$0xf]
    %v2635 = vld [vmem:[#allocation12 + $0x12c] sm:$0xf]
    %v2636 = vld [vmem:[#allocation12 + $0x130] sm:$0xf]
    %v2637 = vld [vmem:[#allocation12 + $0x134] sm:$0xf]
    %v2638 = vld [vmem:[#allocation12 + $0x138] sm:$0xf]
    %v2639 = vld [vmem:[#allocation12 + $0x13c] sm:$0xf]
    %v2640 = vld [vmem:[#allocation12 + $0x140] sm:$0xf]
    %v2641 = vld [vmem:[#allocation12 + $0x144] sm:$0xf]
    %v2642 = vld [vmem:[#allocation12 + $0x148] sm:$0xf]
    %v2643 = vld [vmem:[#allocation12 + $0x14c] sm:$0xf]
    %v2644 = vld [vmem:[#allocation12 + $0x150] sm:$0xf]
    %v2645 = vld [vmem:[#allocation12 + $0x154] sm:$0xf]
    %v2646 = vld [vmem:[#allocation12 + $0x158] sm:$0xf]
    %v2647 = vld [vmem:[#allocation12 + $0x15c] sm:$0xf]
    %v2648 = vld [vmem:[#allocation12 + $0x160] sm:$0xf]
    %v2649 = vld [vmem:[#allocation12 + $0x164] sm:$0xf]
    %v2650 = vld [vmem:[#allocation12 + $0x168] sm:$0xf]
    %v2651 = vld [vmem:[#allocation12 + $0x16c] sm:$0xf]
    %v2652 = vld [vmem:[#allocation12 + $0x170] sm:$0xf]
    %v2653 = vld [vmem:[#allocation12 + $0x174] sm:$0xf]
    %v2654 = vld [vmem:[#allocation12 + $0x178] sm:$0xf]
    %v2655 = vld [vmem:[#allocation12 + $0x17c] sm:$0xf]
    %v2688 = vunpack.c.l.b16 %v2624
    %v2689 = vunpack.c.l.b16 %v2625
    %v2690 = vunpack.c.l.b16 %v2626
    %v2691 = vunpack.c.l.b16 %v2627
    %v2692 = vunpack.c.l.b16 %v2628
    %v2693 = vunpack.c.l.b16 %v2629
    %v2694 = vunpack.c.l.b16 %v2630
    %v2695 = vunpack.c.l.b16 %v2631
    %v2696 = vunpack.c.l.b16 %v2632
    %v2697 = vunpack.c.l.b16 %v2633
    %v2698 = vunpack.c.l.b16 %v2634
    %v2699 = vunpack.c.l.b16 %v2635
    %v2700 = vunpack.c.l.b16 %v2636
    %v2701 = vunpack.c.l.b16 %v2637
    %v2702 = vunpack.c.l.b16 %v2638
    %v2703 = vunpack.c.l.b16 %v2639
    %v2704 = vunpack.c.l.b16 %v2640
    %v2705 = vunpack.c.l.b16 %v2641
    %v2706 = vunpack.c.l.b16 %v2642
    %v2707 = vunpack.c.l.b16 %v2643
    %v2708 = vunpack.c.l.b16 %v2644
    %v2709 = vunpack.c.l.b16 %v2645
    %v2710 = vunpack.c.l.b16 %v2646
    %v2711 = vunpack.c.l.b16 %v2647
    %v2712 = vunpack.c.l.b16 %v2648
    %v2713 = vunpack.c.l.b16 %v2649
    %v2714 = vunpack.c.l.b16 %v2650
    %v2715 = vunpack.c.l.b16 %v2651
    %v2716 = vunpack.c.l.b16 %v2652
    %v2717 = vunpack.c.l.b16 %v2653
    %v2718 = vunpack.c.l.b16 %v2654
    %v2719 = vunpack.c.l.b16 %v2655
    %v2720 = vpack.c.b16 %v2689, %v2688
    %v2721 = vpack.c.b16 %v2691, %v2690
    %v2722 = vpack.c.b16 %v2693, %v2692
    %v2723 = vpack.c.b16 %v2695, %v2694
    %v2724 = vpack.c.b16 %v2697, %v2696
    %v2725 = vpack.c.b16 %v2699, %v2698
    %v2726 = vpack.c.b16 %v2701, %v2700
    %v2727 = vpack.c.b16 %v2703, %v2702
    %v2728 = vpack.c.b16 %v2705, %v2704
    %v2729 = vpack.c.b16 %v2707, %v2706
    %v2730 = vpack.c.b16 %v2709, %v2708
    %v2731 = vpack.c.b16 %v2711, %v2710
    %v2732 = vpack.c.b16 %v2713, %v2712
    %v2733 = vpack.c.b16 %v2715, %v2714
    %v2734 = vpack.c.b16 %v2717, %v2716
    %v2735 = vpack.c.b16 %v2719, %v2718
    %2752 = vmatprep.subr.bf16.mxu0 0
    %2753 = vmatpush1.bf16.msra.mxu0 %v2727
    %2754 = vmatprep.subr.bf16.mxu0 0
    %2755 = vmatpush1.bf16.msra.mxu0 %v2726
    %2756 = vmatprep.subr.bf16.mxu0 0
    %2757 = vmatpush1.bf16.msra.mxu0 %v2725
    %2758 = vmatprep.subr.bf16.mxu0 0
    %2759 = vmatpush1.bf16.msra.mxu0 %v2724
    %2760 = vmatprep.subr.bf16.mxu0 0
    %2761 = vmatpush1.bf16.msra.mxu0 %v2723
    %2762 = vmatprep.subr.bf16.mxu0 0
    %2763 = vmatpush1.bf16.msra.mxu0 %v2722
    %2764 = vmatprep.subr.bf16.mxu0 0
    %2765 = vmatpush1.bf16.msra.mxu0 %v2721
    %2766 = vmatprep.subr.bf16.mxu0 0
    %2767 = vmatpush1.bf16.msra.mxu0 %v2720
    %2768 = vmatprep.subr.bf16.mxu0 0
    %2769 = vmatpush2.bf16.msra.mxu0 %v2735
    %2770 = vmatprep.subr.bf16.mxu0 0
    %2771 = vmatpush2.bf16.msra.mxu0 %v2734
    %2772 = vmatprep.subr.bf16.mxu0 0
    %2773 = vmatpush2.bf16.msra.mxu0 %v2733
    %2774 = vmatprep.subr.bf16.mxu0 0
    %2775 = vmatpush2.bf16.msra.mxu0 %v2732
    %2776 = vmatprep.subr.bf16.mxu0 0
    %2777 = vmatpush2.bf16.msra.mxu0 %v2731
    %2778 = vmatprep.subr.bf16.mxu0 0
    %2779 = vmatpush2.bf16.msra.mxu0 %v2730
    %2780 = vmatprep.subr.bf16.mxu0 0
    %2781 = vmatpush2.bf16.msra.mxu0 %v2729
    %2782 = vmatprep.subr.bf16.mxu0 0
    %2783 = vmatpush2.bf16.msra.mxu0 %v2728
    %2784 = vmatprep.mubr.bf16.mxu0 %v2623
    %2785 = vmatmul.mubr.bf16.gmra.mxu0 %v2622
    %v2786 = vpop.f32.mrf.mxu0
    %v2787 = vadd.f32 0.0, %v2786
    %v2788 = vpop.f32.mrf.mxu0
    %v2789 = vpop.f32.mrf.mxu0
    %v2790 = vadd.f32 0.0, %v2789
    %v2791 = vpop.f32.mrf.mxu0
    %2792 = vdwg.mxu0
    %v2793 = vadd.f32 %v1849, %v2787
    %v2794 = vadd.f32 %v1850, %v2790
    %v2795 = vld [vmem:[#allocation2 + $0x60] sm:$0xff]
    %v2796 = vld [vmem:[#allocation2 + $0x68] sm:$0xff]
    %v2797 = vld [vmem:[#allocation2 + $0x70] sm:$0xff]
    %v2798 = vld [vmem:[#allocation2 + $0x78] sm:$0xff]
    %v2799 = vld [vmem:[#allocation9] sm:$0xff]
    %v2800 = vld [vmem:[#allocation9 + $0x8] sm:$0xff]
    %v2801 = vld [vmem:[#allocation9 + $0x10] sm:$0xff]
    %v2802 = vld [vmem:[#allocation9 + $0x18] sm:$0xff]
    %v2803 = vld [vmem:[#allocation9 + $0x20] sm:$0xff]
    %v2804 = vld [vmem:[#allocation9 + $0x28] sm:$0xff]
    %v2805 = vld [vmem:[#allocation9 + $0x30] sm:$0xff]
    %v2806 = vld [vmem:[#allocation9 + $0x38] sm:$0xff]
    %v2807 = vld [vmem:[#allocation9 + $0x40] sm:$0xff]
    %v2808 = vld [vmem:[#allocation9 + $0x48] sm:$0xff]
    %v2809 = vld [vmem:[#allocation9 + $0x50] sm:$0xff]
    %v2810 = vld [vmem:[#allocation9 + $0x58] sm:$0xff]
    %v2811 = vld [vmem:[#allocation9 + $0x60] sm:$0xff]
    %v2812 = vld [vmem:[#allocation9 + $0x68] sm:$0xff]
    %v2813 = vld [vmem:[#allocation9 + $0x70] sm:$0xff]
    %v2814 = vld [vmem:[#allocation9 + $0x78] sm:$0xff]
    %v2815 = vld [vmem:[#allocation9 + $0x80] sm:$0xff]
    %v2816 = vld [vmem:[#allocation9 + $0x88] sm:$0xff]
    %v2817 = vld [vmem:[#allocation9 + $0x90] sm:$0xff]
    %v2818 = vld [vmem:[#allocation9 + $0x98] sm:$0xff]
    %v2819 = vld [vmem:[#allocation9 + $0xa0] sm:$0xff]
    %v2820 = vld [vmem:[#allocation9 + $0xa8] sm:$0xff]
    %v2821 = vld [vmem:[#allocation9 + $0xb0] sm:$0xff]
    %v2822 = vld [vmem:[#allocation9 + $0xb8] sm:$0xff]
    %v2823 = vld [vmem:[#allocation9 + $0xc0] sm:$0xff]
    %v2824 = vld [vmem:[#allocation9 + $0xc8] sm:$0xff]
    %v2825 = vld [vmem:[#allocation9 + $0xd0] sm:$0xff]
    %v2826 = vld [vmem:[#allocation9 + $0xd8] sm:$0xff]
    %v2827 = vld [vmem:[#allocation9 + $0xe0] sm:$0xff]
    %v2828 = vld [vmem:[#allocation9 + $0xe8] sm:$0xff]
    %v2829 = vld [vmem:[#allocation9 + $0xf0] sm:$0xff]
    %v2830 = vld [vmem:[#allocation9 + $0xf8] sm:$0xff]
    %v2863 = vunpack.c.l.b16 %v2799
    %v2864 = vunpack.c.h.b16 %v2799
    %v2865 = vunpack.c.l.b16 %v2800
    %v2866 = vunpack.c.h.b16 %v2800
    %v2867 = vunpack.c.l.b16 %v2801
    %v2868 = vunpack.c.h.b16 %v2801
    %v2869 = vunpack.c.l.b16 %v2802
    %v2870 = vunpack.c.h.b16 %v2802
    %v2871 = vunpack.c.l.b16 %v2803
    %v2872 = vunpack.c.h.b16 %v2803
    %v2873 = vunpack.c.l.b16 %v2804
    %v2874 = vunpack.c.h.b16 %v2804
    %v2875 = vunpack.c.l.b16 %v2805
    %v2876 = vunpack.c.h.b16 %v2805
    %v2877 = vunpack.c.l.b16 %v2806
    %v2878 = vunpack.c.h.b16 %v2806
    %v2879 = vunpack.c.l.b16 %v2807
    %v2880 = vunpack.c.h.b16 %v2807
    %v2881 = vunpack.c.l.b16 %v2808
    %v2882 = vunpack.c.h.b16 %v2808
    %v2883 = vunpack.c.l.b16 %v2809
    %v2884 = vunpack.c.h.b16 %v2809
    %v2885 = vunpack.c.l.b16 %v2810
    %v2886 = vunpack.c.h.b16 %v2810
    %v2887 = vunpack.c.l.b16 %v2811
    %v2888 = vunpack.c.h.b16 %v2811
    %v2889 = vunpack.c.l.b16 %v2812
    %v2890 = vunpack.c.h.b16 %v2812
    %v2891 = vunpack.c.l.b16 %v2813
    %v2892 = vunpack.c.h.b16 %v2813
    %v2893 = vunpack.c.l.b16 %v2814
    %v2894 = vunpack.c.h.b16 %v2814
    %v2895 = vunpack.c.l.b16 %v2815
    %v2896 = vunpack.c.h.b16 %v2815
    %v2897 = vunpack.c.l.b16 %v2816
    %v2898 = vunpack.c.h.b16 %v2816
    %v2899 = vunpack.c.l.b16 %v2817
    %v2900 = vunpack.c.h.b16 %v2817
    %v2901 = vunpack.c.l.b16 %v2818
    %v2902 = vunpack.c.h.b16 %v2818
    %v2903 = vunpack.c.l.b16 %v2819
    %v2904 = vunpack.c.h.b16 %v2819
    %v2905 = vunpack.c.l.b16 %v2820
    %v2906 = vunpack.c.h.b16 %v2820
    %v2907 = vunpack.c.l.b16 %v2821
    %v2908 = vunpack.c.h.b16 %v2821
    %v2909 = vunpack.c.l.b16 %v2822
    %v2910 = vunpack.c.h.b16 %v2822
    %v2911 = vunpack.c.l.b16 %v2823
    %v2912 = vunpack.c.h.b16 %v2823
    %v2913 = vunpack.c.l.b16 %v2824
    %v2914 = vunpack.c.h.b16 %v2824
    %v2915 = vunpack.c.l.b16 %v2825
    %v2916 = vunpack.c.h.b16 %v2825
    %v2917 = vunpack.c.l.b16 %v2826
    %v2918 = vunpack.c.h.b16 %v2826
    %v2919 = vunpack.c.l.b16 %v2827
    %v2920 = vunpack.c.h.b16 %v2827
    %v2921 = vunpack.c.l.b16 %v2828
    %v2922 = vunpack.c.h.b16 %v2828
    %v2923 = vunpack.c.l.b16 %v2829
    %v2924 = vunpack.c.h.b16 %v2829
    %v2925 = vunpack.c.l.b16 %v2830
    %v2926 = vunpack.c.h.b16 %v2830
    %v2927 = vpack.c.b16 %v2865, %v2863
    %v2928 = vpack.c.b16 %v2866, %v2864
    %v2929 = vpack.c.b16 %v2869, %v2867
    %v2930 = vpack.c.b16 %v2870, %v2868
    %v2931 = vpack.c.b16 %v2873, %v2871
    %v2932 = vpack.c.b16 %v2874, %v2872
    %v2933 = vpack.c.b16 %v2877, %v2875
    %v2934 = vpack.c.b16 %v2878, %v2876
    %v2935 = vpack.c.b16 %v2881, %v2879
    %v2936 = vpack.c.b16 %v2882, %v2880
    %v2937 = vpack.c.b16 %v2885, %v2883
    %v2938 = vpack.c.b16 %v2886, %v2884
    %v2939 = vpack.c.b16 %v2889, %v2887
    %v2940 = vpack.c.b16 %v2890, %v2888
    %v2941 = vpack.c.b16 %v2893, %v2891
    %v2942 = vpack.c.b16 %v2894, %v2892
    %v2943 = vpack.c.b16 %v2897, %v2895
    %v2944 = vpack.c.b16 %v2898, %v2896
    %v2945 = vpack.c.b16 %v2901, %v2899
    %v2946 = vpack.c.b16 %v2902, %v2900
    %v2947 = vpack.c.b16 %v2905, %v2903
    %v2948 = vpack.c.b16 %v2906, %v2904
    %v2949 = vpack.c.b16 %v2909, %v2907
    %v2950 = vpack.c.b16 %v2910, %v2908
    %v2951 = vpack.c.b16 %v2913, %v2911
    %v2952 = vpack.c.b16 %v2914, %v2912
    %v2953 = vpack.c.b16 %v2917, %v2915
    %v2954 = vpack.c.b16 %v2918, %v2916
    %v2955 = vpack.c.b16 %v2921, %v2919
    %v2956 = vpack.c.b16 %v2922, %v2920
    %v2957 = vpack.c.b16 %v2925, %v2923
    %v2958 = vpack.c.b16 %v2926, %v2924
    %2991 = vmatprep.subr.bf16.mxu0 %v2942
    %2992 = vmatpush1.bf16.msra.mxu0 %v2941
    %2993 = vmatprep.subr.bf16.mxu0 %v2940
    %2994 = vmatpush1.bf16.msra.mxu0 %v2939
    %2995 = vmatprep.subr.bf16.mxu0 %v2938
    %2996 = vmatpush1.bf16.msra.mxu0 %v2937
    %2997 = vmatprep.subr.bf16.mxu0 %v2936
    %2998 = vmatpush1.bf16.msra.mxu0 %v2935
    %2999 = vmatprep.subr.bf16.mxu0 %v2934
    %3000 = vmatpush1.bf16.msra.mxu0 %v2933
    %3001 = vmatprep.subr.bf16.mxu0 %v2932
    %3002 = vmatpush1.bf16.msra.mxu0 %v2931
    %3003 = vmatprep.subr.bf16.mxu0 %v2930
    %3004 = vmatpush1.bf16.msra.mxu0 %v2929
    %3005 = vmatprep.subr.bf16.mxu0 %v2928
    %3006 = vmatpush1.bf16.msra.mxu0 %v2927
    %3007 = vmatprep.subr.bf16.mxu0 %v2958
    %3008 = vmatpush2.bf16.msra.mxu0 %v2957
    %3009 = vmatprep.subr.bf16.mxu0 %v2956
    %3010 = vmatpush2.bf16.msra.mxu0 %v2955
    %3011 = vmatprep.subr.bf16.mxu0 %v2954
    %3012 = vmatpush2.bf16.msra.mxu0 %v2953
    %3013 = vmatprep.subr.bf16.mxu0 %v2952
    %3014 = vmatpush2.bf16.msra.mxu0 %v2951
    %3015 = vmatprep.subr.bf16.mxu0 %v2950
    %3016 = vmatpush2.bf16.msra.mxu0 %v2949
    %3017 = vmatprep.subr.bf16.mxu0 %v2948
    %3018 = vmatpush2.bf16.msra.mxu0 %v2947
    %3019 = vmatprep.subr.bf16.mxu0 %v2946
    %3020 = vmatpush2.bf16.msra.mxu0 %v2945
    %3021 = vmatprep.subr.bf16.mxu0 %v2944
    %3022 = vmatpush2.bf16.msra.mxu0 %v2943
    %3023 = vmatprep.mubr.bf16.mxu0 %v2099
    %3024 = vmatmul.mubr.bf16.gmra.mxu0 %v2098
    %v3025 = vpop.f32.mrf.mxu0
    %v3026 = vadd.f32 0.0, %v3025
    %v3027 = vpop.f32.mrf.mxu0
    %v3028 = vadd.f32 0.0, %v3027
    %v3029 = vpop.f32.mrf.mxu0
    %v3030 = vadd.f32 0.0, %v3029
    %v3031 = vpop.f32.mrf.mxu0
    %v3032 = vadd.f32 0.0, %v3031
    %3033 = vdwg.mxu0
    %v3034 = vadd.f32 %v2795, %v3026
    %v3035 = vadd.f32 %v2796, %v3028
    %v3036 = vadd.f32 %v2797, %v3030
    %v3037 = vadd.f32 %v2798, %v3032
    %v3038 = vtanh.pop %v3034
    %v3039 = vtanh.pop %v3035
    %v3040 = vtanh.pop %v3036
    %v3041 = vtanh.pop %v3037
    %v3042 = vpack.c.bf16 %v3040, %v3038
    %v3043 = vpack.c.bf16 %v3041, %v3039
    %v3046 = vunpack.c.l.b16 %v3042
    %v3047 = vunpack.c.l.b16 %v3043
    %v3048 = vunpack.c.h.b16 %v3042
    %v3049 = vunpack.c.h.b16 %v3043
    %v3050 = vpack.c.b16 %v3047, %v3046
    %v3051 = vpack.c.b16 %v3049, %v3048
    %3054 = vst [vmem:[#allocation3] sm:$0xff] %v3050
    %3055 = vst [vmem:[#allocation3 + $0x10] sm:$0xff] %v3051
    %v3058 = vunpack.c.l.b16 %v2622
    %v3059 = vunpack.c.l.b16 %v2623
    %v3060 = vunpack.c.h.b16 %v2622
    %v3061 = vunpack.c.h.b16 %v2623
    %v3062 = vpack.c.b16 %v3059, %v3058
    %v3063 = vpack.c.b16 %v3061, %v3060
    %3066 = vst [vmem:[#allocation3 + $0x8] sm:$0xff] %v3062
    %3067 = vst [vmem:[#allocation3 + $0x18] sm:$0xff] %v3063
    %v3068 = vld [vmem:[#allocation3] sm:$0xff]
    %v3069 = vld [vmem:[#allocation3 + $0x8] sm:$0xff]
    %v3070 = vld [vmem:[#allocation3 + $0x10] sm:$0xff]
    %v3071 = vld [vmem:[#allocation3 + $0x18] sm:$0xff]
    %v3072 = vld [vmem:[#allocation10] sm:$0xff]
    %v3073 = vld [vmem:[#allocation10 + $0x8] sm:$0xff]
    %v3074 = vld [vmem:[#allocation10 + $0x10] sm:$0xff]
    %v3075 = vld [vmem:[#allocation10 + $0x18] sm:$0xff]
    %v3076 = vld [vmem:[#allocation10 + $0x20] sm:$0xff]
    %v3077 = vld [vmem:[#allocation10 + $0x28] sm:$0xff]
    %v3078 = vld [vmem:[#allocation10 + $0x30] sm:$0xff]
    %v3079 = vld [vmem:[#allocation10 + $0x38] sm:$0xff]
    %v3080 = vld [vmem:[#allocation10 + $0x40] sm:$0xff]
    %v3081 = vld [vmem:[#allocation10 + $0x48] sm:$0xff]
    %v3082 = vld [vmem:[#allocation10 + $0x50] sm:$0xff]
    %v3083 = vld [vmem:[#allocation10 + $0x58] sm:$0xff]
    %v3084 = vld [vmem:[#allocation10 + $0x60] sm:$0xff]
    %v3085 = vld [vmem:[#allocation10 + $0x68] sm:$0xff]
    %v3086 = vld [vmem:[#allocation10 + $0x70] sm:$0xff]
    %v3087 = vld [vmem:[#allocation10 + $0x78] sm:$0xff]
    %v3088 = vld [vmem:[#allocation10 + $0x80] sm:$0xff]
    %v3089 = vld [vmem:[#allocation10 + $0x88] sm:$0xff]
    %v3090 = vld [vmem:[#allocation10 + $0x90] sm:$0xff]
    %v3091 = vld [vmem:[#allocation10 + $0x98] sm:$0xff]
    %v3092 = vld [vmem:[#allocation10 + $0xa0] sm:$0xff]
    %v3093 = vld [vmem:[#allocation10 + $0xa8] sm:$0xff]
    %v3094 = vld [vmem:[#allocation10 + $0xb0] sm:$0xff]
    %v3095 = vld [vmem:[#allocation10 + $0xb8] sm:$0xff]
    %v3096 = vld [vmem:[#allocation10 + $0xc0] sm:$0xff]
    %v3097 = vld [vmem:[#allocation10 + $0xc8] sm:$0xff]
    %v3098 = vld [vmem:[#allocation10 + $0xd0] sm:$0xff]
    %v3099 = vld [vmem:[#allocation10 + $0xd8] sm:$0xff]
    %v3100 = vld [vmem:[#allocation10 + $0xe0] sm:$0xff]
    %v3101 = vld [vmem:[#allocation10 + $0xe8] sm:$0xff]
    %v3102 = vld [vmem:[#allocation10 + $0xf0] sm:$0xff]
    %v3103 = vld [vmem:[#allocation10 + $0xf8] sm:$0xff]
    %v3104 = vld [vmem:[#allocation10 + $0x100] sm:$0xff]
    %v3105 = vld [vmem:[#allocation10 + $0x108] sm:$0xff]
    %v3106 = vld [vmem:[#allocation10 + $0x110] sm:$0xff]
    %v3107 = vld [vmem:[#allocation10 + $0x118] sm:$0xff]
    %v3108 = vld [vmem:[#allocation10 + $0x120] sm:$0xff]
    %v3109 = vld [vmem:[#allocation10 + $0x128] sm:$0xff]
    %v3110 = vld [vmem:[#allocation10 + $0x130] sm:$0xff]
    %v3111 = vld [vmem:[#allocation10 + $0x138] sm:$0xff]
    %v3112 = vld [vmem:[#allocation10 + $0x140] sm:$0xff]
    %v3113 = vld [vmem:[#allocation10 + $0x148] sm:$0xff]
    %v3114 = vld [vmem:[#allocation10 + $0x150] sm:$0xff]
    %v3115 = vld [vmem:[#allocation10 + $0x158] sm:$0xff]
    %v3116 = vld [vmem:[#allocation10 + $0x160] sm:$0xff]
    %v3117 = vld [vmem:[#allocation10 + $0x168] sm:$0xff]
    %v3118 = vld [vmem:[#allocation10 + $0x170] sm:$0xff]
    %v3119 = vld [vmem:[#allocation10 + $0x178] sm:$0xff]
    %v3120 = vld [vmem:[#allocation10 + $0x180] sm:$0xff]
    %v3121 = vld [vmem:[#allocation10 + $0x188] sm:$0xff]
    %v3122 = vld [vmem:[#allocation10 + $0x190] sm:$0xff]
    %v3123 = vld [vmem:[#allocation10 + $0x198] sm:$0xff]
    %v3124 = vld [vmem:[#allocation10 + $0x1a0] sm:$0xff]
    %v3125 = vld [vmem:[#allocation10 + $0x1a8] sm:$0xff]
    %v3126 = vld [vmem:[#allocation10 + $0x1b0] sm:$0xff]
    %v3127 = vld [vmem:[#allocation10 + $0x1b8] sm:$0xff]
    %v3128 = vld [vmem:[#allocation10 + $0x1c0] sm:$0xff]
    %v3129 = vld [vmem:[#allocation10 + $0x1c8] sm:$0xff]
    %v3130 = vld [vmem:[#allocation10 + $0x1d0] sm:$0xff]
    %v3131 = vld [vmem:[#allocation10 + $0x1d8] sm:$0xff]
    %v3132 = vld [vmem:[#allocation10 + $0x1e0] sm:$0xff]
    %v3133 = vld [vmem:[#allocation10 + $0x1e8] sm:$0xff]
    %v3134 = vld [vmem:[#allocation10 + $0x1f0] sm:$0xff]
    %v3135 = vld [vmem:[#allocation10 + $0x1f8] sm:$0xff]
    %v3140 = vunpack.c.l.b16 %v3068
    %v3141 = vunpack.c.h.b16 %v3068
    %v3142 = vunpack.c.l.b16 %v3069
    %v3143 = vunpack.c.h.b16 %v3069
    %v3144 = vunpack.c.l.b16 %v3070
    %v3145 = vunpack.c.h.b16 %v3070
    %v3146 = vunpack.c.l.b16 %v3071
    %v3147 = vunpack.c.h.b16 %v3071
    %v3148 = vpack.c.b16 %v3144, %v3140
    %v3149 = vpack.c.b16 %v3145, %v3141
    %v3150 = vpack.c.b16 %v3146, %v3142
    %v3151 = vpack.c.b16 %v3147, %v3143
    %v3220 = vunpack.c.l.b16 %v3072
    %v3221 = vunpack.c.h.b16 %v3072
    %v3222 = vunpack.c.l.b16 %v3073
    %v3223 = vunpack.c.h.b16 %v3073
    %v3224 = vunpack.c.l.b16 %v3074
    %v3225 = vunpack.c.h.b16 %v3074
    %v3226 = vunpack.c.l.b16 %v3075
    %v3227 = vunpack.c.h.b16 %v3075
    %v3228 = vunpack.c.l.b16 %v3076
    %v3229 = vunpack.c.h.b16 %v3076
    %v3230 = vunpack.c.l.b16 %v3077
    %v3231 = vunpack.c.h.b16 %v3077
    %v3232 = vunpack.c.l.b16 %v3078
    %v3233 = vunpack.c.h.b16 %v3078
    %v3234 = vunpack.c.l.b16 %v3079
    %v3235 = vunpack.c.h.b16 %v3079
    %v3236 = vunpack.c.l.b16 %v3080
    %v3237 = vunpack.c.h.b16 %v3080
    %v3238 = vunpack.c.l.b16 %v3081
    %v3239 = vunpack.c.h.b16 %v3081
    %v3240 = vunpack.c.l.b16 %v3082
    %v3241 = vunpack.c.h.b16 %v3082
    %v3242 = vunpack.c.l.b16 %v3083
    %v3243 = vunpack.c.h.b16 %v3083
    %v3244 = vunpack.c.l.b16 %v3084
    %v3245 = vunpack.c.h.b16 %v3084
    %v3246 = vunpack.c.l.b16 %v3085
    %v3247 = vunpack.c.h.b16 %v3085
    %v3248 = vunpack.c.l.b16 %v3086
    %v3249 = vunpack.c.h.b16 %v3086
    %v3250 = vunpack.c.l.b16 %v3087
    %v3251 = vunpack.c.h.b16 %v3087
    %v3252 = vunpack.c.l.b16 %v3088
    %v3253 = vunpack.c.h.b16 %v3088
    %v3254 = vunpack.c.l.b16 %v3089
    %v3255 = vunpack.c.h.b16 %v3089
    %v3256 = vunpack.c.l.b16 %v3090
    %v3257 = vunpack.c.h.b16 %v3090
    %v3258 = vunpack.c.l.b16 %v3091
    %v3259 = vunpack.c.h.b16 %v3091
    %v3260 = vunpack.c.l.b16 %v3092
    %v3261 = vunpack.c.h.b16 %v3092
    %v3262 = vunpack.c.l.b16 %v3093
    %v3263 = vunpack.c.h.b16 %v3093
    %v3264 = vunpack.c.l.b16 %v3094
    %v3265 = vunpack.c.h.b16 %v3094
    %v3266 = vunpack.c.l.b16 %v3095
    %v3267 = vunpack.c.h.b16 %v3095
    %v3268 = vunpack.c.l.b16 %v3096
    %v3269 = vunpack.c.h.b16 %v3096
    %v3270 = vunpack.c.l.b16 %v3097
    %v3271 = vunpack.c.h.b16 %v3097
    %v3272 = vunpack.c.l.b16 %v3098
    %v3273 = vunpack.c.h.b16 %v3098
    %v3274 = vunpack.c.l.b16 %v3099
    %v3275 = vunpack.c.h.b16 %v3099
    %v3276 = vunpack.c.l.b16 %v3100
    %v3277 = vunpack.c.h.b16 %v3100
    %v3278 = vunpack.c.l.b16 %v3101
    %v3279 = vunpack.c.h.b16 %v3101
    %v3280 = vunpack.c.l.b16 %v3102
    %v3281 = vunpack.c.h.b16 %v3102
    %v3282 = vunpack.c.l.b16 %v3103
    %v3283 = vunpack.c.h.b16 %v3103
    %v3284 = vunpack.c.l.b16 %v3104
    %v3285 = vunpack.c.h.b16 %v3104
    %v3286 = vunpack.c.l.b16 %v3105
    %v3287 = vunpack.c.h.b16 %v3105
    %v3288 = vunpack.c.l.b16 %v3106
    %v3289 = vunpack.c.h.b16 %v3106
    %v3290 = vunpack.c.l.b16 %v3107
    %v3291 = vunpack.c.h.b16 %v3107
    %v3292 = vunpack.c.l.b16 %v3108
    %v3293 = vunpack.c.h.b16 %v3108
    %v3294 = vunpack.c.l.b16 %v3109
    %v3295 = vunpack.c.h.b16 %v3109
    %v3296 = vunpack.c.l.b16 %v3110
    %v3297 = vunpack.c.h.b16 %v3110
    %v3298 = vunpack.c.l.b16 %v3111
    %v3299 = vunpack.c.h.b16 %v3111
    %v3300 = vunpack.c.l.b16 %v3112
    %v3301 = vunpack.c.h.b16 %v3112
    %v3302 = vunpack.c.l.b16 %v3113
    %v3303 = vunpack.c.h.b16 %v3113
    %v3304 = vunpack.c.l.b16 %v3114
    %v3305 = vunpack.c.h.b16 %v3114
    %v3306 = vunpack.c.l.b16 %v3115
    %v3307 = vunpack.c.h.b16 %v3115
    %v3308 = vunpack.c.l.b16 %v3116
    %v3309 = vunpack.c.h.b16 %v3116
    %v3310 = vunpack.c.l.b16 %v3117
    %v3311 = vunpack.c.h.b16 %v3117
    %v3312 = vunpack.c.l.b16 %v3118
    %v3313 = vunpack.c.h.b16 %v3118
    %v3314 = vunpack.c.l.b16 %v3119
    %v3315 = vunpack.c.h.b16 %v3119
    %v3316 = vunpack.c.l.b16 %v3120
    %v3317 = vunpack.c.h.b16 %v3120
    %v3318 = vunpack.c.l.b16 %v3121
    %v3319 = vunpack.c.h.b16 %v3121
    %v3320 = vunpack.c.l.b16 %v3122
    %v3321 = vunpack.c.h.b16 %v3122
    %v3322 = vunpack.c.l.b16 %v3123
    %v3323 = vunpack.c.h.b16 %v3123
    %v3324 = vunpack.c.l.b16 %v3124
    %v3325 = vunpack.c.h.b16 %v3124
    %v3326 = vunpack.c.l.b16 %v3125
    %v3327 = vunpack.c.h.b16 %v3125
    %v3328 = vunpack.c.l.b16 %v3126
    %v3329 = vunpack.c.h.b16 %v3126
    %v3330 = vunpack.c.l.b16 %v3127
    %v3331 = vunpack.c.h.b16 %v3127
    %v3332 = vunpack.c.l.b16 %v3128
    %v3333 = vunpack.c.h.b16 %v3128
    %v3334 = vunpack.c.l.b16 %v3129
    %v3335 = vunpack.c.h.b16 %v3129
    %v3336 = vunpack.c.l.b16 %v3130
    %v3337 = vunpack.c.h.b16 %v3130
    %v3338 = vunpack.c.l.b16 %v3131
    %v3339 = vunpack.c.h.b16 %v3131
    %v3340 = vunpack.c.l.b16 %v3132
    %v3341 = vunpack.c.h.b16 %v3132
    %v3342 = vunpack.c.l.b16 %v3133
    %v3343 = vunpack.c.h.b16 %v3133
    %v3344 = vunpack.c.l.b16 %v3134
    %v3345 = vunpack.c.h.b16 %v3134
    %v3346 = vunpack.c.l.b16 %v3135
    %v3347 = vunpack.c.h.b16 %v3135
    %v3348 = vpack.c.b16 %v3222, %v3220
    %v3349 = vpack.c.b16 %v3223, %v3221
    %v3350 = vpack.c.b16 %v3226, %v3224
    %v3351 = vpack.c.b16 %v3227, %v3225
    %v3352 = vpack.c.b16 %v3230, %v3228
    %v3353 = vpack.c.b16 %v3231, %v3229
    %v3354 = vpack.c.b16 %v3234, %v3232
    %v3355 = vpack.c.b16 %v3235, %v3233
    %v3356 = vpack.c.b16 %v3238, %v3236
    %v3357 = vpack.c.b16 %v3239, %v3237
    %v3358 = vpack.c.b16 %v3242, %v3240
    %v3359 = vpack.c.b16 %v3243, %v3241
    %v3360 = vpack.c.b16 %v3246, %v3244
    %v3361 = vpack.c.b16 %v3247, %v3245
    %v3362 = vpack.c.b16 %v3250, %v3248
    %v3363 = vpack.c.b16 %v3251, %v3249
    %v3364 = vpack.c.b16 %v3254, %v3252
    %v3365 = vpack.c.b16 %v3255, %v3253
    %v3366 = vpack.c.b16 %v3258, %v3256
    %v3367 = vpack.c.b16 %v3259, %v3257
    %v3368 = vpack.c.b16 %v3262, %v3260
    %v3369 = vpack.c.b16 %v3263, %v3261
    %v3370 = vpack.c.b16 %v3266, %v3264
    %v3371 = vpack.c.b16 %v3267, %v3265
    %v3372 = vpack.c.b16 %v3270, %v3268
    %v3373 = vpack.c.b16 %v3271, %v3269
    %v3374 = vpack.c.b16 %v3274, %v3272
    %v3375 = vpack.c.b16 %v3275, %v3273
    %v3376 = vpack.c.b16 %v3278, %v3276
    %v3377 = vpack.c.b16 %v3279, %v3277
    %v3378 = vpack.c.b16 %v3282, %v3280
    %v3379 = vpack.c.b16 %v3283, %v3281
    %v3380 = vpack.c.b16 %v3286, %v3284
    %v3381 = vpack.c.b16 %v3287, %v3285
    %v3382 = vpack.c.b16 %v3290, %v3288
    %v3383 = vpack.c.b16 %v3291, %v3289
    %v3384 = vpack.c.b16 %v3294, %v3292
    %v3385 = vpack.c.b16 %v3295, %v3293
    %v3386 = vpack.c.b16 %v3298, %v3296
    %v3387 = vpack.c.b16 %v3299, %v3297
    %v3388 = vpack.c.b16 %v3302, %v3300
    %v3389 = vpack.c.b16 %v3303, %v3301
    %v3390 = vpack.c.b16 %v3306, %v3304
    %v3391 = vpack.c.b16 %v3307, %v3305
    %v3392 = vpack.c.b16 %v3310, %v3308
    %v3393 = vpack.c.b16 %v3311, %v3309
    %v3394 = vpack.c.b16 %v3314, %v3312
    %v3395 = vpack.c.b16 %v3315, %v3313
    %v3396 = vpack.c.b16 %v3318, %v3316
    %v3397 = vpack.c.b16 %v3319, %v3317
    %v3398 = vpack.c.b16 %v3322, %v3320
    %v3399 = vpack.c.b16 %v3323, %v3321
    %v3400 = vpack.c.b16 %v3326, %v3324
    %v3401 = vpack.c.b16 %v3327, %v3325
    %v3402 = vpack.c.b16 %v3330, %v3328
    %v3403 = vpack.c.b16 %v3331, %v3329
    %v3404 = vpack.c.b16 %v3334, %v3332
    %v3405 = vpack.c.b16 %v3335, %v3333
    %v3406 = vpack.c.b16 %v3338, %v3336
    %v3407 = vpack.c.b16 %v3339, %v3337
    %v3408 = vpack.c.b16 %v3342, %v3340
    %v3409 = vpack.c.b16 %v3343, %v3341
    %v3410 = vpack.c.b16 %v3346, %v3344
    %v3411 = vpack.c.b16 %v3347, %v3345
    %3476 = vmatprep.subr.bf16.mxu0 %v3363
    %3477 = vmatpush1.bf16.msra.mxu0 %v3362
    %3478 = vmatprep.subr.bf16.mxu0 %v3361
    %3479 = vmatpush1.bf16.msra.mxu0 %v3360
    %3480 = vmatprep.subr.bf16.mxu0 %v3359
    %3481 = vmatpush1.bf16.msra.mxu0 %v3358
    %3482 = vmatprep.subr.bf16.mxu0 %v3357
    %3483 = vmatpush1.bf16.msra.mxu0 %v3356
    %3484 = vmatprep.subr.bf16.mxu0 %v3355
    %3485 = vmatpush1.bf16.msra.mxu0 %v3354
    %3486 = vmatprep.subr.bf16.mxu0 %v3353
    %3487 = vmatpush1.bf16.msra.mxu0 %v3352
    %3488 = vmatprep.subr.bf16.mxu0 %v3351
    %3489 = vmatpush1.bf16.msra.mxu0 %v3350
    %3490 = vmatprep.subr.bf16.mxu0 %v3349
    %3491 = vmatpush1.bf16.msra.mxu0 %v3348
    %3492 = vmatprep.subr.bf16.mxu0 %v3379
    %3493 = vmatpush2.bf16.msra.mxu0 %v3378
    %3494 = vmatprep.subr.bf16.mxu0 %v3377
    %3495 = vmatpush2.bf16.msra.mxu0 %v3376
    %3496 = vmatprep.subr.bf16.mxu0 %v3375
    %3497 = vmatpush2.bf16.msra.mxu0 %v3374
    %3498 = vmatprep.subr.bf16.mxu0 %v3373
    %3499 = vmatpush2.bf16.msra.mxu0 %v3372
    %3500 = vmatprep.subr.bf16.mxu0 %v3371
    %3501 = vmatpush2.bf16.msra.mxu0 %v3370
    %3502 = vmatprep.subr.bf16.mxu0 %v3369
    %3503 = vmatpush2.bf16.msra.mxu0 %v3368
    %3504 = vmatprep.subr.bf16.mxu0 %v3367
    %3505 = vmatpush2.bf16.msra.mxu0 %v3366
    %3506 = vmatprep.subr.bf16.mxu0 %v3365
    %3507 = vmatpush2.bf16.msra.mxu0 %v3364
    %3508 = vmatprep.mubr.bf16.mxu0 %v3149
    %3509 = vmatmul.mubr.bf16.gmra.mxu0 %v3148
    %v3510 = vpop.f32.mrf.mxu0
    %v3511 = vadd.f32 %v471, %v3510
    %v3512 = vpop.f32.mrf.mxu0
    %v3513 = vadd.f32 %v475, %v3512
    %v3514 = vpop.f32.mrf.mxu0
    %v3515 = vadd.f32 %v471, %v3514
    %v3516 = vpop.f32.mrf.mxu0
    %v3517 = vadd.f32 %v475, %v3516
    %3518 = vdwg.mxu0
    %3519 = vmatprep.subr.bf16.mxu0 %v3395
    %3520 = vmatpush1.bf16.msra.mxu0 %v3394
    %3521 = vmatprep.subr.bf16.mxu0 %v3393
    %3522 = vmatpush1.bf16.msra.mxu0 %v3392
    %3523 = vmatprep.subr.bf16.mxu0 %v3391
    %3524 = vmatpush1.bf16.msra.mxu0 %v3390
    %3525 = vmatprep.subr.bf16.mxu0 %v3389
    %3526 = vmatpush1.bf16.msra.mxu0 %v3388
    %3527 = vmatprep.subr.bf16.mxu0 %v3387
    %3528 = vmatpush1.bf16.msra.mxu0 %v3386
    %3529 = vmatprep.subr.bf16.mxu0 %v3385
    %3530 = vmatpush1.bf16.msra.mxu0 %v3384
    %3531 = vmatprep.subr.bf16.mxu0 %v3383
    %3532 = vmatpush1.bf16.msra.mxu0 %v3382
    %3533 = vmatprep.subr.bf16.mxu0 %v3381
    %3534 = vmatpush1.bf16.msra.mxu0 %v3380
    %3535 = vmatprep.subr.bf16.mxu0 %v3411
    %3536 = vmatpush2.bf16.msra.mxu0 %v3410
    %3537 = vmatprep.subr.bf16.mxu0 %v3409
    %3538 = vmatpush2.bf16.msra.mxu0 %v3408
    %3539 = vmatprep.subr.bf16.mxu0 %v3407
    %3540 = vmatpush2.bf16.msra.mxu0 %v3406
    %3541 = vmatprep.subr.bf16.mxu0 %v3405
    %3542 = vmatpush2.bf16.msra.mxu0 %v3404
    %3543 = vmatprep.subr.bf16.mxu0 %v3403
    %3544 = vmatpush2.bf16.msra.mxu0 %v3402
    %3545 = vmatprep.subr.bf16.mxu0 %v3401
    %3546 = vmatpush2.bf16.msra.mxu0 %v3400
    %3547 = vmatprep.subr.bf16.mxu0 %v3399
    %3548 = vmatpush2.bf16.msra.mxu0 %v3398
    %3549 = vmatprep.subr.bf16.mxu0 %v3397
    %3550 = vmatpush2.bf16.msra.mxu0 %v3396
    %3551 = vmatprep.mubr.bf16.mxu0 %v3151
    %3552 = vmatmul.mubr.bf16.gmra.mxu0 %v3150
    %v3553 = vpop.f32.mrf.mxu0
    %v3554 = vadd.f32 %v3511, %v3553
    %v3555 = vpop.f32.mrf.mxu0
    %v3556 = vadd.f32 %v3513, %v3555
    %v3557 = vpop.f32.mrf.mxu0
    %v3558 = vadd.f32 %v3515, %v3557
    %v3559 = vpop.f32.mrf.mxu0
    %v3560 = vadd.f32 %v3517, %v3559
    %3561 = vdwg.mxu0
    %v3562 = vtanh.pop %v3554
    %v3563 = vtanh.pop %v3556
    %v3564 = vtanh.pop %v3558
    %v3565 = vtanh.pop %v3560
    %v3566 = vpack.c.bf16 %v3564, %v3562
    %v3567 = vpack.c.bf16 %v3565, %v3563
    %v3568 = vld [vmem:[#allocation12 + $0x180] sm:$0xf]
    %v3569 = vld [vmem:[#allocation12 + $0x184] sm:$0xf]
    %v3570 = vld [vmem:[#allocation12 + $0x188] sm:$0xf]
    %v3571 = vld [vmem:[#allocation12 + $0x18c] sm:$0xf]
    %v3572 = vld [vmem:[#allocation12 + $0x190] sm:$0xf]
    %v3573 = vld [vmem:[#allocation12 + $0x194] sm:$0xf]
    %v3574 = vld [vmem:[#allocation12 + $0x198] sm:$0xf]
    %v3575 = vld [vmem:[#allocation12 + $0x19c] sm:$0xf]
    %v3576 = vld [vmem:[#allocation12 + $0x1a0] sm:$0xf]
    %v3577 = vld [vmem:[#allocation12 + $0x1a4] sm:$0xf]
    %v3578 = vld [vmem:[#allocation12 + $0x1a8] sm:$0xf]
    %v3579 = vld [vmem:[#allocation12 + $0x1ac] sm:$0xf]
    %v3580 = vld [vmem:[#allocation12 + $0x1b0] sm:$0xf]
    %v3581 = vld [vmem:[#allocation12 + $0x1b4] sm:$0xf]
    %v3582 = vld [vmem:[#allocation12 + $0x1b8] sm:$0xf]
    %v3583 = vld [vmem:[#allocation12 + $0x1bc] sm:$0xf]
    %v3584 = vld [vmem:[#allocation12 + $0x1c0] sm:$0xf]
    %v3585 = vld [vmem:[#allocation12 + $0x1c4] sm:$0xf]
    %v3586 = vld [vmem:[#allocation12 + $0x1c8] sm:$0xf]
    %v3587 = vld [vmem:[#allocation12 + $0x1cc] sm:$0xf]
    %v3588 = vld [vmem:[#allocation12 + $0x1d0] sm:$0xf]
    %v3589 = vld [vmem:[#allocation12 + $0x1d4] sm:$0xf]
    %v3590 = vld [vmem:[#allocation12 + $0x1d8] sm:$0xf]
    %v3591 = vld [vmem:[#allocation12 + $0x1dc] sm:$0xf]
    %v3592 = vld [vmem:[#allocation12 + $0x1e0] sm:$0xf]
    %v3593 = vld [vmem:[#allocation12 + $0x1e4] sm:$0xf]
    %v3594 = vld [vmem:[#allocation12 + $0x1e8] sm:$0xf]
    %v3595 = vld [vmem:[#allocation12 + $0x1ec] sm:$0xf]
    %v3596 = vld [vmem:[#allocation12 + $0x1f0] sm:$0xf]
    %v3597 = vld [vmem:[#allocation12 + $0x1f4] sm:$0xf]
    %v3598 = vld [vmem:[#allocation12 + $0x1f8] sm:$0xf]
    %v3599 = vld [vmem:[#allocation12 + $0x1fc] sm:$0xf]
    %v3632 = vunpack.c.l.b16 %v3568
    %v3633 = vunpack.c.l.b16 %v3569
    %v3634 = vunpack.c.l.b16 %v3570
    %v3635 = vunpack.c.l.b16 %v3571
    %v3636 = vunpack.c.l.b16 %v3572
    %v3637 = vunpack.c.l.b16 %v3573
    %v3638 = vunpack.c.l.b16 %v3574
    %v3639 = vunpack.c.l.b16 %v3575
    %v3640 = vunpack.c.l.b16 %v3576
    %v3641 = vunpack.c.l.b16 %v3577
    %v3642 = vunpack.c.l.b16 %v3578
    %v3643 = vunpack.c.l.b16 %v3579
    %v3644 = vunpack.c.l.b16 %v3580
    %v3645 = vunpack.c.l.b16 %v3581
    %v3646 = vunpack.c.l.b16 %v3582
    %v3647 = vunpack.c.l.b16 %v3583
    %v3648 = vunpack.c.l.b16 %v3584
    %v3649 = vunpack.c.l.b16 %v3585
    %v3650 = vunpack.c.l.b16 %v3586
    %v3651 = vunpack.c.l.b16 %v3587
    %v3652 = vunpack.c.l.b16 %v3588
    %v3653 = vunpack.c.l.b16 %v3589
    %v3654 = vunpack.c.l.b16 %v3590
    %v3655 = vunpack.c.l.b16 %v3591
    %v3656 = vunpack.c.l.b16 %v3592
    %v3657 = vunpack.c.l.b16 %v3593
    %v3658 = vunpack.c.l.b16 %v3594
    %v3659 = vunpack.c.l.b16 %v3595
    %v3660 = vunpack.c.l.b16 %v3596
    %v3661 = vunpack.c.l.b16 %v3597
    %v3662 = vunpack.c.l.b16 %v3598
    %v3663 = vunpack.c.l.b16 %v3599
    %v3664 = vpack.c.b16 %v3633, %v3632
    %v3665 = vpack.c.b16 %v3635, %v3634
    %v3666 = vpack.c.b16 %v3637, %v3636
    %v3667 = vpack.c.b16 %v3639, %v3638
    %v3668 = vpack.c.b16 %v3641, %v3640
    %v3669 = vpack.c.b16 %v3643, %v3642
    %v3670 = vpack.c.b16 %v3645, %v3644
    %v3671 = vpack.c.b16 %v3647, %v3646
    %v3672 = vpack.c.b16 %v3649, %v3648
    %v3673 = vpack.c.b16 %v3651, %v3650
    %v3674 = vpack.c.b16 %v3653, %v3652
    %v3675 = vpack.c.b16 %v3655, %v3654
    %v3676 = vpack.c.b16 %v3657, %v3656
    %v3677 = vpack.c.b16 %v3659, %v3658
    %v3678 = vpack.c.b16 %v3661, %v3660
    %v3679 = vpack.c.b16 %v3663, %v3662
    %3696 = vmatprep.subr.bf16.mxu0 0
    %3697 = vmatpush1.bf16.msra.mxu0 %v3671
    %3698 = vmatprep.subr.bf16.mxu0 0
    %3699 = vmatpush1.bf16.msra.mxu0 %v3670
    %3700 = vmatprep.subr.bf16.mxu0 0
    %3701 = vmatpush1.bf16.msra.mxu0 %v3669
    %3702 = vmatprep.subr.bf16.mxu0 0
    %3703 = vmatpush1.bf16.msra.mxu0 %v3668
    %3704 = vmatprep.subr.bf16.mxu0 0
    %3705 = vmatpush1.bf16.msra.mxu0 %v3667
    %3706 = vmatprep.subr.bf16.mxu0 0
    %3707 = vmatpush1.bf16.msra.mxu0 %v3666
    %3708 = vmatprep.subr.bf16.mxu0 0
    %3709 = vmatpush1.bf16.msra.mxu0 %v3665
    %3710 = vmatprep.subr.bf16.mxu0 0
    %3711 = vmatpush1.bf16.msra.mxu0 %v3664
    %3712 = vmatprep.subr.bf16.mxu0 0
    %3713 = vmatpush2.bf16.msra.mxu0 %v3679
    %3714 = vmatprep.subr.bf16.mxu0 0
    %3715 = vmatpush2.bf16.msra.mxu0 %v3678
    %3716 = vmatprep.subr.bf16.mxu0 0
    %3717 = vmatpush2.bf16.msra.mxu0 %v3677
    %3718 = vmatprep.subr.bf16.mxu0 0
    %3719 = vmatpush2.bf16.msra.mxu0 %v3676
    %3720 = vmatprep.subr.bf16.mxu0 0
    %3721 = vmatpush2.bf16.msra.mxu0 %v3675
    %3722 = vmatprep.subr.bf16.mxu0 0
    %3723 = vmatpush2.bf16.msra.mxu0 %v3674
    %3724 = vmatprep.subr.bf16.mxu0 0
    %3725 = vmatpush2.bf16.msra.mxu0 %v3673
    %3726 = vmatprep.subr.bf16.mxu0 0
    %3727 = vmatpush2.bf16.msra.mxu0 %v3672
    %3728 = vmatprep.mubr.bf16.mxu0 %v3567
    %3729 = vmatmul.mubr.bf16.gmra.mxu0 %v3566
    %v3730 = vpop.f32.mrf.mxu0
    %v3731 = vadd.f32 0.0, %v3730
    %v3732 = vpop.f32.mrf.mxu0
    %v3733 = vpop.f32.mrf.mxu0
    %v3734 = vadd.f32 0.0, %v3733
    %v3735 = vpop.f32.mrf.mxu0
    %3736 = vdwg.mxu0
    %v3737 = vadd.f32 %v2793, %v3731
    %v3738 = vadd.f32 %v2794, %v3734
    %v3739 = vld [vmem:[#allocation2 + $0x80] sm:$0xff]
    %v3740 = vld [vmem:[#allocation2 + $0x88] sm:$0xff]
    %v3741 = vld [vmem:[#allocation2 + $0x90] sm:$0xff]
    %v3742 = vld [vmem:[#allocation2 + $0x98] sm:$0xff]
    %v3743 = vld [vmem:[#allocation9] sm:$0xff]
    %v3744 = vld [vmem:[#allocation9 + $0x8] sm:$0xff]
    %v3745 = vld [vmem:[#allocation9 + $0x10] sm:$0xff]
    %v3746 = vld [vmem:[#allocation9 + $0x18] sm:$0xff]
    %v3747 = vld [vmem:[#allocation9 + $0x20] sm:$0xff]
    %v3748 = vld [vmem:[#allocation9 + $0x28] sm:$0xff]
    %v3749 = vld [vmem:[#allocation9 + $0x30] sm:$0xff]
    %v3750 = vld [vmem:[#allocation9 + $0x38] sm:$0xff]
    %v3751 = vld [vmem:[#allocation9 + $0x40] sm:$0xff]
    %v3752 = vld [vmem:[#allocation9 + $0x48] sm:$0xff]
    %v3753 = vld [vmem:[#allocation9 + $0x50] sm:$0xff]
    %v3754 = vld [vmem:[#allocation9 + $0x58] sm:$0xff]
    %v3755 = vld [vmem:[#allocation9 + $0x60] sm:$0xff]
    %v3756 = vld [vmem:[#allocation9 + $0x68] sm:$0xff]
    %v3757 = vld [vmem:[#allocation9 + $0x70] sm:$0xff]
    %v3758 = vld [vmem:[#allocation9 + $0x78] sm:$0xff]
    %v3759 = vld [vmem:[#allocation9 + $0x80] sm:$0xff]
    %v3760 = vld [vmem:[#allocation9 + $0x88] sm:$0xff]
    %v3761 = vld [vmem:[#allocation9 + $0x90] sm:$0xff]
    %v3762 = vld [vmem:[#allocation9 + $0x98] sm:$0xff]
    %v3763 = vld [vmem:[#allocation9 + $0xa0] sm:$0xff]
    %v3764 = vld [vmem:[#allocation9 + $0xa8] sm:$0xff]
    %v3765 = vld [vmem:[#allocation9 + $0xb0] sm:$0xff]
    %v3766 = vld [vmem:[#allocation9 + $0xb8] sm:$0xff]
    %v3767 = vld [vmem:[#allocation9 + $0xc0] sm:$0xff]
    %v3768 = vld [vmem:[#allocation9 + $0xc8] sm:$0xff]
    %v3769 = vld [vmem:[#allocation9 + $0xd0] sm:$0xff]
    %v3770 = vld [vmem:[#allocation9 + $0xd8] sm:$0xff]
    %v3771 = vld [vmem:[#allocation9 + $0xe0] sm:$0xff]
    %v3772 = vld [vmem:[#allocation9 + $0xe8] sm:$0xff]
    %v3773 = vld [vmem:[#allocation9 + $0xf0] sm:$0xff]
    %v3774 = vld [vmem:[#allocation9 + $0xf8] sm:$0xff]
    %v3807 = vunpack.c.l.b16 %v3743
    %v3808 = vunpack.c.h.b16 %v3743
    %v3809 = vunpack.c.l.b16 %v3744
    %v3810 = vunpack.c.h.b16 %v3744
    %v3811 = vunpack.c.l.b16 %v3745
    %v3812 = vunpack.c.h.b16 %v3745
    %v3813 = vunpack.c.l.b16 %v3746
    %v3814 = vunpack.c.h.b16 %v3746
    %v3815 = vunpack.c.l.b16 %v3747
    %v3816 = vunpack.c.h.b16 %v3747
    %v3817 = vunpack.c.l.b16 %v3748
    %v3818 = vunpack.c.h.b16 %v3748
    %v3819 = vunpack.c.l.b16 %v3749
    %v3820 = vunpack.c.h.b16 %v3749
    %v3821 = vunpack.c.l.b16 %v3750
    %v3822 = vunpack.c.h.b16 %v3750
    %v3823 = vunpack.c.l.b16 %v3751
    %v3824 = vunpack.c.h.b16 %v3751
    %v3825 = vunpack.c.l.b16 %v3752
    %v3826 = vunpack.c.h.b16 %v3752
    %v3827 = vunpack.c.l.b16 %v3753
    %v3828 = vunpack.c.h.b16 %v3753
    %v3829 = vunpack.c.l.b16 %v3754
    %v3830 = vunpack.c.h.b16 %v3754
    %v3831 = vunpack.c.l.b16 %v3755
    %v3832 = vunpack.c.h.b16 %v3755
    %v3833 = vunpack.c.l.b16 %v3756
    %v3834 = vunpack.c.h.b16 %v3756
    %v3835 = vunpack.c.l.b16 %v3757
    %v3836 = vunpack.c.h.b16 %v3757
    %v3837 = vunpack.c.l.b16 %v3758
    %v3838 = vunpack.c.h.b16 %v3758
    %v3839 = vunpack.c.l.b16 %v3759
    %v3840 = vunpack.c.h.b16 %v3759
    %v3841 = vunpack.c.l.b16 %v3760
    %v3842 = vunpack.c.h.b16 %v3760
    %v3843 = vunpack.c.l.b16 %v3761
    %v3844 = vunpack.c.h.b16 %v3761
    %v3845 = vunpack.c.l.b16 %v3762
    %v3846 = vunpack.c.h.b16 %v3762
    %v3847 = vunpack.c.l.b16 %v3763
    %v3848 = vunpack.c.h.b16 %v3763
    %v3849 = vunpack.c.l.b16 %v3764
    %v3850 = vunpack.c.h.b16 %v3764
    %v3851 = vunpack.c.l.b16 %v3765
    %v3852 = vunpack.c.h.b16 %v3765
    %v3853 = vunpack.c.l.b16 %v3766
    %v3854 = vunpack.c.h.b16 %v3766
    %v3855 = vunpack.c.l.b16 %v3767
    %v3856 = vunpack.c.h.b16 %v3767
    %v3857 = vunpack.c.l.b16 %v3768
    %v3858 = vunpack.c.h.b16 %v3768
    %v3859 = vunpack.c.l.b16 %v3769
    %v3860 = vunpack.c.h.b16 %v3769
    %v3861 = vunpack.c.l.b16 %v3770
    %v3862 = vunpack.c.h.b16 %v3770
    %v3863 = vunpack.c.l.b16 %v3771
    %v3864 = vunpack.c.h.b16 %v3771
    %v3865 = vunpack.c.l.b16 %v3772
    %v3866 = vunpack.c.h.b16 %v3772
    %v3867 = vunpack.c.l.b16 %v3773
    %v3868 = vunpack.c.h.b16 %v3773
    %v3869 = vunpack.c.l.b16 %v3774
    %v3870 = vunpack.c.h.b16 %v3774
    %v3871 = vpack.c.b16 %v3809, %v3807
    %v3872 = vpack.c.b16 %v3810, %v3808
    %v3873 = vpack.c.b16 %v3813, %v3811
    %v3874 = vpack.c.b16 %v3814, %v3812
    %v3875 = vpack.c.b16 %v3817, %v3815
    %v3876 = vpack.c.b16 %v3818, %v3816
    %v3877 = vpack.c.b16 %v3821, %v3819
    %v3878 = vpack.c.b16 %v3822, %v3820
    %v3879 = vpack.c.b16 %v3825, %v3823
    %v3880 = vpack.c.b16 %v3826, %v3824
    %v3881 = vpack.c.b16 %v3829, %v3827
    %v3882 = vpack.c.b16 %v3830, %v3828
    %v3883 = vpack.c.b16 %v3833, %v3831
    %v3884 = vpack.c.b16 %v3834, %v3832
    %v3885 = vpack.c.b16 %v3837, %v3835
    %v3886 = vpack.c.b16 %v3838, %v3836
    %v3887 = vpack.c.b16 %v3841, %v3839
    %v3888 = vpack.c.b16 %v3842, %v3840
    %v3889 = vpack.c.b16 %v3845, %v3843
    %v3890 = vpack.c.b16 %v3846, %v3844
    %v3891 = vpack.c.b16 %v3849, %v3847
    %v3892 = vpack.c.b16 %v3850, %v3848
    %v3893 = vpack.c.b16 %v3853, %v3851
    %v3894 = vpack.c.b16 %v3854, %v3852
    %v3895 = vpack.c.b16 %v3857, %v3855
    %v3896 = vpack.c.b16 %v3858, %v3856
    %v3897 = vpack.c.b16 %v3861, %v3859
    %v3898 = vpack.c.b16 %v3862, %v3860
    %v3899 = vpack.c.b16 %v3865, %v3863
    %v3900 = vpack.c.b16 %v3866, %v3864
    %v3901 = vpack.c.b16 %v3869, %v3867
    %v3902 = vpack.c.b16 %v3870, %v3868
    %3935 = vmatprep.subr.bf16.mxu0 %v3886
    %3936 = vmatpush1.bf16.msra.mxu0 %v3885
    %3937 = vmatprep.subr.bf16.mxu0 %v3884
    %3938 = vmatpush1.bf16.msra.mxu0 %v3883
    %3939 = vmatprep.subr.bf16.mxu0 %v3882
    %3940 = vmatpush1.bf16.msra.mxu0 %v3881
    %3941 = vmatprep.subr.bf16.mxu0 %v3880
    %3942 = vmatpush1.bf16.msra.mxu0 %v3879
    %3943 = vmatprep.subr.bf16.mxu0 %v3878
    %3944 = vmatpush1.bf16.msra.mxu0 %v3877
    %3945 = vmatprep.subr.bf16.mxu0 %v3876
    %3946 = vmatpush1.bf16.msra.mxu0 %v3875
    %3947 = vmatprep.subr.bf16.mxu0 %v3874
    %3948 = vmatpush1.bf16.msra.mxu0 %v3873
    %3949 = vmatprep.subr.bf16.mxu0 %v3872
    %3950 = vmatpush1.bf16.msra.mxu0 %v3871
    %3951 = vmatprep.subr.bf16.mxu0 %v3902
    %3952 = vmatpush2.bf16.msra.mxu0 %v3901
    %3953 = vmatprep.subr.bf16.mxu0 %v3900
    %3954 = vmatpush2.bf16.msra.mxu0 %v3899
    %3955 = vmatprep.subr.bf16.mxu0 %v3898
    %3956 = vmatpush2.bf16.msra.mxu0 %v3897
    %3957 = vmatprep.subr.bf16.mxu0 %v3896
    %3958 = vmatpush2.bf16.msra.mxu0 %v3895
    %3959 = vmatprep.subr.bf16.mxu0 %v3894
    %3960 = vmatpush2.bf16.msra.mxu0 %v3893
    %3961 = vmatprep.subr.bf16.mxu0 %v3892
    %3962 = vmatpush2.bf16.msra.mxu0 %v3891
    %3963 = vmatprep.subr.bf16.mxu0 %v3890
    %3964 = vmatpush2.bf16.msra.mxu0 %v3889
    %3965 = vmatprep.subr.bf16.mxu0 %v3888
    %3966 = vmatpush2.bf16.msra.mxu0 %v3887
    %3967 = vmatprep.mubr.bf16.mxu0 %v3043
    %3968 = vmatmul.mubr.bf16.gmra.mxu0 %v3042
    %v3969 = vpop.f32.mrf.mxu0
    %v3970 = vadd.f32 0.0, %v3969
    %v3971 = vpop.f32.mrf.mxu0
    %v3972 = vadd.f32 0.0, %v3971
    %v3973 = vpop.f32.mrf.mxu0
    %v3974 = vadd.f32 0.0, %v3973
    %v3975 = vpop.f32.mrf.mxu0
    %v3976 = vadd.f32 0.0, %v3975
    %3977 = vdwg.mxu0
    %v3978 = vadd.f32 %v3739, %v3970
    %v3979 = vadd.f32 %v3740, %v3972
    %v3980 = vadd.f32 %v3741, %v3974
    %v3981 = vadd.f32 %v3742, %v3976
    %v3982 = vtanh.pop %v3978
    %v3983 = vtanh.pop %v3979
    %v3984 = vtanh.pop %v3980
    %v3985 = vtanh.pop %v3981
    %v3986 = vpack.c.bf16 %v3984, %v3982
    %v3987 = vpack.c.bf16 %v3985, %v3983
    %v3990 = vunpack.c.l.b16 %v3986
    %v3991 = vunpack.c.l.b16 %v3987
    %v3992 = vunpack.c.h.b16 %v3986
    %v3993 = vunpack.c.h.b16 %v3987
    %v3994 = vpack.c.b16 %v3991, %v3990
    %v3995 = vpack.c.b16 %v3993, %v3992
    %3998 = vst [vmem:[#allocation3] sm:$0xff] %v3994
    %3999 = vst [vmem:[#allocation3 + $0x10] sm:$0xff] %v3995
    %v4002 = vunpack.c.l.b16 %v3566
    %v4003 = vunpack.c.l.b16 %v3567
    %v4004 = vunpack.c.h.b16 %v3566
    %v4005 = vunpack.c.h.b16 %v3567
    %v4006 = vpack.c.b16 %v4003, %v4002
    %v4007 = vpack.c.b16 %v4005, %v4004
    %4010 = vst [vmem:[#allocation3 + $0x8] sm:$0xff] %v4006
    %4011 = vst [vmem:[#allocation3 + $0x18] sm:$0xff] %v4007
    %v4012 = vld [vmem:[#allocation3] sm:$0xff]
    %v4013 = vld [vmem:[#allocation3 + $0x8] sm:$0xff]
    %v4014 = vld [vmem:[#allocation3 + $0x10] sm:$0xff]
    %v4015 = vld [vmem:[#allocation3 + $0x18] sm:$0xff]
    %v4016 = vld [vmem:[#allocation10] sm:$0xff]
    %v4017 = vld [vmem:[#allocation10 + $0x8] sm:$0xff]
    %v4018 = vld [vmem:[#allocation10 + $0x10] sm:$0xff]
    %v4019 = vld [vmem:[#allocation10 + $0x18] sm:$0xff]
    %v4020 = vld [vmem:[#allocation10 + $0x20] sm:$0xff]
    %v4021 = vld [vmem:[#allocation10 + $0x28] sm:$0xff]
    %v4022 = vld [vmem:[#allocation10 + $0x30] sm:$0xff]
    %v4023 = vld [vmem:[#allocation10 + $0x38] sm:$0xff]
    %v4024 = vld [vmem:[#allocation10 + $0x40] sm:$0xff]
    %v4025 = vld [vmem:[#allocation10 + $0x48] sm:$0xff]
    %v4026 = vld [vmem:[#allocation10 + $0x50] sm:$0xff]
    %v4027 = vld [vmem:[#allocation10 + $0x58] sm:$0xff]
    %v4028 = vld [vmem:[#allocation10 + $0x60] sm:$0xff]
    %v4029 = vld [vmem:[#allocation10 + $0x68] sm:$0xff]
    %v4030 = vld [vmem:[#allocation10 + $0x70] sm:$0xff]
    %v4031 = vld [vmem:[#allocation10 + $0x78] sm:$0xff]
    %v4032 = vld [vmem:[#allocation10 + $0x80] sm:$0xff]
    %v4033 = vld [vmem:[#allocation10 + $0x88] sm:$0xff]
    %v4034 = vld [vmem:[#allocation10 + $0x90] sm:$0xff]
    %v4035 = vld [vmem:[#allocation10 + $0x98] sm:$0xff]
    %v4036 = vld [vmem:[#allocation10 + $0xa0] sm:$0xff]
    %v4037 = vld [vmem:[#allocation10 + $0xa8] sm:$0xff]
    %v4038 = vld [vmem:[#allocation10 + $0xb0] sm:$0xff]
    %v4039 = vld [vmem:[#allocation10 + $0xb8] sm:$0xff]
    %v4040 = vld [vmem:[#allocation10 + $0xc0] sm:$0xff]
    %v4041 = vld [vmem:[#allocation10 + $0xc8] sm:$0xff]
    %v4042 = vld [vmem:[#allocation10 + $0xd0] sm:$0xff]
    %v4043 = vld [vmem:[#allocation10 + $0xd8] sm:$0xff]
    %v4044 = vld [vmem:[#allocation10 + $0xe0] sm:$0xff]
    %v4045 = vld [vmem:[#allocation10 + $0xe8] sm:$0xff]
    %v4046 = vld [vmem:[#allocation10 + $0xf0] sm:$0xff]
    %v4047 = vld [vmem:[#allocation10 + $0xf8] sm:$0xff]
    %v4048 = vld [vmem:[#allocation10 + $0x100] sm:$0xff]
    %v4049 = vld [vmem:[#allocation10 + $0x108] sm:$0xff]
    %v4050 = vld [vmem:[#allocation10 + $0x110] sm:$0xff]
    %v4051 = vld [vmem:[#allocation10 + $0x118] sm:$0xff]
    %v4052 = vld [vmem:[#allocation10 + $0x120] sm:$0xff]
    %v4053 = vld [vmem:[#allocation10 + $0x128] sm:$0xff]
    %v4054 = vld [vmem:[#allocation10 + $0x130] sm:$0xff]
    %v4055 = vld [vmem:[#allocation10 + $0x138] sm:$0xff]
    %v4056 = vld [vmem:[#allocation10 + $0x140] sm:$0xff]
    %v4057 = vld [vmem:[#allocation10 + $0x148] sm:$0xff]
    %v4058 = vld [vmem:[#allocation10 + $0x150] sm:$0xff]
    %v4059 = vld [vmem:[#allocation10 + $0x158] sm:$0xff]
    %v4060 = vld [vmem:[#allocation10 + $0x160] sm:$0xff]
    %v4061 = vld [vmem:[#allocation10 + $0x168] sm:$0xff]
    %v4062 = vld [vmem:[#allocation10 + $0x170] sm:$0xff]
    %v4063 = vld [vmem:[#allocation10 + $0x178] sm:$0xff]
    %v4064 = vld [vmem:[#allocation10 + $0x180] sm:$0xff]
    %v4065 = vld [vmem:[#allocation10 + $0x188] sm:$0xff]
    %v4066 = vld [vmem:[#allocation10 + $0x190] sm:$0xff]
    %v4067 = vld [vmem:[#allocation10 + $0x198] sm:$0xff]
    %v4068 = vld [vmem:[#allocation10 + $0x1a0] sm:$0xff]
    %v4069 = vld [vmem:[#allocation10 + $0x1a8] sm:$0xff]
    %v4070 = vld [vmem:[#allocation10 + $0x1b0] sm:$0xff]
    %v4071 = vld [vmem:[#allocation10 + $0x1b8] sm:$0xff]
    %v4072 = vld [vmem:[#allocation10 + $0x1c0] sm:$0xff]
    %v4073 = vld [vmem:[#allocation10 + $0x1c8] sm:$0xff]
    %v4074 = vld [vmem:[#allocation10 + $0x1d0] sm:$0xff]
    %v4075 = vld [vmem:[#allocation10 + $0x1d8] sm:$0xff]
    %v4076 = vld [vmem:[#allocation10 + $0x1e0] sm:$0xff]
    %v4077 = vld [vmem:[#allocation10 + $0x1e8] sm:$0xff]
    %v4078 = vld [vmem:[#allocation10 + $0x1f0] sm:$0xff]
    %v4079 = vld [vmem:[#allocation10 + $0x1f8] sm:$0xff]
    %v4084 = vunpack.c.l.b16 %v4012
    %v4085 = vunpack.c.h.b16 %v4012
    %v4086 = vunpack.c.l.b16 %v4013
    %v4087 = vunpack.c.h.b16 %v4013
    %v4088 = vunpack.c.l.b16 %v4014
    %v4089 = vunpack.c.h.b16 %v4014
    %v4090 = vunpack.c.l.b16 %v4015
    %v4091 = vunpack.c.h.b16 %v4015
    %v4092 = vpack.c.b16 %v4088, %v4084
    %v4093 = vpack.c.b16 %v4089, %v4085
    %v4094 = vpack.c.b16 %v4090, %v4086
    %v4095 = vpack.c.b16 %v4091, %v4087
    %v4164 = vunpack.c.l.b16 %v4016
    %v4165 = vunpack.c.h.b16 %v4016
    %v4166 = vunpack.c.l.b16 %v4017
    %v4167 = vunpack.c.h.b16 %v4017
    %v4168 = vunpack.c.l.b16 %v4018
    %v4169 = vunpack.c.h.b16 %v4018
    %v4170 = vunpack.c.l.b16 %v4019
    %v4171 = vunpack.c.h.b16 %v4019
    %v4172 = vunpack.c.l.b16 %v4020
    %v4173 = vunpack.c.h.b16 %v4020
    %v4174 = vunpack.c.l.b16 %v4021
    %v4175 = vunpack.c.h.b16 %v4021
    %v4176 = vunpack.c.l.b16 %v4022
    %v4177 = vunpack.c.h.b16 %v4022
    %v4178 = vunpack.c.l.b16 %v4023
    %v4179 = vunpack.c.h.b16 %v4023
    %v4180 = vunpack.c.l.b16 %v4024
    %v4181 = vunpack.c.h.b16 %v4024
    %v4182 = vunpack.c.l.b16 %v4025
    %v4183 = vunpack.c.h.b16 %v4025
    %v4184 = vunpack.c.l.b16 %v4026
    %v4185 = vunpack.c.h.b16 %v4026
    %v4186 = vunpack.c.l.b16 %v4027
    %v4187 = vunpack.c.h.b16 %v4027
    %v4188 = vunpack.c.l.b16 %v4028
    %v4189 = vunpack.c.h.b16 %v4028
    %v4190 = vunpack.c.l.b16 %v4029
    %v4191 = vunpack.c.h.b16 %v4029
    %v4192 = vunpack.c.l.b16 %v4030
    %v4193 = vunpack.c.h.b16 %v4030
    %v4194 = vunpack.c.l.b16 %v4031
    %v4195 = vunpack.c.h.b16 %v4031
    %v4196 = vunpack.c.l.b16 %v4032
    %v4197 = vunpack.c.h.b16 %v4032
    %v4198 = vunpack.c.l.b16 %v4033
    %v4199 = vunpack.c.h.b16 %v4033
    %v4200 = vunpack.c.l.b16 %v4034
    %v4201 = vunpack.c.h.b16 %v4034
    %v4202 = vunpack.c.l.b16 %v4035
    %v4203 = vunpack.c.h.b16 %v4035
    %v4204 = vunpack.c.l.b16 %v4036
    %v4205 = vunpack.c.h.b16 %v4036
    %v4206 = vunpack.c.l.b16 %v4037
    %v4207 = vunpack.c.h.b16 %v4037
    %v4208 = vunpack.c.l.b16 %v4038
    %v4209 = vunpack.c.h.b16 %v4038
    %v4210 = vunpack.c.l.b16 %v4039
    %v4211 = vunpack.c.h.b16 %v4039
    %v4212 = vunpack.c.l.b16 %v4040
    %v4213 = vunpack.c.h.b16 %v4040
    %v4214 = vunpack.c.l.b16 %v4041
    %v4215 = vunpack.c.h.b16 %v4041
    %v4216 = vunpack.c.l.b16 %v4042
    %v4217 = vunpack.c.h.b16 %v4042
    %v4218 = vunpack.c.l.b16 %v4043
    %v4219 = vunpack.c.h.b16 %v4043
    %v4220 = vunpack.c.l.b16 %v4044
    %v4221 = vunpack.c.h.b16 %v4044
    %v4222 = vunpack.c.l.b16 %v4045
    %v4223 = vunpack.c.h.b16 %v4045
    %v4224 = vunpack.c.l.b16 %v4046
    %v4225 = vunpack.c.h.b16 %v4046
    %v4226 = vunpack.c.l.b16 %v4047
    %v4227 = vunpack.c.h.b16 %v4047
    %v4228 = vunpack.c.l.b16 %v4048
    %v4229 = vunpack.c.h.b16 %v4048
    %v4230 = vunpack.c.l.b16 %v4049
    %v4231 = vunpack.c.h.b16 %v4049
    %v4232 = vunpack.c.l.b16 %v4050
    %v4233 = vunpack.c.h.b16 %v4050
    %v4234 = vunpack.c.l.b16 %v4051
    %v4235 = vunpack.c.h.b16 %v4051
    %v4236 = vunpack.c.l.b16 %v4052
    %v4237 = vunpack.c.h.b16 %v4052
    %v4238 = vunpack.c.l.b16 %v4053
    %v4239 = vunpack.c.h.b16 %v4053
    %v4240 = vunpack.c.l.b16 %v4054
    %v4241 = vunpack.c.h.b16 %v4054
    %v4242 = vunpack.c.l.b16 %v4055
    %v4243 = vunpack.c.h.b16 %v4055
    %v4244 = vunpack.c.l.b16 %v4056
    %v4245 = vunpack.c.h.b16 %v4056
    %v4246 = vunpack.c.l.b16 %v4057
    %v4247 = vunpack.c.h.b16 %v4057
    %v4248 = vunpack.c.l.b16 %v4058
    %v4249 = vunpack.c.h.b16 %v4058
    %v4250 = vunpack.c.l.b16 %v4059
    %v4251 = vunpack.c.h.b16 %v4059
    %v4252 = vunpack.c.l.b16 %v4060
    %v4253 = vunpack.c.h.b16 %v4060
    %v4254 = vunpack.c.l.b16 %v4061
    %v4255 = vunpack.c.h.b16 %v4061
    %v4256 = vunpack.c.l.b16 %v4062
    %v4257 = vunpack.c.h.b16 %v4062
    %v4258 = vunpack.c.l.b16 %v4063
    %v4259 = vunpack.c.h.b16 %v4063
    %v4260 = vunpack.c.l.b16 %v4064
    %v4261 = vunpack.c.h.b16 %v4064
    %v4262 = vunpack.c.l.b16 %v4065
    %v4263 = vunpack.c.h.b16 %v4065
    %v4264 = vunpack.c.l.b16 %v4066
    %v4265 = vunpack.c.h.b16 %v4066
    %v4266 = vunpack.c.l.b16 %v4067
    %v4267 = vunpack.c.h.b16 %v4067
    %v4268 = vunpack.c.l.b16 %v4068
    %v4269 = vunpack.c.h.b16 %v4068
    %v4270 = vunpack.c.l.b16 %v4069
    %v4271 = vunpack.c.h.b16 %v4069
    %v4272 = vunpack.c.l.b16 %v4070
    %v4273 = vunpack.c.h.b16 %v4070
    %v4274 = vunpack.c.l.b16 %v4071
    %v4275 = vunpack.c.h.b16 %v4071
    %v4276 = vunpack.c.l.b16 %v4072
    %v4277 = vunpack.c.h.b16 %v4072
    %v4278 = vunpack.c.l.b16 %v4073
    %v4279 = vunpack.c.h.b16 %v4073
    %v4280 = vunpack.c.l.b16 %v4074
    %v4281 = vunpack.c.h.b16 %v4074
    %v4282 = vunpack.c.l.b16 %v4075
    %v4283 = vunpack.c.h.b16 %v4075
    %v4284 = vunpack.c.l.b16 %v4076
    %v4285 = vunpack.c.h.b16 %v4076
    %v4286 = vunpack.c.l.b16 %v4077
    %v4287 = vunpack.c.h.b16 %v4077
    %v4288 = vunpack.c.l.b16 %v4078
    %v4289 = vunpack.c.h.b16 %v4078
    %v4290 = vunpack.c.l.b16 %v4079
    %v4291 = vunpack.c.h.b16 %v4079
    %v4292 = vpack.c.b16 %v4166, %v4164
    %v4293 = vpack.c.b16 %v4167, %v4165
    %v4294 = vpack.c.b16 %v4170, %v4168
    %v4295 = vpack.c.b16 %v4171, %v4169
    %v4296 = vpack.c.b16 %v4174, %v4172
    %v4297 = vpack.c.b16 %v4175, %v4173
    %v4298 = vpack.c.b16 %v4178, %v4176
    %v4299 = vpack.c.b16 %v4179, %v4177
    %v4300 = vpack.c.b16 %v4182, %v4180
    %v4301 = vpack.c.b16 %v4183, %v4181
    %v4302 = vpack.c.b16 %v4186, %v4184
    %v4303 = vpack.c.b16 %v4187, %v4185
    %v4304 = vpack.c.b16 %v4190, %v4188
    %v4305 = vpack.c.b16 %v4191, %v4189
    %v4306 = vpack.c.b16 %v4194, %v4192
    %v4307 = vpack.c.b16 %v4195, %v4193
    %v4308 = vpack.c.b16 %v4198, %v4196
    %v4309 = vpack.c.b16 %v4199, %v4197
    %v4310 = vpack.c.b16 %v4202, %v4200
    %v4311 = vpack.c.b16 %v4203, %v4201
    %v4312 = vpack.c.b16 %v4206, %v4204
    %v4313 = vpack.c.b16 %v4207, %v4205
    %v4314 = vpack.c.b16 %v4210, %v4208
    %v4315 = vpack.c.b16 %v4211, %v4209
    %v4316 = vpack.c.b16 %v4214, %v4212
    %v4317 = vpack.c.b16 %v4215, %v4213
    %v4318 = vpack.c.b16 %v4218, %v4216
    %v4319 = vpack.c.b16 %v4219, %v4217
    %v4320 = vpack.c.b16 %v4222, %v4220
    %v4321 = vpack.c.b16 %v4223, %v4221
    %v4322 = vpack.c.b16 %v4226, %v4224
    %v4323 = vpack.c.b16 %v4227, %v4225
    %v4324 = vpack.c.b16 %v4230, %v4228
    %v4325 = vpack.c.b16 %v4231, %v4229
    %v4326 = vpack.c.b16 %v4234, %v4232
    %v4327 = vpack.c.b16 %v4235, %v4233
    %v4328 = vpack.c.b16 %v4238, %v4236
    %v4329 = vpack.c.b16 %v4239, %v4237
    %v4330 = vpack.c.b16 %v4242, %v4240
    %v4331 = vpack.c.b16 %v4243, %v4241
    %v4332 = vpack.c.b16 %v4246, %v4244
    %v4333 = vpack.c.b16 %v4247, %v4245
    %v4334 = vpack.c.b16 %v4250, %v4248
    %v4335 = vpack.c.b16 %v4251, %v4249
    %v4336 = vpack.c.b16 %v4254, %v4252
    %v4337 = vpack.c.b16 %v4255, %v4253
    %v4338 = vpack.c.b16 %v4258, %v4256
    %v4339 = vpack.c.b16 %v4259, %v4257
    %v4340 = vpack.c.b16 %v4262, %v4260
    %v4341 = vpack.c.b16 %v4263, %v4261
    %v4342 = vpack.c.b16 %v4266, %v4264
    %v4343 = vpack.c.b16 %v4267, %v4265
    %v4344 = vpack.c.b16 %v4270, %v4268
    %v4345 = vpack.c.b16 %v4271, %v4269
    %v4346 = vpack.c.b16 %v4274, %v4272
    %v4347 = vpack.c.b16 %v4275, %v4273
    %v4348 = vpack.c.b16 %v4278, %v4276
    %v4349 = vpack.c.b16 %v4279, %v4277
    %v4350 = vpack.c.b16 %v4282, %v4280
    %v4351 = vpack.c.b16 %v4283, %v4281
    %v4352 = vpack.c.b16 %v4286, %v4284
    %v4353 = vpack.c.b16 %v4287, %v4285
    %v4354 = vpack.c.b16 %v4290, %v4288
    %v4355 = vpack.c.b16 %v4291, %v4289
    %4420 = vmatprep.subr.bf16.mxu0 %v4307
    %4421 = vmatpush1.bf16.msra.mxu0 %v4306
    %4422 = vmatprep.subr.bf16.mxu0 %v4305
    %4423 = vmatpush1.bf16.msra.mxu0 %v4304
    %4424 = vmatprep.subr.bf16.mxu0 %v4303
    %4425 = vmatpush1.bf16.msra.mxu0 %v4302
    %4426 = vmatprep.subr.bf16.mxu0 %v4301
    %4427 = vmatpush1.bf16.msra.mxu0 %v4300
    %4428 = vmatprep.subr.bf16.mxu0 %v4299
    %4429 = vmatpush1.bf16.msra.mxu0 %v4298
    %4430 = vmatprep.subr.bf16.mxu0 %v4297
    %4431 = vmatpush1.bf16.msra.mxu0 %v4296
    %4432 = vmatprep.subr.bf16.mxu0 %v4295
    %4433 = vmatpush1.bf16.msra.mxu0 %v4294
    %4434 = vmatprep.subr.bf16.mxu0 %v4293
    %4435 = vmatpush1.bf16.msra.mxu0 %v4292
    %4436 = vmatprep.subr.bf16.mxu0 %v4323
    %4437 = vmatpush2.bf16.msra.mxu0 %v4322
    %4438 = vmatprep.subr.bf16.mxu0 %v4321
    %4439 = vmatpush2.bf16.msra.mxu0 %v4320
    %4440 = vmatprep.subr.bf16.mxu0 %v4319
    %4441 = vmatpush2.bf16.msra.mxu0 %v4318
    %4442 = vmatprep.subr.bf16.mxu0 %v4317
    %4443 = vmatpush2.bf16.msra.mxu0 %v4316
    %4444 = vmatprep.subr.bf16.mxu0 %v4315
    %4445 = vmatpush2.bf16.msra.mxu0 %v4314
    %4446 = vmatprep.subr.bf16.mxu0 %v4313
    %4447 = vmatpush2.bf16.msra.mxu0 %v4312
    %4448 = vmatprep.subr.bf16.mxu0 %v4311
    %4449 = vmatpush2.bf16.msra.mxu0 %v4310
    %4450 = vmatprep.subr.bf16.mxu0 %v4309
    %4451 = vmatpush2.bf16.msra.mxu0 %v4308
    %4452 = vmatprep.mubr.bf16.mxu0 %v4093
    %4453 = vmatmul.mubr.bf16.gmra.mxu0 %v4092
    %v4454 = vpop.f32.mrf.mxu0
    %v4455 = vadd.f32 %v471, %v4454
    %v4456 = vpop.f32.mrf.mxu0
    %v4457 = vadd.f32 %v475, %v4456
    %v4458 = vpop.f32.mrf.mxu0
    %v4459 = vadd.f32 %v471, %v4458
    %v4460 = vpop.f32.mrf.mxu0
    %v4461 = vadd.f32 %v475, %v4460
    %4462 = vdwg.mxu0
    %4463 = vmatprep.subr.bf16.mxu0 %v4339
    %4464 = vmatpush1.bf16.msra.mxu0 %v4338
    %4465 = vmatprep.subr.bf16.mxu0 %v4337
    %4466 = vmatpush1.bf16.msra.mxu0 %v4336
    %4467 = vmatprep.subr.bf16.mxu0 %v4335
    %4468 = vmatpush1.bf16.msra.mxu0 %v4334
    %4469 = vmatprep.subr.bf16.mxu0 %v4333
    %4470 = vmatpush1.bf16.msra.mxu0 %v4332
    %4471 = vmatprep.subr.bf16.mxu0 %v4331
    %4472 = vmatpush1.bf16.msra.mxu0 %v4330
    %4473 = vmatprep.subr.bf16.mxu0 %v4329
    %4474 = vmatpush1.bf16.msra.mxu0 %v4328
    %4475 = vmatprep.subr.bf16.mxu0 %v4327
    %4476 = vmatpush1.bf16.msra.mxu0 %v4326
    %4477 = vmatprep.subr.bf16.mxu0 %v4325
    %4478 = vmatpush1.bf16.msra.mxu0 %v4324
    %4479 = vmatprep.subr.bf16.mxu0 %v4355
    %4480 = vmatpush2.bf16.msra.mxu0 %v4354
    %4481 = vmatprep.subr.bf16.mxu0 %v4353
    %4482 = vmatpush2.bf16.msra.mxu0 %v4352
    %4483 = vmatprep.subr.bf16.mxu0 %v4351
    %4484 = vmatpush2.bf16.msra.mxu0 %v4350
    %4485 = vmatprep.subr.bf16.mxu0 %v4349
    %4486 = vmatpush2.bf16.msra.mxu0 %v4348
    %4487 = vmatprep.subr.bf16.mxu0 %v4347
    %4488 = vmatpush2.bf16.msra.mxu0 %v4346
    %4489 = vmatprep.subr.bf16.mxu0 %v4345
    %4490 = vmatpush2.bf16.msra.mxu0 %v4344
    %4491 = vmatprep.subr.bf16.mxu0 %v4343
    %4492 = vmatpush2.bf16.msra.mxu0 %v4342
    %4493 = vmatprep.subr.bf16.mxu0 %v4341
    %4494 = vmatpush2.bf16.msra.mxu0 %v4340
    %4495 = vmatprep.mubr.bf16.mxu0 %v4095
    %4496 = vmatmul.mubr.bf16.gmra.mxu0 %v4094
    %v4497 = vpop.f32.mrf.mxu0
    %v4498 = vadd.f32 %v4455, %v4497
    %v4499 = vpop.f32.mrf.mxu0
    %v4500 = vadd.f32 %v4457, %v4499
    %v4501 = vpop.f32.mrf.mxu0
    %v4502 = vadd.f32 %v4459, %v4501
    %v4503 = vpop.f32.mrf.mxu0
    %v4504 = vadd.f32 %v4461, %v4503
    %4505 = vdwg.mxu0
    %v4506 = vtanh.pop %v4498
    %v4507 = vtanh.pop %v4500
    %v4508 = vtanh.pop %v4502
    %v4509 = vtanh.pop %v4504
    %v4510 = vpack.c.bf16 %v4508, %v4506
    %v4511 = vpack.c.bf16 %v4509, %v4507
    %v4512 = vld [vmem:[#allocation12 + $0x200] sm:$0xf]
    %v4513 = vld [vmem:[#allocation12 + $0x204] sm:$0xf]
    %v4514 = vld [vmem:[#allocation12 + $0x208] sm:$0xf]
    %v4515 = vld [vmem:[#allocation12 + $0x20c] sm:$0xf]
    %v4516 = vld [vmem:[#allocation12 + $0x210] sm:$0xf]
    %v4517 = vld [vmem:[#allocation12 + $0x214] sm:$0xf]
    %v4518 = vld [vmem:[#allocation12 + $0x218] sm:$0xf]
    %v4519 = vld [vmem:[#allocation12 + $0x21c] sm:$0xf]
    %v4520 = vld [vmem:[#allocation12 + $0x220] sm:$0xf]
    %v4521 = vld [vmem:[#allocation12 + $0x224] sm:$0xf]
    %v4522 = vld [vmem:[#allocation12 + $0x228] sm:$0xf]
    %v4523 = vld [vmem:[#allocation12 + $0x22c] sm:$0xf]
    %v4524 = vld [vmem:[#allocation12 + $0x230] sm:$0xf]
    %v4525 = vld [vmem:[#allocation12 + $0x234] sm:$0xf]
    %v4526 = vld [vmem:[#allocation12 + $0x238] sm:$0xf]
    %v4527 = vld [vmem:[#allocation12 + $0x23c] sm:$0xf]
    %v4528 = vld [vmem:[#allocation12 + $0x240] sm:$0xf]
    %v4529 = vld [vmem:[#allocation12 + $0x244] sm:$0xf]
    %v4530 = vld [vmem:[#allocation12 + $0x248] sm:$0xf]
    %v4531 = vld [vmem:[#allocation12 + $0x24c] sm:$0xf]
    %v4532 = vld [vmem:[#allocation12 + $0x250] sm:$0xf]
    %v4533 = vld [vmem:[#allocation12 + $0x254] sm:$0xf]
    %v4534 = vld [vmem:[#allocation12 + $0x258] sm:$0xf]
    %v4535 = vld [vmem:[#allocation12 + $0x25c] sm:$0xf]
    %v4536 = vld [vmem:[#allocation12 + $0x260] sm:$0xf]
    %v4537 = vld [vmem:[#allocation12 + $0x264] sm:$0xf]
    %v4538 = vld [vmem:[#allocation12 + $0x268] sm:$0xf]
    %v4539 = vld [vmem:[#allocation12 + $0x26c] sm:$0xf]
    %v4540 = vld [vmem:[#allocation12 + $0x270] sm:$0xf]
    %v4541 = vld [vmem:[#allocation12 + $0x274] sm:$0xf]
    %v4542 = vld [vmem:[#allocation12 + $0x278] sm:$0xf]
    %v4543 = vld [vmem:[#allocation12 + $0x27c] sm:$0xf]
    %v4576 = vunpack.c.l.b16 %v4512
    %v4577 = vunpack.c.l.b16 %v4513
    %v4578 = vunpack.c.l.b16 %v4514
    %v4579 = vunpack.c.l.b16 %v4515
    %v4580 = vunpack.c.l.b16 %v4516
    %v4581 = vunpack.c.l.b16 %v4517
    %v4582 = vunpack.c.l.b16 %v4518
    %v4583 = vunpack.c.l.b16 %v4519
    %v4584 = vunpack.c.l.b16 %v4520
    %v4585 = vunpack.c.l.b16 %v4521
    %v4586 = vunpack.c.l.b16 %v4522
    %v4587 = vunpack.c.l.b16 %v4523
    %v4588 = vunpack.c.l.b16 %v4524
    %v4589 = vunpack.c.l.b16 %v4525
    %v4590 = vunpack.c.l.b16 %v4526
    %v4591 = vunpack.c.l.b16 %v4527
    %v4592 = vunpack.c.l.b16 %v4528
    %v4593 = vunpack.c.l.b16 %v4529
    %v4594 = vunpack.c.l.b16 %v4530
    %v4595 = vunpack.c.l.b16 %v4531
    %v4596 = vunpack.c.l.b16 %v4532
    %v4597 = vunpack.c.l.b16 %v4533
    %v4598 = vunpack.c.l.b16 %v4534
    %v4599 = vunpack.c.l.b16 %v4535
    %v4600 = vunpack.c.l.b16 %v4536
    %v4601 = vunpack.c.l.b16 %v4537
    %v4602 = vunpack.c.l.b16 %v4538
    %v4603 = vunpack.c.l.b16 %v4539
    %v4604 = vunpack.c.l.b16 %v4540
    %v4605 = vunpack.c.l.b16 %v4541
    %v4606 = vunpack.c.l.b16 %v4542
    %v4607 = vunpack.c.l.b16 %v4543
    %v4608 = vpack.c.b16 %v4577, %v4576
    %v4609 = vpack.c.b16 %v4579, %v4578
    %v4610 = vpack.c.b16 %v4581, %v4580
    %v4611 = vpack.c.b16 %v4583, %v4582
    %v4612 = vpack.c.b16 %v4585, %v4584
    %v4613 = vpack.c.b16 %v4587, %v4586
    %v4614 = vpack.c.b16 %v4589, %v4588
    %v4615 = vpack.c.b16 %v4591, %v4590
    %v4616 = vpack.c.b16 %v4593, %v4592
    %v4617 = vpack.c.b16 %v4595, %v4594
    %v4618 = vpack.c.b16 %v4597, %v4596
    %v4619 = vpack.c.b16 %v4599, %v4598
    %v4620 = vpack.c.b16 %v4601, %v4600
    %v4621 = vpack.c.b16 %v4603, %v4602
    %v4622 = vpack.c.b16 %v4605, %v4604
    %v4623 = vpack.c.b16 %v4607, %v4606
    %4640 = vmatprep.subr.bf16.mxu0 0
    %4641 = vmatpush1.bf16.msra.mxu0 %v4615
    %4642 = vmatprep.subr.bf16.mxu0 0
    %4643 = vmatpush1.bf16.msra.mxu0 %v4614
    %4644 = vmatprep.subr.bf16.mxu0 0
    %4645 = vmatpush1.bf16.msra.mxu0 %v4613
    %4646 = vmatprep.subr.bf16.mxu0 0
    %4647 = vmatpush1.bf16.msra.mxu0 %v4612
    %4648 = vmatprep.subr.bf16.mxu0 0
    %4649 = vmatpush1.bf16.msra.mxu0 %v4611
    %4650 = vmatprep.subr.bf16.mxu0 0
    %4651 = vmatpush1.bf16.msra.mxu0 %v4610
    %4652 = vmatprep.subr.bf16.mxu0 0
    %4653 = vmatpush1.bf16.msra.mxu0 %v4609
    %4654 = vmatprep.subr.bf16.mxu0 0
    %4655 = vmatpush1.bf16.msra.mxu0 %v4608
    %4656 = vmatprep.subr.bf16.mxu0 0
    %4657 = vmatpush2.bf16.msra.mxu0 %v4623
    %4658 = vmatprep.subr.bf16.mxu0 0
    %4659 = vmatpush2.bf16.msra.mxu0 %v4622
    %4660 = vmatprep.subr.bf16.mxu0 0
    %4661 = vmatpush2.bf16.msra.mxu0 %v4621
    %4662 = vmatprep.subr.bf16.mxu0 0
    %4663 = vmatpush2.bf16.msra.mxu0 %v4620
    %4664 = vmatprep.subr.bf16.mxu0 0
    %4665 = vmatpush2.bf16.msra.mxu0 %v4619
    %4666 = vmatprep.subr.bf16.mxu0 0
    %4667 = vmatpush2.bf16.msra.mxu0 %v4618
    %4668 = vmatprep.subr.bf16.mxu0 0
    %4669 = vmatpush2.bf16.msra.mxu0 %v4617
    %4670 = vmatprep.subr.bf16.mxu0 0
    %4671 = vmatpush2.bf16.msra.mxu0 %v4616
    %4672 = vmatprep.mubr.bf16.mxu0 %v4511
    %4673 = vmatmul.mubr.bf16.gmra.mxu0 %v4510
    %v4674 = vpop.f32.mrf.mxu0
    %v4675 = vadd.f32 0.0, %v4674
    %v4676 = vpop.f32.mrf.mxu0
    %v4677 = vpop.f32.mrf.mxu0
    %v4678 = vadd.f32 0.0, %v4677
    %v4679 = vpop.f32.mrf.mxu0
    %4680 = vdwg.mxu0
    %v4681 = vadd.f32 %v3737, %v4675
    %v4682 = vadd.f32 %v3738, %v4678
    %4683 = vst [vmem:[#allocation13] sm:$0xff] %v4681
    %4684 = vst [vmem:[#allocation13 + $0x8] sm:$0xff] %v4682
    // Predicated region
    $region54: #{tpu_custom_call.1} parent=1 // pred_check
      _
    $region55: #{tpu_custom_call.1} parent=1 // pred_check_branch
      %4686 = sbr.rel (0) target = $region57
    $region56: #{tpu_custom_call.1} parent=1 // pred_region
      %s4688 = ssub.s32 256, 256
      %4689 = vsyncadd [#allocation6], %s4688
      %s4690 = sshll.u32 [#allocation13], 4
      %s4691 = int_to_ptr.vmem [resolvable:$true] %s4690
      %4696 = dma.vmem_to_hbm [thread:$0]  %s4691, 256, %s8, [#allocation6], 128, 128, 8
    $region57: #{tpu_custom_call.1} parent=1 // pred_fallthru
      _
    // Predicated region
    $region58: #{tpu_custom_call.1} parent=1 // pred_check
      _
    $region59: #{tpu_custom_call.1} parent=1 // pred_check_branch
      %4698 = sbr.rel (0) target = $region61
    $region60: #{tpu_custom_call.1} parent=1 // pred_region
      %4699 = dma.done [#allocation6], 256
    $region61: #{tpu_custom_call.1} parent=1 // pred_fallthru
      _
    %4700 = vsyncpa [#allocation5], 1
    %4701 = vsyncpa [#allocation8], 1
    %4702 = vsyncpa [#allocation11], 1
    %4703 = vsyncpa [#allocation6], 1

</llo_original>
